<compile_context>
chip_gen: v6e
topology: v6e:2x2x1
jax: 0.10.0
libtpu: 0.0.40
codegen_flags: <defaults>
</compile_context>

<pallas_src>
import jax
import jax.numpy as jnp
from jax.experimental import pallas as pl
from jax.experimental.pallas import tpu as pltpu

# ----------------------------- problem sizes --------------------------------
T = 8          # number of frames in the clip (bsz of the einsums)
D_AUD = 128    # raw audio feature dim
D_HID = 512    # audio_proj hidden dim
D_OUT = 256    # projected prompt dim
Q = 100        # number of Mask2Former queries (== one-hot size in the module)
H = W = 16     # (small) mask-logit spatial resolution
C_CLS = 101    # class-queries logit dim (num_labels + 1)

GRID = 2       # grid steps over the flattened T*Q row dim (both TCs on v7x)


# ------------------------- single fused Pallas kernel ------------------------
def _pmp_avs_fused_kernel(x_ref, w1_ref, b1_ref, w2_ref, b2_ref,
                          cls_ref, cls_t_ref, ma_ref, mb_ref, ca_ref, cb_ref,
                          aud_ref, prompt_ref, mlog_ref, mmatch_ref, clog_ref):
    """One fused body, executed once per grid step g (g in [0, GRID)).

    Per step it sees:
      x/w1/b1/w2/b2 : full (tiny) MLP operands       (constant blocks)
      cls_ref       : (rows/GRID, 1)   f32 slice of class_emb, t-major rows
      cls_t_ref     : (Q/GRID, T, 1)   f32 slice of class_emb.T
      ma/mb         : (rows/GRID, 256) bf16 mask-logit slices
      ca/cb         : (rows/GRID, 101) bf16 class-logit slices
    """
    f32 = jnp.float32
    bf16 = jnp.bfloat16

    # --- 1. audio_proj MLP (bf16 operands on the MXU, f32 accumulation) -----
    # ~1.6 MFLOP total; recomputed each grid step, fully hidden under DMA.
    h = jnp.dot(x_ref[...], w1_ref[...], preferred_element_type=f32)
    h = jnp.maximum(h + b1_ref[...], 0.0)                       # ReLU, f32
    aud = jnp.dot(h, w2_ref[...].astype(f32),
                  preferred_element_type=f32) + b2_ref[...]     # (T, 256) f32
    aud_ref[0] = aud                                            # per-step slot

    # --- 2. prompt modulation: (Qblk, T, 1) * (T, 256) -> (Qblk, T, 256) ----
    prompt_ref[...] = (cls_t_ref[...] * aud[None, :, :]).astype(bf16)

    # --- 3. mask-logit debias + modulation (rows = T*Q, lanes = H*W = 256) --
    # Each store is a single streaming expression; 2*a - b is recomputed for
    # the match line instead of keeping a large f32 intermediate live.
    mlog_ref[...] = (2.0 * ma_ref[...].astype(f32)
                     - mb_ref[...].astype(f32)).astype(bf16)
    mmatch_ref[...] = (cls_ref[...]
                       * (2.0 * ma_ref[...].astype(f32)
                          - mb_ref[...].astype(f32))).astype(bf16)

    # --- 4. class-logit debias combine ---------------------------------------
    clog_ref[...] = (2.0 * ca_ref[...].astype(f32)
                     - cb_ref[...].astype(f32)).astype(bf16)


def pmp_avs_fused(feat_aud, w1, b1, w2, b2, class_emb,
                  masks_a, masks_b, class_a, class_b):
    """Wrapper: flatten heavy operands to lane-dense 2D and call the kernel.

    masks_a/b, class_a/b are expected in bf16 (emitted by the producer);
    w1/w2 are bf16 parameters; all arithmetic is f32 inside the kernel.
    """
    t, q, hgt, wid = masks_a.shape
    hw = hgt * wid
    c = class_a.shape[-1]
    rows = t * q
    assert rows % (8 * GRID) == 0 and q % GRID == 0

    rblk = rows // GRID            # mask / class-logit rows per grid step
    qblk = q // GRID               # prompt queries per grid step

    x_bf = feat_aud.astype(jnp.bfloat16)                 # 4 KB, trivial cast
    cls_flat = class_emb.reshape(rows, 1)                # (T*Q, 1) f32, t-major
    cls_t = class_emb.T.reshape(q, t, 1)                 # (Q, T, 1) f32

    out_shape = (
        jax.ShapeDtypeStruct((GRID, t, D_OUT), jnp.float32),   # audio_emb / step
        jax.ShapeDtypeStruct((q, t, D_OUT), jnp.bfloat16),     # prompt (Q,T,D)
        jax.ShapeDtypeStruct((rows, hw), jnp.bfloat16),        # mask_logits flat
        jax.ShapeDtypeStruct((rows, hw), jnp.bfloat16),        # mask_match  flat
        jax.ShapeDtypeStruct((rows, c), jnp.bfloat16),         # class_logits flat
    )

    grid_spec = pltpu.PrefetchScalarGridSpec(
        num_scalar_prefetch=0,
        grid=(GRID,),
        in_specs=[
            pl.BlockSpec((t, D_AUD), lambda g: (0, 0)),        # feat_aud (bf16)
            pl.BlockSpec((D_AUD, D_HID), lambda g: (0, 0)),    # w1 (bf16)
            pl.BlockSpec((1, D_HID), lambda g: (0, 0)),        # b1 (f32)
            pl.BlockSpec((D_HID, D_OUT), lambda g: (0, 0)),    # w2 (bf16)
            pl.BlockSpec((1, D_OUT), lambda g: (0, 0)),        # b2 (f32)
            pl.BlockSpec((rblk, 1), lambda g: (g, 0)),         # class_emb (T*Q,1)
            pl.BlockSpec((qblk, t, 1), lambda g: (g, 0, 0)),   # class_emb.T (Q,T,1)
            pl.BlockSpec((rblk, hw), lambda g: (g, 0)),        # masks_a (bf16)
            pl.BlockSpec((rblk, hw), lambda g: (g, 0)),        # masks_b (bf16)
            pl.BlockSpec((rblk, c), lambda g: (g, 0)),         # class_a (bf16)
            pl.BlockSpec((rblk, c), lambda g: (g, 0)),         # class_b (bf16)
        ],
        out_specs=[
            pl.BlockSpec((1, t, D_OUT), lambda g: (g, 0, 0)),  # audio_emb slot g
            pl.BlockSpec((qblk, t, D_OUT), lambda g: (g, 0, 0)),
            pl.BlockSpec((rblk, hw), lambda g: (g, 0)),
            pl.BlockSpec((rblk, hw), lambda g: (g, 0)),
            pl.BlockSpec((rblk, c), lambda g: (g, 0)),
        ],
    )

    aud, prompt, mlog, mmatch, clog = pl.pallas_call(
        _pmp_avs_fused_kernel,
        out_shape=out_shape,
        grid_spec=grid_spec,
        compiler_params=pltpu.CompilerParams(
            dimension_semantics=("parallel",),
            vmem_limit_bytes=32 * 1024 * 1024),
    )(x_bf, w1, b1.reshape(1, -1), w2, b2.reshape(1, -1),
      cls_flat, cls_t,
      masks_a.reshape(rows, hw), masks_b.reshape(rows, hw),
      class_a.reshape(rows, c), class_b.reshape(rows, c))

    # reshape back to the module's layouts (contiguous -> free outside kernel)
    return (aud[0], prompt,
            mlog.reshape(t, q, hgt, wid), mmatch.reshape(t, q, hgt, wid),
            clog.reshape(t, q, c))


# --------------------------- JAX glue (not hot path) -------------------------
def one_hot_encoding(class_labels, num_classes=Q):
    """Mirror of PmpAVS.one_hot_encoding (per-frame multi-hot + clamp).

    NOTE: the single-label branch sets index 0 to 1 regardless of the label
    value — this intentionally matches the original PyTorch module.
    """
    one_hots = []
    for labels in class_labels:
        labels = jnp.asarray(labels, jnp.int32)
        if labels.shape[0] == 1:
            oh = jnp.zeros((num_classes,), jnp.float32).at[0].set(1.0)
        else:
            oh = jnp.sum(jax.nn.one_hot(labels, num_classes, dtype=jnp.float32), axis=0)
        one_hots.append(jnp.clip(oh, 1e-6, 1.0 - 1e-6))
    return jnp.stack(one_hots)                                  # (T, Q)


def init_params(key):
    """audio_proj parameters; weights stored bf16 once at init (perf review)."""
    k1, k2, k3, k4 = jax.random.split(key, 4)
    w1 = (jax.random.normal(k1, (D_AUD, D_HID), jnp.float32)
          * (1.0 / jnp.sqrt(D_AUD))).astype(jnp.bfloat16)
    b1 = jax.random.normal(k2, (D_HID,), jnp.float32) * 0.01
    w2 = (jax.random.normal(k3, (D_HID, D_OUT), jnp.float32)
          * (1.0 / jnp.sqrt(D_HID))).astype(jnp.bfloat16)
    b2 = jax.random.normal(k4, (D_OUT,), jnp.float32) * 0.01
    return w1, b1, w2, b2


def pmp_avs_forward(params, feat_aud, class_labels,
                    masks_a, masks_b, class_a, class_b):
    """Implementable portion of PmpAVS.forward.

    masks_a / class_a stand in for `outputs.*_queries_logits` and
    masks_b / class_b for `outputs_distorted.*_queries_logits` (bf16).
    """
    w1, b1, w2, b2 = params

    # class_emb = one_hot_encoding(...)  (file load replaced by in-script labels)
    class_emb = one_hot_encoding(class_labels)                   # (T, Q) f32

    # TODO(synk): Mask2Former forward (outputs / outputs_distorted), DDPM
    # sample_forward, Hungarian matcher, loss_masks/loss_labels and
    # post_process_semantic_segmentation have no Pallas equivalent; the model
    # outputs are taken as kernel inputs here.

    audio_emb, prompt_features, mask_logits, mask_logits_match, class_logits = \
        pmp_avs_fused(feat_aud, w1, b1, w2, b2, class_emb,
                      masks_a, masks_b, class_a, class_b)

    # obser gate: torch.all(prompt_class_projected * obser < 0.5)
    early_exit = jnp.all(class_emb[:, 0] < 0.5)

    return {
        "audio_emb": audio_emb,
        "class_emb": class_emb,
        "prompt_features_projected": prompt_features,
        "early_exit": early_exit,
        "mask_logits": mask_logits,
        "masks_queries_logits_match": mask_logits_match,
        "class_logits": class_logits,
    }


# ---------------------------------- main -------------------------------------
if __name__ == "__main__":
    key = jax.random.PRNGKey(0)
    kp, ka, km1, km2, kc1, kc2 = jax.random.split(key, 6)

    params = init_params(kp)

    # batch_data['feat_aud'][idx]: (T, 128) raw audio embedding
    feat_aud = jax.random.normal(ka, (T, D_AUD), jnp.float32)

    # deterministic per-frame class labels (replaces the torch.load'd .pth);
    # frame 0 is single-label so the obser gate does not early-exit.
    class_labels = [[0]] + [[(t * 7 + 3) % Q, (t * 13 + 1) % Q] for t in range(1, T)]

    # stand-ins for outputs / outputs_distorted of the Mask2Former model
    # (producer emits bf16 logits per the perf review — storage-only bf16).
    masks_a = jax.random.normal(km1, (T, Q, H, W), jnp.float32).astype(jnp.bfloat16)
    masks_b = jax.random.normal(km2, (T, Q, H, W), jnp.float32).astype(jnp.bfloat16)
    class_a = jax.random.normal(kc1, (T, Q, C_CLS), jnp.float32).astype(jnp.bfloat16)
    class_b = jax.random.normal(kc2, (T, Q, C_CLS), jnp.float32).astype(jnp.bfloat16)

    out = pmp_avs_forward(params, feat_aud, class_labels,
                          masks_a, masks_b, class_a, class_b)
    jax.block_until_ready(out)

    # ---- sanity checks against plain-JAX references (f32 math on bf16 data) --
    w1, b1, w2, b2 = params
    xf = feat_aud.astype(jnp.bfloat16).astype(jnp.float32)
    ref_audio = jnp.maximum(xf @ w1.astype(jnp.float32) + b1, 0.0) \
        @ w2.astype(jnp.float32) + b2
    assert jnp.allclose(out["audio_emb"], ref_audio, atol=1e-2, rtol=1e-2)

    maf, mbf = masks_a.astype(jnp.float32), masks_b.astype(jnp.float32)
    ref_mask = 2.0 * maf - mbf
    assert jnp.allclose(out["mask_logits"].astype(jnp.float32), ref_mask,
                        atol=5e-2, rtol=5e-2)

    ref_match = jnp.einsum("ij,ijhw->ijhw", out["class_emb"], ref_mask)
    assert jnp.allclose(out["masks_queries_logits_match"].astype(jnp.float32),
                        ref_match, atol=5e-2, rtol=5e-2)

    caf, cbf = class_a.astype(jnp.float32), class_b.astype(jnp.float32)
    ref_class = 2.0 * caf - cbf
    assert jnp.allclose(out["class_logits"].astype(jnp.float32), ref_class,
                        atol=5e-2, rtol=5e-2)

    ref_prompt = jnp.einsum("ij,ijk->ijk", out["class_emb"].T,
                            jnp.broadcast_to(ref_audio[None], (Q, T, D_OUT)))
    assert jnp.allclose(out["prompt_features_projected"].astype(jnp.float32),
                        ref_prompt, atol=5e-2, rtol=5e-2)

    assert not bool(out["early_exit"])

    print("KERNEL_OK")
</pallas_src>

<mosaic_0001>
module attributes {stable_mosaic.version = 11 : i64} {
  func.func @_pmp_avs_fused_kernel(%arg0: i32, %arg1: memref<8x128xbf16, #tpu.memory_space<vmem>>, %arg2: memref<128x512xbf16, #tpu.memory_space<vmem>>, %arg3: memref<1x512xf32, #tpu.memory_space<vmem>>, %arg4: memref<512x256xbf16, #tpu.memory_space<vmem>>, %arg5: memref<1x256xf32, #tpu.memory_space<vmem>>, %arg6: memref<400x1xf32, #tpu.memory_space<vmem>>, %arg7: memref<50x8x1xf32, #tpu.memory_space<vmem>>, %arg8: memref<400x256xbf16, #tpu.memory_space<vmem>>, %arg9: memref<400x256xbf16, #tpu.memory_space<vmem>>, %arg10: memref<400x101xbf16, #tpu.memory_space<vmem>>, %arg11: memref<400x101xbf16, #tpu.memory_space<vmem>>, %arg12: memref<1x8x256xf32, #tpu.memory_space<vmem>>, %arg13: memref<50x8x256xbf16, #tpu.memory_space<vmem>>, %arg14: memref<400x256xbf16, #tpu.memory_space<vmem>>, %arg15: memref<400x256xbf16, #tpu.memory_space<vmem>>, %arg16: memref<400x101xbf16, #tpu.memory_space<vmem>>) attributes {dimension_semantics = [#tpu.dimension_semantics<parallel>], iteration_bounds = array<i64: 2>, scalar_prefetch = 0 : i64, scratch_operands = 0 : i64, tpu.core_type = #tpu.core_type<tc>, window_params = [{pipeline_mode = #tpu.pipeline_mode<synchronous>, transform_indices = @transform_0, window_bounds = array<i64: 8, 128>}, {pipeline_mode = #tpu.pipeline_mode<synchronous>, transform_indices = @transform_1, window_bounds = array<i64: 128, 512>}, {pipeline_mode = #tpu.pipeline_mode<synchronous>, transform_indices = @transform_2, window_bounds = array<i64: 1, 512>}, {pipeline_mode = #tpu.pipeline_mode<synchronous>, transform_indices = @transform_3, window_bounds = array<i64: 512, 256>}, {pipeline_mode = #tpu.pipeline_mode<synchronous>, transform_indices = @transform_4, window_bounds = array<i64: 1, 256>}, {transform_indices = @transform_5, window_bounds = array<i64: 400, 1>}, {transform_indices = @transform_6, window_bounds = array<i64: 50, 8, 1>}, {transform_indices = @transform_7, window_bounds = array<i64: 400, 256>}, {transform_indices = @transform_8, window_bounds = array<i64: 400, 256>}, {transform_indices = @transform_9, window_bounds = array<i64: 400, 101>}, {transform_indices = @transform_10, window_bounds = array<i64: 400, 101>}, {transform_indices = @transform_11, window_bounds = array<i64: 1, 8, 256>}, {transform_indices = @transform_12, window_bounds = array<i64: 50, 8, 256>}, {transform_indices = @transform_13, window_bounds = array<i64: 400, 256>}, {transform_indices = @transform_14, window_bounds = array<i64: 400, 256>}, {transform_indices = @transform_15, window_bounds = array<i64: 400, 101>}]} {
    %c0 = arith.constant 0 : index
    %c0_0 = arith.constant 0 : index
    %0 = vector.load %arg1[%c0, %c0_0] : memref<8x128xbf16, #tpu.memory_space<vmem>>, vector<8x128xbf16>
    %c0_1 = arith.constant 0 : index
    %c0_2 = arith.constant 0 : index
    %1 = vector.load %arg2[%c0_1, %c0_2] : memref<128x512xbf16, #tpu.memory_space<vmem>>, vector<128x512xbf16>
    %cst = arith.constant dense<0.000000e+00> : vector<8x512xf32>
    %2 = tpu.matmul %0, %1, %cst {dimension_numbers = #tpu.dot_dimension_numbers<[1], [0], [0], [1], [0, 0, 1, 1], [], []>} : vector<8x128xbf16>, vector<128x512xbf16>, vector<8x512xf32> -> vector<8x512xf32>
    %c0_3 = arith.constant 0 : index
    %c0_4 = arith.constant 0 : index
    %3 = vector.load %arg3[%c0_3, %c0_4] : memref<1x512xf32, #tpu.memory_space<vmem>>, vector<1x512xf32>
    %4 = vector.broadcast %3 : vector<1x512xf32> to vector<8x512xf32>
    %5 = arith.addf %2, %4 : vector<8x512xf32>
    %cst_5 = arith.constant 0.000000e+00 : f32
    %6 = vector.broadcast %cst_5 : f32 to vector<8x512xf32>
    %7 = arith.maximumf %5, %6 : vector<8x512xf32>
    %c0_6 = arith.constant 0 : index
    %c0_7 = arith.constant 0 : index
    %8 = vector.load %arg4[%c0_6, %c0_7] : memref<512x256xbf16, #tpu.memory_space<vmem>>, vector<512x256xbf16>
    %9 = arith.extf %8 : vector<512x256xbf16> to vector<512x256xf32>
    %cst_8 = arith.constant dense<0.000000e+00> : vector<8x256xf32>
    %10 = tpu.matmul %7, %9, %cst_8 {dimension_numbers = #tpu.dot_dimension_numbers<[1], [0], [0], [1], [0, 0, 1, 1], [], []>} : vector<8x512xf32>, vector<512x256xf32>, vector<8x256xf32> -> vector<8x256xf32>
    %c0_9 = arith.constant 0 : index
    %c0_10 = arith.constant 0 : index
    %11 = vector.load %arg5[%c0_9, %c0_10] : memref<1x256xf32, #tpu.memory_space<vmem>>, vector<1x256xf32>
    %12 = vector.broadcast %11 : vector<1x256xf32> to vector<8x256xf32>
    %13 = arith.addf %10, %12 : vector<8x256xf32>
    %c0_11 = arith.constant 0 : index
    %c0_12 = arith.constant 0 : index
    %c0_13 = arith.constant 0 : index
    %14 = vector.load %arg12[%c0_11, %c0_12, %c0_13] : memref<1x8x256xf32, #tpu.memory_space<vmem>>, vector<1x8x256xf32>
    %15 = vector.shape_cast %14 : vector<1x8x256xf32> to vector<8x256xf32>
    %16 = vector.shape_cast %13 : vector<8x256xf32> to vector<1x8x256xf32>
    tpu.vector_store %arg12[%c0_11, %c0_12, %c0_13], %16 {strides = array<i32>} : memref<1x8x256xf32, #tpu.memory_space<vmem>>, vector<1x8x256xf32>,
    %c0_14 = arith.constant 0 : index
    %c0_15 = arith.constant 0 : index
    %c0_16 = arith.constant 0 : index
    %17 = vector.load %arg7[%c0_14, %c0_15, %c0_16] : memref<50x8x1xf32, #tpu.memory_space<vmem>>, vector<50x8x1xf32>
    %18 = vector.shape_cast %13 : vector<8x256xf32> to vector<1x8x256xf32>
    %19 = vector.broadcast %17 : vector<50x8x1xf32> to vector<50x8x256xf32>
    %20 = vector.broadcast %18 : vector<1x8x256xf32> to vector<50x8x256xf32>
    %21 = arith.mulf %19, %20 : vector<50x8x256xf32>
    %22 = arith.truncf %21 : vector<50x8x256xf32> to vector<50x8x256xbf16>
    %c0_17 = arith.constant 0 : index
    %c0_18 = arith.constant 0 : index
    %c0_19 = arith.constant 0 : index
    %23 = vector.load %arg13[%c0_17, %c0_18, %c0_19] : memref<50x8x256xbf16, #tpu.memory_space<vmem>>, vector<50x8x256xbf16>
    tpu.vector_store %arg13[%c0_17, %c0_18, %c0_19], %22 {strides = array<i32>} : memref<50x8x256xbf16, #tpu.memory_space<vmem>>, vector<50x8x256xbf16>,
    %c0_20 = arith.constant 0 : index
    %c0_21 = arith.constant 0 : index
    %24 = vector.load %arg8[%c0_20, %c0_21] : memref<400x256xbf16, #tpu.memory_space<vmem>>, vector<400x256xbf16>
    %25 = arith.extf %24 : vector<400x256xbf16> to vector<400x256xf32>
    %cst_22 = arith.constant 2.000000e+00 : f32
    %26 = vector.broadcast %cst_22 : f32 to vector<400x256xf32>
    %27 = arith.mulf %26, %25 : vector<400x256xf32>
    %c0_23 = arith.constant 0 : index
    %c0_24 = arith.constant 0 : index
    %28 = vector.load %arg9[%c0_23, %c0_24] : memref<400x256xbf16, #tpu.memory_space<vmem>>, vector<400x256xbf16>
    %29 = arith.extf %28 : vector<400x256xbf16> to vector<400x256xf32>
    %30 = arith.subf %27, %29 : vector<400x256xf32>
    %31 = arith.truncf %30 : vector<400x256xf32> to vector<400x256xbf16>
    %c0_25 = arith.constant 0 : index
    %c0_26 = arith.constant 0 : index
    %32 = vector.load %arg14[%c0_25, %c0_26] : memref<400x256xbf16, #tpu.memory_space<vmem>>, vector<400x256xbf16>
    tpu.vector_store %arg14[%c0_25, %c0_26], %31 {strides = array<i32>} : memref<400x256xbf16, #tpu.memory_space<vmem>>, vector<400x256xbf16>,
    %c0_27 = arith.constant 0 : index
    %c0_28 = arith.constant 0 : index
    %33 = vector.load %arg6[%c0_27, %c0_28] : memref<400x1xf32, #tpu.memory_space<vmem>>, vector<400x1xf32>
    %c0_29 = arith.constant 0 : index
    %c0_30 = arith.constant 0 : index
    %34 = vector.load %arg8[%c0_29, %c0_30] : memref<400x256xbf16, #tpu.memory_space<vmem>>, vector<400x256xbf16>
    %35 = arith.extf %34 : vector<400x256xbf16> to vector<400x256xf32>
    %cst_31 = arith.constant 2.000000e+00 : f32
    %36 = vector.broadcast %cst_31 : f32 to vector<400x256xf32>
    %37 = arith.mulf %36, %35 : vector<400x256xf32>
    %c0_32 = arith.constant 0 : index
    %c0_33 = arith.constant 0 : index
    %38 = vector.load %arg9[%c0_32, %c0_33] : memref<400x256xbf16, #tpu.memory_space<vmem>>, vector<400x256xbf16>
    %39 = arith.extf %38 : vector<400x256xbf16> to vector<400x256xf32>
    %40 = arith.subf %37, %39 : vector<400x256xf32>
    %41 = vector.broadcast %33 : vector<400x1xf32> to vector<400x256xf32>
    %42 = arith.mulf %41, %40 : vector<400x256xf32>
    %43 = arith.truncf %42 : vector<400x256xf32> to vector<400x256xbf16>
    %c0_34 = arith.constant 0 : index
    %c0_35 = arith.constant 0 : index
    %44 = vector.load %arg15[%c0_34, %c0_35] : memref<400x256xbf16, #tpu.memory_space<vmem>>, vector<400x256xbf16>
    tpu.vector_store %arg15[%c0_34, %c0_35], %43 {strides = array<i32>} : memref<400x256xbf16, #tpu.memory_space<vmem>>, vector<400x256xbf16>,
    %c0_36 = arith.constant 0 : index
    %c0_37 = arith.constant 0 : index
    %45 = vector.load %arg10[%c0_36, %c0_37] : memref<400x101xbf16, #tpu.memory_space<vmem>>, vector<400x101xbf16>
    %46 = arith.extf %45 : vector<400x101xbf16> to vector<400x101xf32>
    %cst_38 = arith.constant 2.000000e+00 : f32
    %47 = vector.broadcast %cst_38 : f32 to vector<400x101xf32>
    %48 = arith.mulf %47, %46 : vector<400x101xf32>
    %c0_39 = arith.constant 0 : index
    %c0_40 = arith.constant 0 : index
    %49 = vector.load %arg11[%c0_39, %c0_40] : memref<400x101xbf16, #tpu.memory_space<vmem>>, vector<400x101xbf16>
    %50 = arith.extf %49 : vector<400x101xbf16> to vector<400x101xf32>
    %51 = arith.subf %48, %50 : vector<400x101xf32>
    %52 = arith.truncf %51 : vector<400x101xf32> to vector<400x101xbf16>
    %c0_41 = arith.constant 0 : index
    %c0_42 = arith.constant 0 : index
    %53 = vector.load %arg16[%c0_41, %c0_42] : memref<400x101xbf16, #tpu.memory_space<vmem>>, vector<400x101xbf16>
    tpu.vector_store %arg16[%c0_41, %c0_42], %52 {strides = array<i32>} : memref<400x101xbf16, #tpu.memory_space<vmem>>, vector<400x101xbf16>,
    return
  }
  func.func @transform_0(%arg0: i32) -> (i32, i32) {
    %c0_i32 = arith.constant 0 : i32
    %c0_i32_0 = arith.constant 0 : i32
    %c0_i32_1 = arith.constant 0 : i32
    return %c0_i32, %c0_i32_0 : i32, i32
  }
  func.func @transform_1(%arg0: i32) -> (i32, i32) {
    %c0_i32 = arith.constant 0 : i32
    %c0_i32_0 = arith.constant 0 : i32
    %c0_i32_1 = arith.constant 0 : i32
    return %c0_i32, %c0_i32_0 : i32, i32
  }
  func.func @transform_2(%arg0: i32) -> (i32, i32) {
    %c0_i32 = arith.constant 0 : i32
    %c0_i32_0 = arith.constant 0 : i32
    %c0_i32_1 = arith.constant 0 : i32
    return %c0_i32, %c0_i32_0 : i32, i32
  }
  func.func @transform_3(%arg0: i32) -> (i32, i32) {
    %c0_i32 = arith.constant 0 : i32
    %c0_i32_0 = arith.constant 0 : i32
    %c0_i32_1 = arith.constant 0 : i32
    return %c0_i32, %c0_i32_0 : i32, i32
  }
  func.func @transform_4(%arg0: i32) -> (i32, i32) {
    %c0_i32 = arith.constant 0 : i32
    %c0_i32_0 = arith.constant 0 : i32
    %c0_i32_1 = arith.constant 0 : i32
    return %c0_i32, %c0_i32_0 : i32, i32
  }
  func.func @transform_5(%arg0: i32) -> (i32, i32) {
    %c0_i32 = arith.constant 0 : i32
    %c0_i32_0 = arith.constant 0 : i32
    return %arg0, %c0_i32 : i32, i32
  }
  func.func @transform_6(%arg0: i32) -> (i32, i32, i32) {
    %c0_i32 = arith.constant 0 : i32
    %c0_i32_0 = arith.constant 0 : i32
    %c0_i32_1 = arith.constant 0 : i32
    return %arg0, %c0_i32, %c0_i32_0 : i32, i32, i32
  }
  func.func @transform_7(%arg0: i32) -> (i32, i32) {
    %c0_i32 = arith.constant 0 : i32
    %c0_i32_0 = arith.constant 0 : i32
    return %arg0, %c0_i32 : i32, i32
  }
  func.func @transform_8(%arg0: i32) -> (i32, i32) {
    %c0_i32 = arith.constant 0 : i32
    %c0_i32_0 = arith.constant 0 : i32
    return %arg0, %c0_i32 : i32, i32
  }
  func.func @transform_9(%arg0: i32) -> (i32, i32) {
    %c0_i32 = arith.constant 0 : i32
    %c0_i32_0 = arith.constant 0 : i32
    return %arg0, %c0_i32 : i32, i32
  }
  func.func @transform_10(%arg0: i32) -> (i32, i32) {
    %c0_i32 = arith.constant 0 : i32
    %c0_i32_0 = arith.constant 0 : i32
    return %arg0, %c0_i32 : i32, i32
  }
  func.func @transform_11(%arg0: i32) -> (i32, i32, i32) {
    %c0_i32 = arith.constant 0 : i32
    %c0_i32_0 = arith.constant 0 : i32
    %c0_i32_1 = arith.constant 0 : i32
    return %arg0, %c0_i32, %c0_i32_0 : i32, i32, i32
  }
  func.func @transform_12(%arg0: i32) -> (i32, i32, i32) {
    %c0_i32 = arith.constant 0 : i32
    %c0_i32_0 = arith.constant 0 : i32
    %c0_i32_1 = arith.constant 0 : i32
    return %arg0, %c0_i32, %c0_i32_0 : i32, i32, i32
  }
  func.func @transform_13(%arg0: i32) -> (i32, i32) {
    %c0_i32 = arith.constant 0 : i32
    %c0_i32_0 = arith.constant 0 : i32
    return %arg0, %c0_i32 : i32, i32
  }
  func.func @transform_14(%arg0: i32) -> (i32, i32) {
    %c0_i32 = arith.constant 0 : i32
    %c0_i32_0 = arith.constant 0 : i32
    return %arg0, %c0_i32 : i32, i32
  }
  func.func @transform_15(%arg0: i32) -> (i32, i32) {
    %c0_i32 = arith.constant 0 : i32
    %c0_i32_0 = arith.constant 0 : i32
    return %arg0, %c0_i32 : i32, i32
  }
}

</mosaic_0001>

<llo_original>
// kernel: tpu_custom_call.1
$region0: #{tpu_custom_call.1}
  #allocation0 [shape = 'u32[]', space=smem, size = 0x4, offset = 0x4, fixed_abs, tag = 'smem constant byte address 0x4 - core index']
  #allocation1 [shape = 'u32[144,128]{1,0:T(1,128)}', space=vmem, size = 0x12000, scoped, tag = 'internal scratch']
  %s0 = inlined_call_operand.vmem [shape: bf16[8,128], index: 0, kind: input, shape index: {}]
  %s1 = inlined_call_operand.vmem [shape: bf16[128,512], index: 1, kind: input, shape index: {}]
  %s2 = inlined_call_operand.vmem [shape: f32[1,512], index: 2, kind: input, shape index: {}]
  %s3 = inlined_call_operand.vmem [shape: bf16[512,256], index: 3, kind: input, shape index: {}]
  %s4 = inlined_call_operand.vmem [shape: f32[1,256], index: 4, kind: input, shape index: {}]
  %s5 = inlined_call_operand.vmem [shape: f32[800,1], index: 5, kind: input, shape index: {}]
  %s6 = inlined_call_operand.vmem [shape: f32[100,8,1], index: 6, kind: input, shape index: {}]
  %s7 = inlined_call_operand.vmem [shape: bf16[800,256], index: 7, kind: input, shape index: {}]
  %s8 = inlined_call_operand.vmem [shape: bf16[800,256], index: 8, kind: input, shape index: {}]
  %s9 = inlined_call_operand.vmem [shape: bf16[800,101], index: 9, kind: input, shape index: {}]
  %s10 = inlined_call_operand.vmem [shape: bf16[800,101], index: 10, kind: input, shape index: {}]
  %s11 = inlined_call_operand.hbm [shape: f32[2,8,256], index: 11, kind: output, shape index: {0}]
  %s12 = inlined_call_operand.hbm [shape: bf16[100,8,256], index: 12, kind: output, shape index: {1}]
  %s13 = inlined_call_operand.hbm [shape: bf16[800,256], index: 13, kind: output, shape index: {2}]
  %s14 = inlined_call_operand.hbm [shape: bf16[800,256], index: 14, kind: output, shape index: {3}]
  %s15 = inlined_call_operand.vmem [shape: bf16[800,101], index: 15, kind: output, shape index: {4}]
  %16 = xla_tuple %s11, %s12, %s13, %s14, %s15
  %s17 = sld [smem:[#allocation0]]
  $region109: #{tpu_custom_call.1} parent=0
    _
  %s19 = ssub.s32 1, %s17
  %s20 = scalar_select 0, %s19, %s17
  $region1: #{tpu_custom_call.1} parent=0
    #allocation2 [shape = 'u8[16384]{0}', space=vmem, size = 0x4000, scoped, tag = 'output window, operand 0']
    #allocation3 [shape = 's32[2]{0}', space=sflag, size = 0x8, scoped, tag = 'scoped memory for tpu_custom_call.1']
    #allocation4 [shape = 'u8[409600]{0}', space=vmem, size = 0x64000, scoped, tag = 'output window, operand 1']
    #allocation5 [shape = 's32[2]{0}', space=sflag, size = 0x8, scoped, tag = 'scoped memory for tpu_custom_call.1']
    #allocation6 [shape = 'u8[409600]{0}', space=vmem, size = 0x64000, scoped, tag = 'output window, operand 2']
    #allocation7 [shape = 'u8[409600]{0}', space=vmem, size = 0x64000, scoped, tag = 'output window, operand 3']
    #allocation8 [shape = 's32[2]{0}', space=sflag, size = 0x8, scoped, tag = 'scoped memory for tpu_custom_call.1']
    %21 = vsyncpa [#allocation3], 0
    %s22 = scalar_lea.sflag [#allocation3], 1
    %23 = vsyncpa %s22, 0
    %24 = vsyncpa [#allocation5], 0
    %s25 = scalar_lea.sflag [#allocation5], 1
    %26 = vsyncpa %s25, 0
    %27 = vsyncpa [#allocation8], 0
    %s28 = scalar_lea.sflag [#allocation8], 1
    %29 = vsyncpa %s28, 0
    loop: start=0, step=1, limit=4
    $region2: #{tpu_custom_call.1} parent=1 // loop_pre_header
      _
    $region3: #{tpu_custom_call.1} parent=1 // loop_header
      %s31 = sphi 0, %s35
      %p32 = scmp.ge.s32.totalorder %s31, 4
      %s39 = sphi 0, %s39
      %s41 = sphi 0, %s39
      %s42 = sphi 0, %s41
      %s56 = sphi 0, %s42
      %s60 = sphi 0, %s60
      %s62 = sphi 0, %s60
      %s63 = sphi 0, %s62
      %s77 = sphi 0, %s63
      %s81 = sphi 0, %s81
      %s83 = sphi 0, %s81
      %s84 = sphi 0, %s83
      %s98 = sphi 0, %s84
      %s102 = sphi 0, %s102
      %s104 = sphi 0, %s102
      %s105 = sphi 0, %s104
      %s119 = sphi 0, %s105
      %s123 = sphi 0, %s123
      %s125 = sphi 0, %s123
      %s126 = sphi 0, %s125
      %s140 = sphi 0, %s126
      %s146 = sphi 0, %s148
      %s149 = sphi 0, %s146
      %s150 = sphi 0, %s149
      %s166 = sphi 0, %s150
      %s172 = sphi 0, %s174
      %s175 = sphi 0, %s172
      %s176 = sphi 0, %s175
      %s192 = sphi 0, %s176
      %s198 = sphi 0, %s200
      %s201 = sphi 0, %s198
      %s202 = sphi 0, %s201
      %s218 = sphi 0, %s202
      %s224 = sphi 0, %s226
      %s227 = sphi 0, %s224
      %s228 = sphi 0, %s227
      %s244 = sphi 0, %s228
      %s250 = sphi 0, %s252
      %s253 = sphi 0, %s250
      %s254 = sphi 0, %s253
      %s270 = sphi 0, %s254
      %s276 = sphi 0, %s278
      %s279 = sphi 0, %s276
      %s280 = sphi 0, %s279
      %s296 = sphi 0, %s280
      %s302 = sphi 0, %s304
      %s305 = sphi 0, %s302
      %s306 = sphi 0, %s305
      %s322 = sphi 0, %s306
      %s328 = sphi 0, %s330
      %s331 = sphi 0, %s328
      %s332 = sphi 0, %s331
      %s348 = sphi 0, %s332
      %s354 = sphi 0, %s356
      %s357 = sphi 0, %s354
      %s358 = sphi 0, %s357
      %s374 = sphi 0, %s358
      %s380 = sphi 0, %s382
      %s383 = sphi 0, %s380
      %s384 = sphi 0, %s383
      %s400 = sphi 0, %s384
      %s406 = sphi 0, %s408
      %s409 = sphi 0, %s406
      %s410 = sphi 0, %s409
      %s426 = sphi 0, %s410
    $region4: #{tpu_custom_call.1} parent=1 // loop_header_branch
      %34 = sbr.rel (%p32) target = $region8
    $region5: #{tpu_custom_call.1} parent=1 // loop_body
      %s36 = ssub.s32 %s31, 1
      %s37 = ssub.s32 %s31, 2
      %s38 = sadd.s32 %s31, 1
      %s40 = sadd.s32 %s39, 1
      %p43 = scmp.eq.s32.totalorder %s31, 1
      %p44 = scmp.ne.s32.totalorder %s39, %s41
      %p45 = scmp.eq.s32.totalorder %s31, 0
      %p46 = por %p44, %p45
      %p47 = scmp.ne.s32.totalorder %s39, %s41
      %p48 = scmp.eq.s32.totalorder %s36, 1
      %p49 = por %p47, %p48
      %p50 = scmp.ne.s32.totalorder %s41, %s42
      %p51 = scmp.eq.s32.totalorder %s36, 0
      %p52 = por %p50, %p51
      %p53 = scmp.ne.s32.totalorder %s41, %s42
      %p54 = scmp.eq.s32.totalorder %s37, 1
      %p55 = por %p53, %p54
      %p57 = scmp.ne.s32.totalorder %s42, %s56
      %p58 = scmp.eq.s32.totalorder %s37, 0
      %p59 = por %p57, %p58
      %s61 = sadd.s32 %s60, 1
      %p64 = scmp.eq.s32.totalorder %s31, 1
      %p65 = scmp.ne.s32.totalorder %s60, %s62
      %p66 = scmp.eq.s32.totalorder %s31, 0
      %p67 = por %p65, %p66
      %p68 = scmp.ne.s32.totalorder %s60, %s62
      %p69 = scmp.eq.s32.totalorder %s36, 1
      %p70 = por %p68, %p69
      %p71 = scmp.ne.s32.totalorder %s62, %s63
      %p72 = scmp.eq.s32.totalorder %s36, 0
      %p73 = por %p71, %p72
      %p74 = scmp.ne.s32.totalorder %s62, %s63
      %p75 = scmp.eq.s32.totalorder %s37, 1
      %p76 = por %p74, %p75
      %p78 = scmp.ne.s32.totalorder %s63, %s77
      %p79 = scmp.eq.s32.totalorder %s37, 0
      %p80 = por %p78, %p79
      %s82 = sadd.s32 %s81, 1
      %p85 = scmp.eq.s32.totalorder %s31, 1
      %p86 = scmp.ne.s32.totalorder %s81, %s83
      %p87 = scmp.eq.s32.totalorder %s31, 0
      %p88 = por %p86, %p87
      %p89 = scmp.ne.s32.totalorder %s81, %s83
      %p90 = scmp.eq.s32.totalorder %s36, 1
      %p91 = por %p89, %p90
      %p92 = scmp.ne.s32.totalorder %s83, %s84
      %p93 = scmp.eq.s32.totalorder %s36, 0
      %p94 = por %p92, %p93
      %p95 = scmp.ne.s32.totalorder %s83, %s84
      %p96 = scmp.eq.s32.totalorder %s37, 1
      %p97 = por %p95, %p96
      %p99 = scmp.ne.s32.totalorder %s84, %s98
      %p100 = scmp.eq.s32.totalorder %s37, 0
      %p101 = por %p99, %p100
      %s103 = sadd.s32 %s102, 1
      %p106 = scmp.eq.s32.totalorder %s31, 1
      %p107 = scmp.ne.s32.totalorder %s102, %s104
      %p108 = scmp.eq.s32.totalorder %s31, 0
      %p109 = por %p107, %p108
      %p110 = scmp.ne.s32.totalorder %s102, %s104
      %p111 = scmp.eq.s32.totalorder %s36, 1
      %p112 = por %p110, %p111
      %p113 = scmp.ne.s32.totalorder %s104, %s105
      %p114 = scmp.eq.s32.totalorder %s36, 0
      %p115 = por %p113, %p114
      %p116 = scmp.ne.s32.totalorder %s104, %s105
      %p117 = scmp.eq.s32.totalorder %s37, 1
      %p118 = por %p116, %p117
      %p120 = scmp.ne.s32.totalorder %s105, %s119
      %p121 = scmp.eq.s32.totalorder %s37, 0
      %p122 = por %p120, %p121
      %s124 = sadd.s32 %s123, 1
      %p127 = scmp.eq.s32.totalorder %s31, 1
      %p128 = scmp.ne.s32.totalorder %s123, %s125
      %p129 = scmp.eq.s32.totalorder %s31, 0
      %p130 = por %p128, %p129
      %p131 = scmp.ne.s32.totalorder %s123, %s125
      %p132 = scmp.eq.s32.totalorder %s36, 1
      %p133 = por %p131, %p132
      %p134 = scmp.ne.s32.totalorder %s125, %s126
      %p135 = scmp.eq.s32.totalorder %s36, 0
      %p136 = por %p134, %p135
      %p137 = scmp.ne.s32.totalorder %s125, %s126
      %p138 = scmp.eq.s32.totalorder %s37, 1
      %p139 = por %p137, %p138
      %p141 = scmp.ne.s32.totalorder %s126, %s140
      %p142 = scmp.eq.s32.totalorder %s37, 0
      %p143 = por %p141, %p142
      %s144 = ssub.s32 %s31, %s38
      %p145 = scmp.eq.s32.totalorder %s144, 0
      %s147 = sadd.s32 %s146, 1
      %s148 = scalar_select %p145, %s146, %s147
      %p151 = pneg %p145
      %p152 = scmp.eq.s32.totalorder %s31, 1
      %p153 = por %p151, %p152
      %p154 = scmp.ne.s32.totalorder %s146, %s149
      %p155 = scmp.eq.s32.totalorder %s31, 0
      %p156 = por %p154, %p155
      %p157 = scmp.ne.s32.totalorder %s146, %s149
      %p158 = scmp.eq.s32.totalorder %s36, 1
      %p159 = por %p157, %p158
      %p160 = scmp.ne.s32.totalorder %s149, %s150
      %p161 = scmp.eq.s32.totalorder %s36, 0
      %p162 = por %p160, %p161
      %p163 = scmp.ne.s32.totalorder %s149, %s150
      %p164 = scmp.eq.s32.totalorder %s37, 1
      %p165 = por %p163, %p164
      %p167 = scmp.ne.s32.totalorder %s150, %s166
      %p168 = scmp.eq.s32.totalorder %s37, 0
      %p169 = por %p167, %p168
      %s170 = ssub.s32 %s31, %s38
      %p171 = scmp.eq.s32.totalorder %s170, 0
      %s173 = sadd.s32 %s172, 1
      %s174 = scalar_select %p171, %s172, %s173
      %p177 = pneg %p171
      %p178 = scmp.eq.s32.totalorder %s31, 1
      %p179 = por %p177, %p178
      %p180 = scmp.ne.s32.totalorder %s172, %s175
      %p181 = scmp.eq.s32.totalorder %s31, 0
      %p182 = por %p180, %p181
      %p183 = scmp.ne.s32.totalorder %s172, %s175
      %p184 = scmp.eq.s32.totalorder %s36, 1
      %p185 = por %p183, %p184
      %p186 = scmp.ne.s32.totalorder %s175, %s176
      %p187 = scmp.eq.s32.totalorder %s36, 0
      %p188 = por %p186, %p187
      %p189 = scmp.ne.s32.totalorder %s175, %s176
      %p190 = scmp.eq.s32.totalorder %s37, 1
      %p191 = por %p189, %p190
      %p193 = scmp.ne.s32.totalorder %s176, %s192
      %p194 = scmp.eq.s32.totalorder %s37, 0
      %p195 = por %p193, %p194
      %s196 = ssub.s32 %s31, %s38
      %p197 = scmp.eq.s32.totalorder %s196, 0
      %s199 = sadd.s32 %s198, 1
      %s200 = scalar_select %p197, %s198, %s199
      %p203 = pneg %p197
      %p204 = scmp.eq.s32.totalorder %s31, 1
      %p205 = por %p203, %p204
      %p206 = scmp.ne.s32.totalorder %s198, %s201
      %p207 = scmp.eq.s32.totalorder %s31, 0
      %p208 = por %p206, %p207
      %p209 = scmp.ne.s32.totalorder %s198, %s201
      %p210 = scmp.eq.s32.totalorder %s36, 1
      %p211 = por %p209, %p210
      %p212 = scmp.ne.s32.totalorder %s201, %s202
      %p213 = scmp.eq.s32.totalorder %s36, 0
      %p214 = por %p212, %p213
      %p215 = scmp.ne.s32.totalorder %s201, %s202
      %p216 = scmp.eq.s32.totalorder %s37, 1
      %p217 = por %p215, %p216
      %p219 = scmp.ne.s32.totalorder %s202, %s218
      %p220 = scmp.eq.s32.totalorder %s37, 0
      %p221 = por %p219, %p220
      %s222 = ssub.s32 %s31, %s38
      %p223 = scmp.eq.s32.totalorder %s222, 0
      %s225 = sadd.s32 %s224, 1
      %s226 = scalar_select %p223, %s224, %s225
      %p229 = pneg %p223
      %p230 = scmp.eq.s32.totalorder %s31, 1
      %p231 = por %p229, %p230
      %p232 = scmp.ne.s32.totalorder %s224, %s227
      %p233 = scmp.eq.s32.totalorder %s31, 0
      %p234 = por %p232, %p233
      %p235 = scmp.ne.s32.totalorder %s224, %s227
      %p236 = scmp.eq.s32.totalorder %s36, 1
      %p237 = por %p235, %p236
      %p238 = scmp.ne.s32.totalorder %s227, %s228
      %p239 = scmp.eq.s32.totalorder %s36, 0
      %p240 = por %p238, %p239
      %p241 = scmp.ne.s32.totalorder %s227, %s228
      %p242 = scmp.eq.s32.totalorder %s37, 1
      %p243 = por %p241, %p242
      %p245 = scmp.ne.s32.totalorder %s228, %s244
      %p246 = scmp.eq.s32.totalorder %s37, 0
      %p247 = por %p245, %p246
      %s248 = ssub.s32 %s31, %s38
      %p249 = scmp.eq.s32.totalorder %s248, 0
      %s251 = sadd.s32 %s250, 1
      %s252 = scalar_select %p249, %s250, %s251
      %p255 = pneg %p249
      %p256 = scmp.eq.s32.totalorder %s31, 1
      %p257 = por %p255, %p256
      %p258 = scmp.ne.s32.totalorder %s250, %s253
      %p259 = scmp.eq.s32.totalorder %s31, 0
      %p260 = por %p258, %p259
      %p261 = scmp.ne.s32.totalorder %s250, %s253
      %p262 = scmp.eq.s32.totalorder %s36, 1
      %p263 = por %p261, %p262
      %p264 = scmp.ne.s32.totalorder %s253, %s254
      %p265 = scmp.eq.s32.totalorder %s36, 0
      %p266 = por %p264, %p265
      %p267 = scmp.ne.s32.totalorder %s253, %s254
      %p268 = scmp.eq.s32.totalorder %s37, 1
      %p269 = por %p267, %p268
      %p271 = scmp.ne.s32.totalorder %s254, %s270
      %p272 = scmp.eq.s32.totalorder %s37, 0
      %p273 = por %p271, %p272
      %s274 = ssub.s32 %s31, %s38
      %p275 = scmp.eq.s32.totalorder %s274, 0
      %s277 = sadd.s32 %s276, 1
      %s278 = scalar_select %p275, %s276, %s277
      %p281 = pneg %p275
      %p282 = scmp.eq.s32.totalorder %s31, 1
      %p283 = por %p281, %p282
      %p284 = scmp.ne.s32.totalorder %s276, %s279
      %p285 = scmp.eq.s32.totalorder %s31, 0
      %p286 = por %p284, %p285
      %p287 = scmp.ne.s32.totalorder %s276, %s279
      %p288 = scmp.eq.s32.totalorder %s36, 1
      %p289 = por %p287, %p288
      %p290 = scmp.ne.s32.totalorder %s279, %s280
      %p291 = scmp.eq.s32.totalorder %s36, 0
      %p292 = por %p290, %p291
      %p293 = scmp.ne.s32.totalorder %s279, %s280
      %p294 = scmp.eq.s32.totalorder %s37, 1
      %p295 = por %p293, %p294
      %p297 = scmp.ne.s32.totalorder %s280, %s296
      %p298 = scmp.eq.s32.totalorder %s37, 0
      %p299 = por %p297, %p298
      %s300 = ssub.s32 %s31, %s38
      %p301 = scmp.eq.s32.totalorder %s300, 0
      %s303 = sadd.s32 %s302, 1
      %s304 = scalar_select %p301, %s302, %s303
      %p307 = pneg %p301
      %p308 = scmp.eq.s32.totalorder %s31, 1
      %p309 = por %p307, %p308
      %p310 = scmp.ne.s32.totalorder %s302, %s305
      %p311 = scmp.eq.s32.totalorder %s31, 0
      %p312 = por %p310, %p311
      %p313 = scmp.ne.s32.totalorder %s302, %s305
      %p314 = scmp.eq.s32.totalorder %s36, 1
      %p315 = por %p313, %p314
      %p316 = scmp.ne.s32.totalorder %s305, %s306
      %p317 = scmp.eq.s32.totalorder %s36, 0
      %p318 = por %p316, %p317
      %p319 = scmp.ne.s32.totalorder %s305, %s306
      %p320 = scmp.eq.s32.totalorder %s37, 1
      %p321 = por %p319, %p320
      %p323 = scmp.ne.s32.totalorder %s306, %s322
      %p324 = scmp.eq.s32.totalorder %s37, 0
      %p325 = por %p323, %p324
      %s326 = ssub.s32 %s31, %s38
      %p327 = scmp.eq.s32.totalorder %s326, 0
      %s329 = sadd.s32 %s328, 1
      %s330 = scalar_select %p327, %s328, %s329
      %p333 = pneg %p327
      %p334 = scmp.eq.s32.totalorder %s31, 1
      %p335 = por %p333, %p334
      %p336 = scmp.ne.s32.totalorder %s328, %s331
      %p337 = scmp.eq.s32.totalorder %s31, 0
      %p338 = por %p336, %p337
      %p339 = scmp.ne.s32.totalorder %s328, %s331
      %p340 = scmp.eq.s32.totalorder %s36, 1
      %p341 = por %p339, %p340
      %p342 = scmp.ne.s32.totalorder %s331, %s332
      %p343 = scmp.eq.s32.totalorder %s36, 0
      %p344 = por %p342, %p343
      %p345 = scmp.ne.s32.totalorder %s331, %s332
      %p346 = scmp.eq.s32.totalorder %s37, 1
      %p347 = por %p345, %p346
      %p349 = scmp.ne.s32.totalorder %s332, %s348
      %p350 = scmp.eq.s32.totalorder %s37, 0
      %p351 = por %p349, %p350
      %s352 = ssub.s32 %s31, %s38
      %p353 = scmp.eq.s32.totalorder %s352, 0
      %s355 = sadd.s32 %s354, 1
      %s356 = scalar_select %p353, %s354, %s355
      %p359 = pneg %p353
      %p360 = scmp.eq.s32.totalorder %s31, 1
      %p361 = por %p359, %p360
      %p362 = scmp.ne.s32.totalorder %s354, %s357
      %p363 = scmp.eq.s32.totalorder %s31, 0
      %p364 = por %p362, %p363
      %p365 = scmp.ne.s32.totalorder %s354, %s357
      %p366 = scmp.eq.s32.totalorder %s36, 1
      %p367 = por %p365, %p366
      %p368 = scmp.ne.s32.totalorder %s357, %s358
      %p369 = scmp.eq.s32.totalorder %s36, 0
      %p370 = por %p368, %p369
      %p371 = scmp.ne.s32.totalorder %s357, %s358
      %p372 = scmp.eq.s32.totalorder %s37, 1
      %p373 = por %p371, %p372
      %p375 = scmp.ne.s32.totalorder %s358, %s374
      %p376 = scmp.eq.s32.totalorder %s37, 0
      %p377 = por %p375, %p376
      %s378 = ssub.s32 %s31, %s38
      %p379 = scmp.eq.s32.totalorder %s378, 0
      %s381 = sadd.s32 %s380, 1
      %s382 = scalar_select %p379, %s380, %s381
      %p385 = pneg %p379
      %p386 = scmp.eq.s32.totalorder %s31, 1
      %p387 = por %p385, %p386
      %p388 = scmp.ne.s32.totalorder %s380, %s383
      %p389 = scmp.eq.s32.totalorder %s31, 0
      %p390 = por %p388, %p389
      %p391 = scmp.ne.s32.totalorder %s380, %s383
      %p392 = scmp.eq.s32.totalorder %s36, 1
      %p393 = por %p391, %p392
      %p394 = scmp.ne.s32.totalorder %s383, %s384
      %p395 = scmp.eq.s32.totalorder %s36, 0
      %p396 = por %p394, %p395
      %p397 = scmp.ne.s32.totalorder %s383, %s384
      %p398 = scmp.eq.s32.totalorder %s37, 1
      %p399 = por %p397, %p398
      %p401 = scmp.ne.s32.totalorder %s384, %s400
      %p402 = scmp.eq.s32.totalorder %s37, 0
      %p403 = por %p401, %p402
      %s404 = ssub.s32 %s31, %s38
      %p405 = scmp.eq.s32.totalorder %s404, 0
      %s407 = sadd.s32 %s406, 1
      %s408 = scalar_select %p405, %s406, %s407
      %p411 = pneg %p405
      %p412 = scmp.eq.s32.totalorder %s31, 1
      %p413 = por %p411, %p412
      %p414 = scmp.ne.s32.totalorder %s406, %s409
      %p415 = scmp.eq.s32.totalorder %s31, 0
      %p416 = por %p414, %p415
      %p417 = scmp.ne.s32.totalorder %s406, %s409
      %p418 = scmp.eq.s32.totalorder %s36, 1
      %p419 = por %p417, %p418
      %p420 = scmp.ne.s32.totalorder %s409, %s410
      %p421 = scmp.eq.s32.totalorder %s36, 0
      %p422 = por %p420, %p421
      %p423 = scmp.ne.s32.totalorder %s409, %s410
      %p424 = scmp.eq.s32.totalorder %s37, 1
      %p425 = por %p423, %p424
      %p427 = scmp.ne.s32.totalorder %s410, %s426
      %p428 = scmp.eq.s32.totalorder %s37, 0
      %p429 = por %p427, %p428
      %p430 = scmp.le.s32.totalorder 1, %s31
      %p431 = scmp.lt.s32.totalorder %s31, 3
      %p432 = pnand %p430, %p431
      %p433 = pneg %p432
      // Predicated region
      $region9: #{tpu_custom_call.1} parent=5 // pred_check
        _
      $region10: #{tpu_custom_call.1} parent=5 // pred_check_branch
        %435 = sbr.rel (%p432) target = $region12
      $region11: #{tpu_custom_call.1} parent=5 // pred_region
        %s436 = ssub.s32 %s31, 1
        // Predicated region
        $region13: #{tpu_custom_call.1} parent=11 // pred_check
          %p437 = pneg %p52
        $region14: #{tpu_custom_call.1} parent=11 // pred_check_branch
          %439 = sbr.rel (%p437) target = $region16
        $region15: #{tpu_custom_call.1} parent=11 // pred_region
          _
        $region16: #{tpu_custom_call.1} parent=11 // pred_fallthru
          _
        // Predicated region
        $region17: #{tpu_custom_call.1} parent=11 // pred_check
          %p440 = pneg %p73
        $region18: #{tpu_custom_call.1} parent=11 // pred_check_branch
          %442 = sbr.rel (%p440) target = $region20
        $region19: #{tpu_custom_call.1} parent=11 // pred_region
          _
        $region20: #{tpu_custom_call.1} parent=11 // pred_fallthru
          _
        // Predicated region
        $region21: #{tpu_custom_call.1} parent=11 // pred_check
          %p443 = pneg %p94
        $region22: #{tpu_custom_call.1} parent=11 // pred_check_branch
          %445 = sbr.rel (%p443) target = $region24
        $region23: #{tpu_custom_call.1} parent=11 // pred_region
          _
        $region24: #{tpu_custom_call.1} parent=11 // pred_fallthru
          _
        // Predicated region
        $region25: #{tpu_custom_call.1} parent=11 // pred_check
          %p446 = pneg %p115
        $region26: #{tpu_custom_call.1} parent=11 // pred_check_branch
          %448 = sbr.rel (%p446) target = $region28
        $region27: #{tpu_custom_call.1} parent=11 // pred_region
          _
        $region28: #{tpu_custom_call.1} parent=11 // pred_fallthru
          _
        // Predicated region
        $region29: #{tpu_custom_call.1} parent=11 // pred_check
          %p449 = pneg %p136
        $region30: #{tpu_custom_call.1} parent=11 // pred_check_branch
          %451 = sbr.rel (%p449) target = $region32
        $region31: #{tpu_custom_call.1} parent=11 // pred_region
          _
        $region32: #{tpu_custom_call.1} parent=11 // pred_fallthru
          _
      $region12: #{tpu_custom_call.1} parent=5 // pred_fallthru
        _
      %p452 = scmp.lt.s32.totalorder %s31, 2
      // Predicated region
      $region33: #{tpu_custom_call.1} parent=5 // pred_check
        %p453 = pneg %p452
      $region34: #{tpu_custom_call.1} parent=5 // pred_check_branch
        %455 = sbr.rel (%p453) target = $region36
      $region35: #{tpu_custom_call.1} parent=5 // pred_region
        // Predicated region
        $region37: #{tpu_custom_call.1} parent=35 // pred_check
          %p456 = pneg %p156
        $region38: #{tpu_custom_call.1} parent=35 // pred_check_branch
          %458 = sbr.rel (%p456) target = $region40
        $region39: #{tpu_custom_call.1} parent=35 // pred_region
          %s459 = smul.u32 50, %s31
          %p460 = scmp.lt.s32.totalorder %s459, 99
          %s461 = scalar_select %p460, %s459, 99
          %s462 = smul.addr %s461, 8
          %s463 = scalar_lea.vmem %s5, %s462
          %s464 = smul.u32 50, %s31
        $region40: #{tpu_custom_call.1} parent=35 // pred_fallthru
          _
        // Predicated region
        $region41: #{tpu_custom_call.1} parent=35 // pred_check
          %p465 = pneg %p182
        $region42: #{tpu_custom_call.1} parent=35 // pred_check_branch
          %467 = sbr.rel (%p465) target = $region44
        $region43: #{tpu_custom_call.1} parent=35 // pred_region
          %s468 = smul.u32 50, %s31
          %p469 = scmp.lt.s32.totalorder %s468, 99
          %s470 = scalar_select %p469, %s468, 99
          %s471 = smul.addr %s470, 8
          %s472 = scalar_lea.vmem %s6, %s471
          %s473 = smul.u32 50, %s31
        $region44: #{tpu_custom_call.1} parent=35 // pred_fallthru
          _
        // Predicated region
        $region45: #{tpu_custom_call.1} parent=35 // pred_check
          %p474 = pneg %p208
        $region46: #{tpu_custom_call.1} parent=35 // pred_check_branch
          %476 = sbr.rel (%p474) target = $region48
        $region47: #{tpu_custom_call.1} parent=35 // pred_region
          %s477 = smul.u32 50, %s31
          %p478 = scmp.lt.s32.totalorder %s477, 99
          %s479 = scalar_select %p478, %s477, 99
          %s480 = smul.addr %s479, 2
          %s481 = smul.addr %s480, 4
          %s482 = scalar_lea.vmem %s7, %s481
          %s483 = smul.u32 50, %s31
        $region48: #{tpu_custom_call.1} parent=35 // pred_fallthru
          _
        // Predicated region
        $region49: #{tpu_custom_call.1} parent=35 // pred_check
          %p484 = pneg %p234
        $region50: #{tpu_custom_call.1} parent=35 // pred_check_branch
          %486 = sbr.rel (%p484) target = $region52
        $region51: #{tpu_custom_call.1} parent=35 // pred_region
          %s487 = smul.u32 50, %s31
          %p488 = scmp.lt.s32.totalorder %s487, 99
          %s489 = scalar_select %p488, %s487, 99
          %s490 = smul.addr %s489, 2
          %s491 = smul.addr %s490, 4
          %s492 = scalar_lea.vmem %s8, %s491
          %s493 = smul.u32 50, %s31
        $region52: #{tpu_custom_call.1} parent=35 // pred_fallthru
          _
        // Predicated region
        $region53: #{tpu_custom_call.1} parent=35 // pred_check
          %p494 = pneg %p260
        $region54: #{tpu_custom_call.1} parent=35 // pred_check_branch
          %496 = sbr.rel (%p494) target = $region56
        $region55: #{tpu_custom_call.1} parent=35 // pred_region
          %s497 = smul.u32 50, %s31
          %p498 = scmp.lt.s32.totalorder %s497, 99
          %s499 = scalar_select %p498, %s497, 99
          %s500 = smul.addr %s499, 4
          %s501 = scalar_lea.vmem %s9, %s500
          %s502 = smul.u32 50, %s31
        $region56: #{tpu_custom_call.1} parent=35 // pred_fallthru
          _
        // Predicated region
        $region57: #{tpu_custom_call.1} parent=35 // pred_check
          %p503 = pneg %p286
        $region58: #{tpu_custom_call.1} parent=35 // pred_check_branch
          %505 = sbr.rel (%p503) target = $region60
        $region59: #{tpu_custom_call.1} parent=35 // pred_region
          %s506 = smul.u32 50, %s31
          %p507 = scmp.lt.s32.totalorder %s506, 99
          %s508 = scalar_select %p507, %s506, 99
          %s509 = smul.addr %s508, 4
          %s510 = scalar_lea.vmem %s10, %s509
          %s511 = smul.u32 50, %s31
        $region60: #{tpu_custom_call.1} parent=35 // pred_fallthru
          _
      $region36: #{tpu_custom_call.1} parent=5 // pred_fallthru
        _
      %p512 = scmp.le.s32.totalorder 1, %s31
      %p513 = scmp.lt.s32.totalorder %s31, 3
      %p514 = pnand %p512, %p513
      %p515 = pneg %p514
      // Predicated region
      $region61: #{tpu_custom_call.1} parent=5 // pred_check
        _
      $region62: #{tpu_custom_call.1} parent=5 // pred_check_branch
        %517 = sbr.rel (%p514) target = $region64
      $region63: #{tpu_custom_call.1} parent=5 // pred_region
        %s518 = ssub.s32 %s31, 1
        %p519 = pneg %p52
        %p520 = pneg %p49
        %p521 = pneg %p73
        %p522 = pneg %p70
        %p523 = pneg %p94
        %p524 = pneg %p91
        %p525 = pneg %p115
        %p526 = pneg %p112
        %p527 = pneg %p136
        %p528 = pneg %p133
        %s529 = smul.u32 50, %s36
        %p530 = scmp.lt.s32.totalorder %s529, 99
        %s531 = scalar_select %p530, %s529, 99
        %s532 = smul.addr %s531, 8
        %s533 = scalar_lea.vmem %s5, %s532
        %p534 = pneg %p162
        %p535 = pneg %p159
        %s536 = smul.u32 50, %s36
        %p537 = scmp.lt.s32.totalorder %s536, 99
        %s538 = scalar_select %p537, %s536, 99
        %s539 = smul.addr %s538, 8
        %s540 = scalar_lea.vmem %s6, %s539
        %p541 = pneg %p188
        %p542 = pneg %p185
        %s543 = smul.u32 50, %s36
        %p544 = scmp.lt.s32.totalorder %s543, 99
        %s545 = scalar_select %p544, %s543, 99
        %s546 = smul.addr %s545, 2
        %s547 = smul.addr %s546, 4
        %s548 = scalar_lea.vmem %s7, %s547
        %p549 = pneg %p214
        %p550 = pneg %p211
        %s551 = smul.u32 50, %s36
        %p552 = scmp.lt.s32.totalorder %s551, 99
        %s553 = scalar_select %p552, %s551, 99
        %s554 = smul.addr %s553, 2
        %s555 = smul.addr %s554, 4
        %s556 = scalar_lea.vmem %s8, %s555
        %p557 = pneg %p240
        %p558 = pneg %p237
        %s559 = smul.u32 50, %s36
        %p560 = scmp.lt.s32.totalorder %s559, 99
        %s561 = scalar_select %p560, %s559, 99
        %s562 = smul.addr %s561, 4
        %s563 = scalar_lea.vmem %s9, %s562
        %p564 = pneg %p266
        %p565 = pneg %p263
        %s566 = smul.u32 50, %s36
        %p567 = scmp.lt.s32.totalorder %s566, 99
        %s568 = scalar_select %p567, %s566, 99
        %s569 = smul.addr %s568, 4
        %s570 = scalar_lea.vmem %s10, %s569
        %p571 = pneg %p292
        %p572 = pneg %p289
        %p573 = pneg %p318
        %p574 = pneg %p315
        %s575 = sand.u32 %s305, 1
        %s576 = scalar_lea.sflag [#allocation3], %s575
        %s577 = sand.u32 %s305, 1
        %s578 = smul.addr %s577, 16
        %s579 = scalar_lea.vmem [#allocation2], %s578
        %p580 = pneg %p344
        %p581 = pneg %p341
        %s582 = sand.u32 %s36, 1
        %s583 = scalar_lea.sflag [#allocation5], %s582
        %s584 = sand.u32 %s331, 1
        %s585 = smul.addr %s584, 400
        %s586 = scalar_lea.vmem [#allocation4], %s585
        %p587 = pneg %p370
        %p588 = pneg %p367
        %s589 = sand.u32 %s36, 1
        %s590 = scalar_lea.sflag [#allocation5], %s589
        %s591 = sand.u32 %s357, 1
        %s592 = smul.addr %s591, 400
        %s593 = scalar_lea.vmem [#allocation6], %s592
        %p594 = pneg %p396
        %p595 = pneg %p393
        %s596 = sand.u32 %s383, 1
        %s597 = scalar_lea.sflag [#allocation8], %s596
        %s598 = sand.u32 %s383, 1
        %s599 = smul.addr %s598, 400
        %s600 = scalar_lea.vmem [#allocation7], %s599
        %p601 = pneg %p422
        %p602 = pneg %p419
        %s603 = smul.u32 50, %s36
        %p604 = scmp.lt.s32.totalorder %s603, 99
        %s605 = scalar_select %p604, %s603, 99
        %s606 = smul.addr %s605, 4
        %s607 = scalar_lea.vmem %s15, %s606
        %s608 = smul.u32 50, %s36
        %p609 = scmp.lt.s32.totalorder %s608, 99
        %s610 = scalar_select %p609, %s608, 99
        %s611 = smul.addr %s610, 8
        %s612 = scalar_lea.vmem %s5, %s611
        %s613 = smul.u32 50, %s36
        %s614 = smul.u32 50, %s36
        %p615 = scmp.lt.s32.totalorder %s614, 99
        %s616 = scalar_select %p615, %s614, 99
        %s617 = smul.addr %s616, 8
        %s618 = scalar_lea.vmem %s6, %s617
        %s619 = smul.u32 50, %s36
        %s620 = smul.u32 50, %s36
        %p621 = scmp.lt.s32.totalorder %s620, 99
        %s622 = scalar_select %p621, %s620, 99
        %s623 = smul.addr %s622, 2
        %s624 = smul.addr %s623, 4
        %s625 = scalar_lea.vmem %s7, %s624
        %s626 = smul.u32 50, %s36
        %s627 = smul.u32 50, %s36
        %p628 = scmp.lt.s32.totalorder %s627, 99
        %s629 = scalar_select %p628, %s627, 99
        %s630 = smul.addr %s629, 2
        %s631 = smul.addr %s630, 4
        %s632 = scalar_lea.vmem %s8, %s631
        %s633 = smul.u32 50, %s36
        %s634 = smul.u32 50, %s36
        %p635 = scmp.lt.s32.totalorder %s634, 99
        %s636 = scalar_select %p635, %s634, 99
        %s637 = smul.addr %s636, 4
        %s638 = scalar_lea.vmem %s9, %s637
        %s639 = smul.u32 50, %s36
        %s640 = smul.u32 50, %s36
        %p641 = scmp.lt.s32.totalorder %s640, 99
        %s642 = scalar_select %p641, %s640, 99
        %s643 = smul.addr %s642, 4
        %s644 = scalar_lea.vmem %s10, %s643
        %s645 = smul.u32 50, %s36
        %s646 = smul.u32 50, %s36
        %s647 = smul.u32 50, %s36
        %s648 = smul.u32 50, %s36
        %s649 = smul.u32 50, %s36
        %p650 = scmp.lt.s32.totalorder %s649, 99
        %s651 = scalar_select %p650, %s649, 99
        %s652 = smul.addr %s651, 4
        %s653 = scalar_lea.vmem %s15, %s652
        %s654 = smul.u32 50, %s36
        %v656 = vld [vmem:[%s0] sm:$0xf]
        %v657 = vld [vmem:[%s1] sm:$0xff]
        %v658 = vld [vmem:[%s1 + $0x8] sm:$0xff]
        %v659 = vld [vmem:[%s1 + $0x10] sm:$0xff]
        %v660 = vld [vmem:[%s1 + $0x18] sm:$0xff]
        %v661 = vld [vmem:[%s1 + $0x20] sm:$0xff]
        %v662 = vld [vmem:[%s1 + $0x28] sm:$0xff]
        %v663 = vld [vmem:[%s1 + $0x30] sm:$0xff]
        %v664 = vld [vmem:[%s1 + $0x38] sm:$0xff]
        %v665 = vld [vmem:[%s1 + $0x40] sm:$0xff]
        %v666 = vld [vmem:[%s1 + $0x48] sm:$0xff]
        %v667 = vld [vmem:[%s1 + $0x50] sm:$0xff]
        %v668 = vld [vmem:[%s1 + $0x58] sm:$0xff]
        %v669 = vld [vmem:[%s1 + $0x60] sm:$0xff]
        %v670 = vld [vmem:[%s1 + $0x68] sm:$0xff]
        %v671 = vld [vmem:[%s1 + $0x70] sm:$0xff]
        %v672 = vld [vmem:[%s1 + $0x78] sm:$0xff]
        %v673 = vld [vmem:[%s1 + $0x80] sm:$0xff]
        %v674 = vld [vmem:[%s1 + $0x88] sm:$0xff]
        %v675 = vld [vmem:[%s1 + $0x90] sm:$0xff]
        %v676 = vld [vmem:[%s1 + $0x98] sm:$0xff]
        %v677 = vld [vmem:[%s1 + $0xa0] sm:$0xff]
        %v678 = vld [vmem:[%s1 + $0xa8] sm:$0xff]
        %v679 = vld [vmem:[%s1 + $0xb0] sm:$0xff]
        %v680 = vld [vmem:[%s1 + $0xb8] sm:$0xff]
        %v681 = vld [vmem:[%s1 + $0xc0] sm:$0xff]
        %v682 = vld [vmem:[%s1 + $0xc8] sm:$0xff]
        %v683 = vld [vmem:[%s1 + $0xd0] sm:$0xff]
        %v684 = vld [vmem:[%s1 + $0xd8] sm:$0xff]
        %v685 = vld [vmem:[%s1 + $0xe0] sm:$0xff]
        %v686 = vld [vmem:[%s1 + $0xe8] sm:$0xff]
        %v687 = vld [vmem:[%s1 + $0xf0] sm:$0xff]
        %v688 = vld [vmem:[%s1 + $0xf8] sm:$0xff]
        %v689 = vld [vmem:[%s2] sm:$0xf]
        %v691 = vlaneseq
        %v692 = vshrl.u32 %v691, 7
        %v693 = vsub.s32 0, %v692
        %v694 = vrot.slane %v689, %v693
        %v695 = vlaneseq
        %v696 = vshrl.u32 %v695, 7
        %v697 = vsub.s32 1, %v696
        %v698 = vrot.slane %v689, %v697
        %v699 = vlaneseq
        %v700 = vshrl.u32 %v699, 7
        %v701 = vsub.s32 2, %v700
        %v702 = vrot.slane %v689, %v701
        %v703 = vlaneseq
        %v704 = vshrl.u32 %v703, 7
        %v705 = vsub.s32 3, %v704
        %v706 = vrot.slane %v689, %v705
        %v743 = vunpack.c.l.b16 %v657
        %v744 = vunpack.c.h.b16 %v657
        %v745 = vunpack.c.l.b16 %v658
        %v746 = vunpack.c.h.b16 %v658
        %v747 = vunpack.c.l.b16 %v659
        %v748 = vunpack.c.h.b16 %v659
        %v749 = vunpack.c.l.b16 %v660
        %v750 = vunpack.c.h.b16 %v660
        %v751 = vunpack.c.l.b16 %v661
        %v752 = vunpack.c.h.b16 %v661
        %v753 = vunpack.c.l.b16 %v662
        %v754 = vunpack.c.h.b16 %v662
        %v755 = vunpack.c.l.b16 %v663
        %v756 = vunpack.c.h.b16 %v663
        %v757 = vunpack.c.l.b16 %v664
        %v758 = vunpack.c.h.b16 %v664
        %v759 = vunpack.c.l.b16 %v665
        %v760 = vunpack.c.h.b16 %v665
        %v761 = vunpack.c.l.b16 %v666
        %v762 = vunpack.c.h.b16 %v666
        %v763 = vunpack.c.l.b16 %v667
        %v764 = vunpack.c.h.b16 %v667
        %v765 = vunpack.c.l.b16 %v668
        %v766 = vunpack.c.h.b16 %v668
        %v767 = vunpack.c.l.b16 %v669
        %v768 = vunpack.c.h.b16 %v669
        %v769 = vunpack.c.l.b16 %v670
        %v770 = vunpack.c.h.b16 %v670
        %v771 = vunpack.c.l.b16 %v671
        %v772 = vunpack.c.h.b16 %v671
        %v773 = vunpack.c.l.b16 %v672
        %v774 = vunpack.c.h.b16 %v672
        %v775 = vunpack.c.l.b16 %v673
        %v776 = vunpack.c.h.b16 %v673
        %v777 = vunpack.c.l.b16 %v674
        %v778 = vunpack.c.h.b16 %v674
        %v779 = vunpack.c.l.b16 %v675
        %v780 = vunpack.c.h.b16 %v675
        %v781 = vunpack.c.l.b16 %v676
        %v782 = vunpack.c.h.b16 %v676
        %v783 = vunpack.c.l.b16 %v677
        %v784 = vunpack.c.h.b16 %v677
        %v785 = vunpack.c.l.b16 %v678
        %v786 = vunpack.c.h.b16 %v678
        %v787 = vunpack.c.l.b16 %v679
        %v788 = vunpack.c.h.b16 %v679
        %v789 = vunpack.c.l.b16 %v680
        %v790 = vunpack.c.h.b16 %v680
        %v791 = vunpack.c.l.b16 %v681
        %v792 = vunpack.c.h.b16 %v681
        %v793 = vunpack.c.l.b16 %v682
        %v794 = vunpack.c.h.b16 %v682
        %v795 = vunpack.c.l.b16 %v683
        %v796 = vunpack.c.h.b16 %v683
        %v797 = vunpack.c.l.b16 %v684
        %v798 = vunpack.c.h.b16 %v684
        %v799 = vunpack.c.l.b16 %v685
        %v800 = vunpack.c.h.b16 %v685
        %v801 = vunpack.c.l.b16 %v686
        %v802 = vunpack.c.h.b16 %v686
        %v803 = vunpack.c.l.b16 %v687
        %v804 = vunpack.c.h.b16 %v687
        %v805 = vunpack.c.l.b16 %v688
        %v806 = vunpack.c.h.b16 %v688
        %v807 = vpack.c.b16 %v747, %v743
        %v808 = vpack.c.b16 %v748, %v744
        %v809 = vpack.c.b16 %v749, %v745
        %v810 = vpack.c.b16 %v750, %v746
        %v811 = vpack.c.b16 %v755, %v751
        %v812 = vpack.c.b16 %v756, %v752
        %v813 = vpack.c.b16 %v757, %v753
        %v814 = vpack.c.b16 %v758, %v754
        %v815 = vpack.c.b16 %v763, %v759
        %v816 = vpack.c.b16 %v764, %v760
        %v817 = vpack.c.b16 %v765, %v761
        %v818 = vpack.c.b16 %v766, %v762
        %v819 = vpack.c.b16 %v771, %v767
        %v820 = vpack.c.b16 %v772, %v768
        %v821 = vpack.c.b16 %v773, %v769
        %v822 = vpack.c.b16 %v774, %v770
        %v823 = vpack.c.b16 %v779, %v775
        %v824 = vpack.c.b16 %v780, %v776
        %v825 = vpack.c.b16 %v781, %v777
        %v826 = vpack.c.b16 %v782, %v778
        %v827 = vpack.c.b16 %v787, %v783
        %v828 = vpack.c.b16 %v788, %v784
        %v829 = vpack.c.b16 %v789, %v785
        %v830 = vpack.c.b16 %v790, %v786
        %v831 = vpack.c.b16 %v795, %v791
        %v832 = vpack.c.b16 %v796, %v792
        %v833 = vpack.c.b16 %v797, %v793
        %v834 = vpack.c.b16 %v798, %v794
        %v835 = vpack.c.b16 %v803, %v799
        %v836 = vpack.c.b16 %v804, %v800
        %v837 = vpack.c.b16 %v805, %v801
        %v838 = vpack.c.b16 %v806, %v802
        %871 = vmatprep.subr.bf16.mxu0 %v836
        %872 = vmatpush1.bf16.msra.mxu0 %v835
        %873 = vmatprep.subr.bf16.mxu0 %v832
        %874 = vmatpush1.bf16.msra.mxu0 %v831
        %875 = vmatprep.subr.bf16.mxu0 %v828
        %876 = vmatpush1.bf16.msra.mxu0 %v827
        %877 = vmatprep.subr.bf16.mxu0 %v824
        %878 = vmatpush1.bf16.msra.mxu0 %v823
        %879 = vmatprep.subr.bf16.mxu0 %v820
        %880 = vmatpush1.bf16.msra.mxu0 %v819
        %881 = vmatprep.subr.bf16.mxu0 %v816
        %882 = vmatpush1.bf16.msra.mxu0 %v815
        %883 = vmatprep.subr.bf16.mxu0 %v812
        %884 = vmatpush1.bf16.msra.mxu0 %v811
        %885 = vmatprep.subr.bf16.mxu0 %v808
        %886 = vmatpush1.bf16.msra.mxu0 %v807
        %887 = vmatprep.subr.bf16.mxu0 0
        %888 = vmatpush2.bf16.msra.mxu0 0
        %889 = vmatprep.subr.bf16.mxu0 0
        %890 = vmatpush2.bf16.msra.mxu0 0
        %891 = vmatprep.subr.bf16.mxu0 0
        %892 = vmatpush2.bf16.msra.mxu0 0
        %893 = vmatprep.subr.bf16.mxu0 0
        %894 = vmatpush2.bf16.msra.mxu0 0
        %895 = vmatprep.subr.bf16.mxu0 0
        %896 = vmatpush2.bf16.msra.mxu0 0
        %897 = vmatprep.subr.bf16.mxu0 0
        %898 = vmatpush2.bf16.msra.mxu0 0
        %899 = vmatprep.subr.bf16.mxu0 0
        %900 = vmatpush2.bf16.msra.mxu0 0
        %901 = vmatprep.subr.bf16.mxu0 0
        %902 = vmatpush2.bf16.msra.mxu0 0
        %903 = vmatprep.mubr.bf16.mxu0 0
        %904 = vmatmul.mubr.bf16.gmra.mxu0 %v656
        %v905 = vpop.f32.mrf.mxu0
        %v906 = vadd.f32 %v694, %v905
        %v907 = vpop.f32.mrf.mxu0
        %v908 = vadd.f32 %v698, %v907
        %v909 = vpop.f32.mrf.mxu0
        %v910 = vpop.f32.mrf.mxu0
        %911 = vdwg.mxu0
        %912 = vmatprep.subr.bf16.mxu0 %v838
        %913 = vmatpush1.bf16.msra.mxu0 %v837
        %914 = vmatprep.subr.bf16.mxu0 %v834
        %915 = vmatpush1.bf16.msra.mxu0 %v833
        %916 = vmatprep.subr.bf16.mxu0 %v830
        %917 = vmatpush1.bf16.msra.mxu0 %v829
        %918 = vmatprep.subr.bf16.mxu0 %v826
        %919 = vmatpush1.bf16.msra.mxu0 %v825
        %920 = vmatprep.subr.bf16.mxu0 %v822
        %921 = vmatpush1.bf16.msra.mxu0 %v821
        %922 = vmatprep.subr.bf16.mxu0 %v818
        %923 = vmatpush1.bf16.msra.mxu0 %v817
        %924 = vmatprep.subr.bf16.mxu0 %v814
        %925 = vmatpush1.bf16.msra.mxu0 %v813
        %926 = vmatprep.subr.bf16.mxu0 %v810
        %927 = vmatpush1.bf16.msra.mxu0 %v809
        %928 = vmatprep.subr.bf16.mxu0 0
        %929 = vmatpush2.bf16.msra.mxu0 0
        %930 = vmatprep.subr.bf16.mxu0 0
        %931 = vmatpush2.bf16.msra.mxu0 0
        %932 = vmatprep.subr.bf16.mxu0 0
        %933 = vmatpush2.bf16.msra.mxu0 0
        %934 = vmatprep.subr.bf16.mxu0 0
        %935 = vmatpush2.bf16.msra.mxu0 0
        %936 = vmatprep.subr.bf16.mxu0 0
        %937 = vmatpush2.bf16.msra.mxu0 0
        %938 = vmatprep.subr.bf16.mxu0 0
        %939 = vmatpush2.bf16.msra.mxu0 0
        %940 = vmatprep.subr.bf16.mxu0 0
        %941 = vmatpush2.bf16.msra.mxu0 0
        %942 = vmatprep.subr.bf16.mxu0 0
        %943 = vmatpush2.bf16.msra.mxu0 0
        %944 = vmatprep.mubr.bf16.mxu0 0
        %945 = vmatmul.mubr.bf16.gmra.mxu0 %v656
        %v946 = vpop.f32.mrf.mxu0
        %v947 = vadd.f32 %v702, %v946
        %v948 = vpop.f32.mrf.mxu0
        %v949 = vadd.f32 %v706, %v948
        %v950 = vpop.f32.mrf.mxu0
        %v951 = vpop.f32.mrf.mxu0
        %952 = vdwg.mxu0
        %v953 = vmax.f32 %v906, 0.0
        %v954 = vmax.f32 %v908, 0.0
        %v955 = vmax.f32 %v947, 0.0
        %v956 = vmax.f32 %v949, 0.0
        %v957 = vld [vmem:[%s3] sm:$0xff]
        %v958 = vld [vmem:[%s3 + $0x8] sm:$0xff]
        %v959 = vld [vmem:[%s3 + $0x10] sm:$0xff]
        %v960 = vld [vmem:[%s3 + $0x18] sm:$0xff]
        %v961 = vld [vmem:[%s3 + $0x20] sm:$0xff]
        %v962 = vld [vmem:[%s3 + $0x28] sm:$0xff]
        %v963 = vld [vmem:[%s3 + $0x30] sm:$0xff]
        %v964 = vld [vmem:[%s3 + $0x38] sm:$0xff]
        %v965 = vld [vmem:[%s3 + $0x40] sm:$0xff]
        %v966 = vld [vmem:[%s3 + $0x48] sm:$0xff]
        %v967 = vld [vmem:[%s3 + $0x50] sm:$0xff]
        %v968 = vld [vmem:[%s3 + $0x58] sm:$0xff]
        %v969 = vld [vmem:[%s3 + $0x60] sm:$0xff]
        %v970 = vld [vmem:[%s3 + $0x68] sm:$0xff]
        %v971 = vld [vmem:[%s3 + $0x70] sm:$0xff]
        %v972 = vld [vmem:[%s3 + $0x78] sm:$0xff]
        %v973 = vld [vmem:[%s3 + $0x80] sm:$0xff]
        %v974 = vld [vmem:[%s3 + $0x88] sm:$0xff]
        %v975 = vld [vmem:[%s3 + $0x90] sm:$0xff]
        %v976 = vld [vmem:[%s3 + $0x98] sm:$0xff]
        %v977 = vld [vmem:[%s3 + $0xa0] sm:$0xff]
        %v978 = vld [vmem:[%s3 + $0xa8] sm:$0xff]
        %v979 = vld [vmem:[%s3 + $0xb0] sm:$0xff]
        %v980 = vld [vmem:[%s3 + $0xb8] sm:$0xff]
        %v981 = vld [vmem:[%s3 + $0xc0] sm:$0xff]
        %v982 = vld [vmem:[%s3 + $0xc8] sm:$0xff]
        %v983 = vld [vmem:[%s3 + $0xd0] sm:$0xff]
        %v984 = vld [vmem:[%s3 + $0xd8] sm:$0xff]
        %v985 = vld [vmem:[%s3 + $0xe0] sm:$0xff]
        %v986 = vld [vmem:[%s3 + $0xe8] sm:$0xff]
        %v987 = vld [vmem:[%s3 + $0xf0] sm:$0xff]
        %v988 = vld [vmem:[%s3 + $0xf8] sm:$0xff]
        %v989 = vld [vmem:[%s3 + $0x100] sm:$0xff]
        %v990 = vld [vmem:[%s3 + $0x108] sm:$0xff]
        %v991 = vld [vmem:[%s3 + $0x110] sm:$0xff]
        %v992 = vld [vmem:[%s3 + $0x118] sm:$0xff]
        %v993 = vld [vmem:[%s3 + $0x120] sm:$0xff]
        %v994 = vld [vmem:[%s3 + $0x128] sm:$0xff]
        %v995 = vld [vmem:[%s3 + $0x130] sm:$0xff]
        %v996 = vld [vmem:[%s3 + $0x138] sm:$0xff]
        %v997 = vld [vmem:[%s3 + $0x140] sm:$0xff]
        %v998 = vld [vmem:[%s3 + $0x148] sm:$0xff]
        %v999 = vld [vmem:[%s3 + $0x150] sm:$0xff]
        %v1000 = vld [vmem:[%s3 + $0x158] sm:$0xff]
        %v1001 = vld [vmem:[%s3 + $0x160] sm:$0xff]
        %v1002 = vld [vmem:[%s3 + $0x168] sm:$0xff]
        %v1003 = vld [vmem:[%s3 + $0x170] sm:$0xff]
        %v1004 = vld [vmem:[%s3 + $0x178] sm:$0xff]
        %v1005 = vld [vmem:[%s3 + $0x180] sm:$0xff]
        %v1006 = vld [vmem:[%s3 + $0x188] sm:$0xff]
        %v1007 = vld [vmem:[%s3 + $0x190] sm:$0xff]
        %v1008 = vld [vmem:[%s3 + $0x198] sm:$0xff]
        %v1009 = vld [vmem:[%s3 + $0x1a0] sm:$0xff]
        %v1010 = vld [vmem:[%s3 + $0x1a8] sm:$0xff]
        %v1011 = vld [vmem:[%s3 + $0x1b0] sm:$0xff]
        %v1012 = vld [vmem:[%s3 + $0x1b8] sm:$0xff]
        %v1013 = vld [vmem:[%s3 + $0x1c0] sm:$0xff]
        %v1014 = vld [vmem:[%s3 + $0x1c8] sm:$0xff]
        %v1015 = vld [vmem:[%s3 + $0x1d0] sm:$0xff]
        %v1016 = vld [vmem:[%s3 + $0x1d8] sm:$0xff]
        %v1017 = vld [vmem:[%s3 + $0x1e0] sm:$0xff]
        %v1018 = vld [vmem:[%s3 + $0x1e8] sm:$0xff]
        %v1019 = vld [vmem:[%s3 + $0x1f0] sm:$0xff]
        %v1020 = vld [vmem:[%s3 + $0x1f8] sm:$0xff]
        %v1021 = vunpack.c.l.bf16 %v957
        %v1022 = vunpack.c.h.bf16 %v957
        %v1023 = vunpack.c.l.bf16 %v958
        %v1024 = vunpack.c.h.bf16 %v958
        %v1025 = vunpack.c.l.bf16 %v959
        %v1026 = vunpack.c.h.bf16 %v959
        %v1027 = vunpack.c.l.bf16 %v960
        %v1028 = vunpack.c.h.bf16 %v960
        %v1029 = vunpack.c.l.bf16 %v961
        %v1030 = vunpack.c.h.bf16 %v961
        %v1031 = vunpack.c.l.bf16 %v962
        %v1032 = vunpack.c.h.bf16 %v962
        %v1033 = vunpack.c.l.bf16 %v963
        %v1034 = vunpack.c.h.bf16 %v963
        %v1035 = vunpack.c.l.bf16 %v964
        %v1036 = vunpack.c.h.bf16 %v964
        %v1037 = vunpack.c.l.bf16 %v965
        %v1038 = vunpack.c.h.bf16 %v965
        %v1039 = vunpack.c.l.bf16 %v966
        %v1040 = vunpack.c.h.bf16 %v966
        %v1041 = vunpack.c.l.bf16 %v967
        %v1042 = vunpack.c.h.bf16 %v967
        %v1043 = vunpack.c.l.bf16 %v968
        %v1044 = vunpack.c.h.bf16 %v968
        %v1045 = vunpack.c.l.bf16 %v969
        %v1046 = vunpack.c.h.bf16 %v969
        %v1047 = vunpack.c.l.bf16 %v970
        %v1048 = vunpack.c.h.bf16 %v970
        %v1049 = vunpack.c.l.bf16 %v971
        %v1050 = vunpack.c.h.bf16 %v971
        %v1051 = vunpack.c.l.bf16 %v972
        %v1052 = vunpack.c.h.bf16 %v972
        %v1053 = vunpack.c.l.bf16 %v973
        %v1054 = vunpack.c.h.bf16 %v973
        %v1055 = vunpack.c.l.bf16 %v974
        %v1056 = vunpack.c.h.bf16 %v974
        %v1057 = vunpack.c.l.bf16 %v975
        %v1058 = vunpack.c.h.bf16 %v975
        %v1059 = vunpack.c.l.bf16 %v976
        %v1060 = vunpack.c.h.bf16 %v976
        %v1061 = vunpack.c.l.bf16 %v977
        %v1062 = vunpack.c.h.bf16 %v977
        %v1063 = vunpack.c.l.bf16 %v978
        %v1064 = vunpack.c.h.bf16 %v978
        %v1065 = vunpack.c.l.bf16 %v979
        %v1066 = vunpack.c.h.bf16 %v979
        %v1067 = vunpack.c.l.bf16 %v980
        %v1068 = vunpack.c.h.bf16 %v980
        %v1069 = vunpack.c.l.bf16 %v981
        %v1070 = vunpack.c.h.bf16 %v981
        %v1071 = vunpack.c.l.bf16 %v982
        %v1072 = vunpack.c.h.bf16 %v982
        %v1073 = vunpack.c.l.bf16 %v983
        %v1074 = vunpack.c.h.bf16 %v983
        %v1075 = vunpack.c.l.bf16 %v984
        %v1076 = vunpack.c.h.bf16 %v984
        %v1077 = vunpack.c.l.bf16 %v985
        %v1078 = vunpack.c.h.bf16 %v985
        %v1079 = vunpack.c.l.bf16 %v986
        %v1080 = vunpack.c.h.bf16 %v986
        %v1081 = vunpack.c.l.bf16 %v987
        %v1082 = vunpack.c.h.bf16 %v987
        %v1083 = vunpack.c.l.bf16 %v988
        %v1084 = vunpack.c.h.bf16 %v988
        %v1085 = vunpack.c.l.bf16 %v989
        %v1086 = vunpack.c.h.bf16 %v989
        %v1087 = vunpack.c.l.bf16 %v990
        %v1088 = vunpack.c.h.bf16 %v990
        %v1089 = vunpack.c.l.bf16 %v991
        %v1090 = vunpack.c.h.bf16 %v991
        %v1091 = vunpack.c.l.bf16 %v992
        %v1092 = vunpack.c.h.bf16 %v992
        %v1093 = vunpack.c.l.bf16 %v993
        %v1094 = vunpack.c.h.bf16 %v993
        %v1095 = vunpack.c.l.bf16 %v994
        %v1096 = vunpack.c.h.bf16 %v994
        %v1097 = vunpack.c.l.bf16 %v995
        %v1098 = vunpack.c.h.bf16 %v995
        %v1099 = vunpack.c.l.bf16 %v996
        %v1100 = vunpack.c.h.bf16 %v996
        %v1101 = vunpack.c.l.bf16 %v997
        %v1102 = vunpack.c.h.bf16 %v997
        %v1103 = vunpack.c.l.bf16 %v998
        %v1104 = vunpack.c.h.bf16 %v998
        %v1105 = vunpack.c.l.bf16 %v999
        %v1106 = vunpack.c.h.bf16 %v999
        %v1107 = vunpack.c.l.bf16 %v1000
        %v1108 = vunpack.c.h.bf16 %v1000
        %v1109 = vunpack.c.l.bf16 %v1001
        %v1110 = vunpack.c.h.bf16 %v1001
        %v1111 = vunpack.c.l.bf16 %v1002
        %v1112 = vunpack.c.h.bf16 %v1002
        %v1113 = vunpack.c.l.bf16 %v1003
        %v1114 = vunpack.c.h.bf16 %v1003
        %v1115 = vunpack.c.l.bf16 %v1004
        %v1116 = vunpack.c.h.bf16 %v1004
        %v1117 = vunpack.c.l.bf16 %v1005
        %v1118 = vunpack.c.h.bf16 %v1005
        %v1119 = vunpack.c.l.bf16 %v1006
        %v1120 = vunpack.c.h.bf16 %v1006
        %v1121 = vunpack.c.l.bf16 %v1007
        %v1122 = vunpack.c.h.bf16 %v1007
        %v1123 = vunpack.c.l.bf16 %v1008
        %v1124 = vunpack.c.h.bf16 %v1008
        %v1125 = vunpack.c.l.bf16 %v1009
        %v1126 = vunpack.c.h.bf16 %v1009
        %v1127 = vunpack.c.l.bf16 %v1010
        %v1128 = vunpack.c.h.bf16 %v1010
        %v1129 = vunpack.c.l.bf16 %v1011
        %v1130 = vunpack.c.h.bf16 %v1011
        %v1131 = vunpack.c.l.bf16 %v1012
        %v1132 = vunpack.c.h.bf16 %v1012
        %v1133 = vunpack.c.l.bf16 %v1013
        %v1134 = vunpack.c.h.bf16 %v1013
        %v1135 = vunpack.c.l.bf16 %v1014
        %v1136 = vunpack.c.h.bf16 %v1014
        %v1137 = vunpack.c.l.bf16 %v1015
        %v1138 = vunpack.c.h.bf16 %v1015
        %v1139 = vunpack.c.l.bf16 %v1016
        %v1140 = vunpack.c.h.bf16 %v1016
        %v1141 = vunpack.c.l.bf16 %v1017
        %v1142 = vunpack.c.h.bf16 %v1017
        %v1143 = vunpack.c.l.bf16 %v1018
        %v1144 = vunpack.c.h.bf16 %v1018
        %v1145 = vunpack.c.l.bf16 %v1019
        %v1146 = vunpack.c.h.bf16 %v1019
        %v1147 = vunpack.c.l.bf16 %v1020
        %v1148 = vunpack.c.h.bf16 %v1020
        %v1149 = vld [vmem:[%s4] sm:$0x3]
        %v1151 = vlaneseq
        %v1152 = vshrl.u32 %v1151, 7
        %v1153 = vsub.s32 0, %v1152
        %v1154 = vrot.slane %v1149, %v1153
        %v1155 = vlaneseq
        %v1156 = vshrl.u32 %v1155, 7
        %v1157 = vsub.s32 1, %v1156
        %v1158 = vrot.slane %v1149, %v1157
        %1161 = vmatprep.subr.mxu0 %v1052
        %1162 = vmatpush1.msra.mxu0 %v1051
        %1163 = vmatprep.subr.mxu0 %v1050
        %1164 = vmatpush1.msra.mxu0 %v1049
        %1165 = vmatprep.subr.mxu0 %v1048
        %1166 = vmatpush1.msra.mxu0 %v1047
        %1167 = vmatprep.subr.mxu0 %v1046
        %1168 = vmatpush1.msra.mxu0 %v1045
        %1169 = vmatprep.subr.mxu0 %v1044
        %1170 = vmatpush1.msra.mxu0 %v1043
        %1171 = vmatprep.subr.mxu0 %v1042
        %1172 = vmatpush1.msra.mxu0 %v1041
        %1173 = vmatprep.subr.mxu0 %v1040
        %1174 = vmatpush1.msra.mxu0 %v1039
        %1175 = vmatprep.subr.mxu0 %v1038
        %1176 = vmatpush1.msra.mxu0 %v1037
        %1177 = vmatprep.subr.mxu0 %v1036
        %1178 = vmatpush1.msra.mxu0 %v1035
        %1179 = vmatprep.subr.mxu0 %v1034
        %1180 = vmatpush1.msra.mxu0 %v1033
        %1181 = vmatprep.subr.mxu0 %v1032
        %1182 = vmatpush1.msra.mxu0 %v1031
        %1183 = vmatprep.subr.mxu0 %v1030
        %1184 = vmatpush1.msra.mxu0 %v1029
        %1185 = vmatprep.subr.mxu0 %v1028
        %1186 = vmatpush1.msra.mxu0 %v1027
        %1187 = vmatprep.subr.mxu0 %v1026
        %1188 = vmatpush1.msra.mxu0 %v1025
        %1189 = vmatprep.subr.mxu0 %v1024
        %1190 = vmatpush1.msra.mxu0 %v1023
        %1191 = vmatprep.subr.mxu0 %v1022
        %1192 = vmatpush1.msra.mxu0 %v1021
        %1193 = vmatprep.subr.mxu0 %v1084
        %1194 = vmatpush2.msra.mxu0 %v1083
        %1195 = vmatprep.subr.mxu0 %v1082
        %1196 = vmatpush2.msra.mxu0 %v1081
        %1197 = vmatprep.subr.mxu0 %v1080
        %1198 = vmatpush2.msra.mxu0 %v1079
        %1199 = vmatprep.subr.mxu0 %v1078
        %1200 = vmatpush2.msra.mxu0 %v1077
        %1201 = vmatprep.subr.mxu0 %v1076
        %1202 = vmatpush2.msra.mxu0 %v1075
        %1203 = vmatprep.subr.mxu0 %v1074
        %1204 = vmatpush2.msra.mxu0 %v1073
        %1205 = vmatprep.subr.mxu0 %v1072
        %1206 = vmatpush2.msra.mxu0 %v1071
        %1207 = vmatprep.subr.mxu0 %v1070
        %1208 = vmatpush2.msra.mxu0 %v1069
        %1209 = vmatprep.subr.mxu0 %v1068
        %1210 = vmatpush2.msra.mxu0 %v1067
        %1211 = vmatprep.subr.mxu0 %v1066
        %1212 = vmatpush2.msra.mxu0 %v1065
        %1213 = vmatprep.subr.mxu0 %v1064
        %1214 = vmatpush2.msra.mxu0 %v1063
        %1215 = vmatprep.subr.mxu0 %v1062
        %1216 = vmatpush2.msra.mxu0 %v1061
        %1217 = vmatprep.subr.mxu0 %v1060
        %1218 = vmatpush2.msra.mxu0 %v1059
        %1219 = vmatprep.subr.mxu0 %v1058
        %1220 = vmatpush2.msra.mxu0 %v1057
        %1221 = vmatprep.subr.mxu0 %v1056
        %1222 = vmatpush2.msra.mxu0 %v1055
        %1223 = vmatprep.subr.mxu0 %v1054
        %1224 = vmatpush2.msra.mxu0 %v1053
        %1225 = vmatprep.mubr.f32.mxu0 %v954
        %1226 = vmatmul.mubr.f32.gmra.mxu0 %v953
        %v1227 = vpop.f32.mrf.mxu0
        %v1228 = vadd.f32 %v1154, %v1227
        %v1229 = vpop.f32.mrf.mxu0
        %v1230 = vadd.f32 %v1158, %v1229
        %1231 = vdwg.mxu0
        %1232 = vmatprep.subr.mxu0 %v1116
        %1233 = vmatpush1.msra.mxu0 %v1115
        %1234 = vmatprep.subr.mxu0 %v1114
        %1235 = vmatpush1.msra.mxu0 %v1113
        %1236 = vmatprep.subr.mxu0 %v1112
        %1237 = vmatpush1.msra.mxu0 %v1111
        %1238 = vmatprep.subr.mxu0 %v1110
        %1239 = vmatpush1.msra.mxu0 %v1109
        %1240 = vmatprep.subr.mxu0 %v1108
        %1241 = vmatpush1.msra.mxu0 %v1107
        %1242 = vmatprep.subr.mxu0 %v1106
        %1243 = vmatpush1.msra.mxu0 %v1105
        %1244 = vmatprep.subr.mxu0 %v1104
        %1245 = vmatpush1.msra.mxu0 %v1103
        %1246 = vmatprep.subr.mxu0 %v1102
        %1247 = vmatpush1.msra.mxu0 %v1101
        %1248 = vmatprep.subr.mxu0 %v1100
        %1249 = vmatpush1.msra.mxu0 %v1099
        %1250 = vmatprep.subr.mxu0 %v1098
        %1251 = vmatpush1.msra.mxu0 %v1097
        %1252 = vmatprep.subr.mxu0 %v1096
        %1253 = vmatpush1.msra.mxu0 %v1095
        %1254 = vmatprep.subr.mxu0 %v1094
        %1255 = vmatpush1.msra.mxu0 %v1093
        %1256 = vmatprep.subr.mxu0 %v1092
        %1257 = vmatpush1.msra.mxu0 %v1091
        %1258 = vmatprep.subr.mxu0 %v1090
        %1259 = vmatpush1.msra.mxu0 %v1089
        %1260 = vmatprep.subr.mxu0 %v1088
        %1261 = vmatpush1.msra.mxu0 %v1087
        %1262 = vmatprep.subr.mxu0 %v1086
        %1263 = vmatpush1.msra.mxu0 %v1085
        %1264 = vmatprep.subr.mxu0 %v1148
        %1265 = vmatpush2.msra.mxu0 %v1147
        %1266 = vmatprep.subr.mxu0 %v1146
        %1267 = vmatpush2.msra.mxu0 %v1145
        %1268 = vmatprep.subr.mxu0 %v1144
        %1269 = vmatpush2.msra.mxu0 %v1143
        %1270 = vmatprep.subr.mxu0 %v1142
        %1271 = vmatpush2.msra.mxu0 %v1141
        %1272 = vmatprep.subr.mxu0 %v1140
        %1273 = vmatpush2.msra.mxu0 %v1139
        %1274 = vmatprep.subr.mxu0 %v1138
        %1275 = vmatpush2.msra.mxu0 %v1137
        %1276 = vmatprep.subr.mxu0 %v1136
        %1277 = vmatpush2.msra.mxu0 %v1135
        %1278 = vmatprep.subr.mxu0 %v1134
        %1279 = vmatpush2.msra.mxu0 %v1133
        %1280 = vmatprep.subr.mxu0 %v1132
        %1281 = vmatpush2.msra.mxu0 %v1131
        %1282 = vmatprep.subr.mxu0 %v1130
        %1283 = vmatpush2.msra.mxu0 %v1129
        %1284 = vmatprep.subr.mxu0 %v1128
        %1285 = vmatpush2.msra.mxu0 %v1127
        %1286 = vmatprep.subr.mxu0 %v1126
        %1287 = vmatpush2.msra.mxu0 %v1125
        %1288 = vmatprep.subr.mxu0 %v1124
        %1289 = vmatpush2.msra.mxu0 %v1123
        %1290 = vmatprep.subr.mxu0 %v1122
        %1291 = vmatpush2.msra.mxu0 %v1121
        %1292 = vmatprep.subr.mxu0 %v1120
        %1293 = vmatpush2.msra.mxu0 %v1119
        %1294 = vmatprep.subr.mxu0 %v1118
        %1295 = vmatpush2.msra.mxu0 %v1117
        %1296 = vmatprep.mubr.f32.mxu0 %v956
        %1297 = vmatmul.mubr.f32.gmra.mxu0 %v955
        %v1298 = vpop.f32.mrf.mxu0
        %v1299 = vadd.f32 %v1228, %v1298
        %v1300 = vpop.f32.mrf.mxu0
        %v1301 = vadd.f32 %v1230, %v1300
        %1302 = vdwg.mxu0
        %1303 = vst [vmem:[%s579] sm:$0xff] %v1299
        %1304 = vst [vmem:[%s579 + $0x8] sm:$0xff] %v1301
        %v1305 = vld [vmem:[%s618] sm:$0xff]
        %v1306 = vld [vmem:[%s618 + $0x8] sm:$0xff]
        %v1307 = vld [vmem:[%s618 + $0x10] sm:$0xff]
        %v1308 = vld [vmem:[%s618 + $0x18] sm:$0xff]
        %v1309 = vld [vmem:[%s618 + $0x20] sm:$0xff]
        %v1310 = vld [vmem:[%s618 + $0x28] sm:$0xff]
        %v1311 = vld [vmem:[%s618 + $0x30] sm:$0xff]
        %v1312 = vld [vmem:[%s618 + $0x38] sm:$0xff]
        %v1313 = vld [vmem:[%s618 + $0x40] sm:$0xff]
        %v1314 = vld [vmem:[%s618 + $0x48] sm:$0xff]
        %v1315 = vld [vmem:[%s618 + $0x50] sm:$0xff]
        %v1316 = vld [vmem:[%s618 + $0x58] sm:$0xff]
        %v1317 = vld [vmem:[%s618 + $0x60] sm:$0xff]
        %v1318 = vld [vmem:[%s618 + $0x68] sm:$0xff]
        %v1319 = vld [vmem:[%s618 + $0x70] sm:$0xff]
        %v1320 = vld [vmem:[%s618 + $0x78] sm:$0xff]
        %v1321 = vld [vmem:[%s618 + $0x80] sm:$0xff]
        %v1322 = vld [vmem:[%s618 + $0x88] sm:$0xff]
        %v1323 = vld [vmem:[%s618 + $0x90] sm:$0xff]
        %v1324 = vld [vmem:[%s618 + $0x98] sm:$0xff]
        %v1325 = vld [vmem:[%s618 + $0xa0] sm:$0xff]
        %v1326 = vld [vmem:[%s618 + $0xa8] sm:$0xff]
        %v1327 = vld [vmem:[%s618 + $0xb0] sm:$0xff]
        %v1328 = vld [vmem:[%s618 + $0xb8] sm:$0xff]
        %v1329 = vld [vmem:[%s618 + $0xc0] sm:$0xff]
        %v1330 = vld [vmem:[%s618 + $0xc8] sm:$0xff]
        %v1331 = vld [vmem:[%s618 + $0xd0] sm:$0xff]
        %v1332 = vld [vmem:[%s618 + $0xd8] sm:$0xff]
        %v1333 = vld [vmem:[%s618 + $0xe0] sm:$0xff]
        %v1334 = vld [vmem:[%s618 + $0xe8] sm:$0xff]
        %v1335 = vld [vmem:[%s618 + $0xf0] sm:$0xff]
        %v1336 = vld [vmem:[%s618 + $0xf8] sm:$0xff]
        %v1337 = vld [vmem:[%s618 + $0x100] sm:$0xff]
        %v1338 = vld [vmem:[%s618 + $0x108] sm:$0xff]
        %v1339 = vld [vmem:[%s618 + $0x110] sm:$0xff]
        %v1340 = vld [vmem:[%s618 + $0x118] sm:$0xff]
        %v1341 = vld [vmem:[%s618 + $0x120] sm:$0xff]
        %v1342 = vld [vmem:[%s618 + $0x128] sm:$0xff]
        %v1343 = vld [vmem:[%s618 + $0x130] sm:$0xff]
        %v1344 = vld [vmem:[%s618 + $0x138] sm:$0xff]
        %v1345 = vld [vmem:[%s618 + $0x140] sm:$0xff]
        %v1346 = vld [vmem:[%s618 + $0x148] sm:$0xff]
        %v1347 = vld [vmem:[%s618 + $0x150] sm:$0xff]
        %v1348 = vld [vmem:[%s618 + $0x158] sm:$0xff]
        %v1349 = vld [vmem:[%s618 + $0x160] sm:$0xff]
        %v1350 = vld [vmem:[%s618 + $0x168] sm:$0xff]
        %v1351 = vld [vmem:[%s618 + $0x170] sm:$0xff]
        %v1352 = vld [vmem:[%s618 + $0x178] sm:$0xff]
        %v1353 = vld [vmem:[%s618 + $0x180] sm:$0xff]
        %v1354 = vld [vmem:[%s618 + $0x188] sm:$0xff]
        %1356 = vset.pattern.permute.xlu0 0
        %1357 = vperm.xlu0 %1356, %v1305
        %v1358 = vpop.permute.xlu0 %1357
        %1361 = vset.pattern.permute.xlu0 0
        %1362 = vperm.xlu0 %1361, %v1306
        %v1363 = vpop.permute.xlu0 %1362
        %1366 = vset.pattern.permute.xlu0 0
        %1367 = vperm.xlu0 %1366, %v1307
        %v1368 = vpop.permute.xlu0 %1367
        %1371 = vset.pattern.permute.xlu0 0
        %1372 = vperm.xlu0 %1371, %v1308
        %v1373 = vpop.permute.xlu0 %1372
        %1376 = vset.pattern.permute.xlu0 0
        %1377 = vperm.xlu0 %1376, %v1309
        %v1378 = vpop.permute.xlu0 %1377
        %1381 = vset.pattern.permute.xlu0 0
        %1382 = vperm.xlu0 %1381, %v1310
        %v1383 = vpop.permute.xlu0 %1382
        %1386 = vset.pattern.permute.xlu0 0
        %1387 = vperm.xlu0 %1386, %v1311
        %v1388 = vpop.permute.xlu0 %1387
        %1391 = vset.pattern.permute.xlu0 0
        %1392 = vperm.xlu0 %1391, %v1312
        %v1393 = vpop.permute.xlu0 %1392
        %1396 = vset.pattern.permute.xlu0 0
        %1397 = vperm.xlu0 %1396, %v1313
        %v1398 = vpop.permute.xlu0 %1397
        %1401 = vset.pattern.permute.xlu0 0
        %1402 = vperm.xlu0 %1401, %v1314
        %v1403 = vpop.permute.xlu0 %1402
        %1406 = vset.pattern.permute.xlu0 0
        %1407 = vperm.xlu0 %1406, %v1315
        %v1408 = vpop.permute.xlu0 %1407
        %1411 = vset.pattern.permute.xlu0 0
        %1412 = vperm.xlu0 %1411, %v1316
        %v1413 = vpop.permute.xlu0 %1412
        %1416 = vset.pattern.permute.xlu0 0
        %1417 = vperm.xlu0 %1416, %v1317
        %v1418 = vpop.permute.xlu0 %1417
        %1421 = vset.pattern.permute.xlu0 0
        %1422 = vperm.xlu0 %1421, %v1318
        %v1423 = vpop.permute.xlu0 %1422
        %1426 = vset.pattern.permute.xlu0 0
        %1427 = vperm.xlu0 %1426, %v1319
        %v1428 = vpop.permute.xlu0 %1427
        %1431 = vset.pattern.permute.xlu0 0
        %1432 = vperm.xlu0 %1431, %v1320
        %v1433 = vpop.permute.xlu0 %1432
        %1436 = vset.pattern.permute.xlu0 0
        %1437 = vperm.xlu0 %1436, %v1321
        %v1438 = vpop.permute.xlu0 %1437
        %1441 = vset.pattern.permute.xlu0 0
        %1442 = vperm.xlu0 %1441, %v1322
        %v1443 = vpop.permute.xlu0 %1442
        %1446 = vset.pattern.permute.xlu0 0
        %1447 = vperm.xlu0 %1446, %v1323
        %v1448 = vpop.permute.xlu0 %1447
        %1451 = vset.pattern.permute.xlu0 0
        %1452 = vperm.xlu0 %1451, %v1324
        %v1453 = vpop.permute.xlu0 %1452
        %1456 = vset.pattern.permute.xlu0 0
        %1457 = vperm.xlu0 %1456, %v1325
        %v1458 = vpop.permute.xlu0 %1457
        %1461 = vset.pattern.permute.xlu0 0
        %1462 = vperm.xlu0 %1461, %v1326
        %v1463 = vpop.permute.xlu0 %1462
        %1466 = vset.pattern.permute.xlu0 0
        %1467 = vperm.xlu0 %1466, %v1327
        %v1468 = vpop.permute.xlu0 %1467
        %1471 = vset.pattern.permute.xlu0 0
        %1472 = vperm.xlu0 %1471, %v1328
        %v1473 = vpop.permute.xlu0 %1472
        %1476 = vset.pattern.permute.xlu0 0
        %1477 = vperm.xlu0 %1476, %v1329
        %v1478 = vpop.permute.xlu0 %1477
        %1481 = vset.pattern.permute.xlu0 0
        %1482 = vperm.xlu0 %1481, %v1330
        %v1483 = vpop.permute.xlu0 %1482
        %1486 = vset.pattern.permute.xlu0 0
        %1487 = vperm.xlu0 %1486, %v1331
        %v1488 = vpop.permute.xlu0 %1487
        %1491 = vset.pattern.permute.xlu0 0
        %1492 = vperm.xlu0 %1491, %v1332
        %v1493 = vpop.permute.xlu0 %1492
        %1496 = vset.pattern.permute.xlu0 0
        %1497 = vperm.xlu0 %1496, %v1333
        %v1498 = vpop.permute.xlu0 %1497
        %1501 = vset.pattern.permute.xlu0 0
        %1502 = vperm.xlu0 %1501, %v1334
        %v1503 = vpop.permute.xlu0 %1502
        %1506 = vset.pattern.permute.xlu0 0
        %1507 = vperm.xlu0 %1506, %v1335
        %v1508 = vpop.permute.xlu0 %1507
        %1511 = vset.pattern.permute.xlu0 0
        %1512 = vperm.xlu0 %1511, %v1336
        %v1513 = vpop.permute.xlu0 %1512
        %1516 = vset.pattern.permute.xlu0 0
        %1517 = vperm.xlu0 %1516, %v1337
        %v1518 = vpop.permute.xlu0 %1517
        %1521 = vset.pattern.permute.xlu0 0
        %1522 = vperm.xlu0 %1521, %v1338
        %v1523 = vpop.permute.xlu0 %1522
        %1526 = vset.pattern.permute.xlu0 0
        %1527 = vperm.xlu0 %1526, %v1339
        %v1528 = vpop.permute.xlu0 %1527
        %1531 = vset.pattern.permute.xlu0 0
        %1532 = vperm.xlu0 %1531, %v1340
        %v1533 = vpop.permute.xlu0 %1532
        %1536 = vset.pattern.permute.xlu0 0
        %1537 = vperm.xlu0 %1536, %v1341
        %v1538 = vpop.permute.xlu0 %1537
        %1541 = vset.pattern.permute.xlu0 0
        %1542 = vperm.xlu0 %1541, %v1342
        %v1543 = vpop.permute.xlu0 %1542
        %1546 = vset.pattern.permute.xlu0 0
        %1547 = vperm.xlu0 %1546, %v1343
        %v1548 = vpop.permute.xlu0 %1547
        %1551 = vset.pattern.permute.xlu0 0
        %1552 = vperm.xlu0 %1551, %v1344
        %v1553 = vpop.permute.xlu0 %1552
        %1556 = vset.pattern.permute.xlu0 0
        %1557 = vperm.xlu0 %1556, %v1345
        %v1558 = vpop.permute.xlu0 %1557
        %1561 = vset.pattern.permute.xlu0 0
        %1562 = vperm.xlu0 %1561, %v1346
        %v1563 = vpop.permute.xlu0 %1562
        %1566 = vset.pattern.permute.xlu0 0
        %1567 = vperm.xlu0 %1566, %v1347
        %v1568 = vpop.permute.xlu0 %1567
        %1571 = vset.pattern.permute.xlu0 0
        %1572 = vperm.xlu0 %1571, %v1348
        %v1573 = vpop.permute.xlu0 %1572
        %1576 = vset.pattern.permute.xlu0 0
        %1577 = vperm.xlu0 %1576, %v1349
        %v1578 = vpop.permute.xlu0 %1577
        %1581 = vset.pattern.permute.xlu0 0
        %1582 = vperm.xlu0 %1581, %v1350
        %v1583 = vpop.permute.xlu0 %1582
        %1586 = vset.pattern.permute.xlu0 0
        %1587 = vperm.xlu0 %1586, %v1351
        %v1588 = vpop.permute.xlu0 %1587
        %1591 = vset.pattern.permute.xlu0 0
        %1592 = vperm.xlu0 %1591, %v1352
        %v1593 = vpop.permute.xlu0 %1592
        %1596 = vset.pattern.permute.xlu0 0
        %1597 = vperm.xlu0 %1596, %v1353
        %v1598 = vpop.permute.xlu0 %1597
        %1601 = vset.pattern.permute.xlu0 0
        %1602 = vperm.xlu0 %1601, %v1354
        %v1603 = vpop.permute.xlu0 %1602
        %v1605 = vmul.f32 %v1358, %v1299
        %v1606 = vmul.f32 %v1358, %v1301
        %v1607 = vmul.f32 %v1363, %v1299
        %v1608 = vmul.f32 %v1363, %v1301
        %v1609 = vmul.f32 %v1368, %v1299
        %v1610 = vmul.f32 %v1368, %v1301
        %v1611 = vmul.f32 %v1373, %v1299
        %v1612 = vmul.f32 %v1373, %v1301
        %v1613 = vmul.f32 %v1378, %v1299
        %v1614 = vmul.f32 %v1378, %v1301
        %v1615 = vmul.f32 %v1383, %v1299
        %v1616 = vmul.f32 %v1383, %v1301
        %v1617 = vmul.f32 %v1388, %v1299
        %v1618 = vmul.f32 %v1388, %v1301
        %v1619 = vmul.f32 %v1393, %v1299
        %v1620 = vmul.f32 %v1393, %v1301
        %v1621 = vmul.f32 %v1398, %v1299
        %v1622 = vmul.f32 %v1398, %v1301
        %v1623 = vmul.f32 %v1403, %v1299
        %v1624 = vmul.f32 %v1403, %v1301
        %v1625 = vmul.f32 %v1408, %v1299
        %v1626 = vmul.f32 %v1408, %v1301
        %v1627 = vmul.f32 %v1413, %v1299
        %v1628 = vmul.f32 %v1413, %v1301
        %v1629 = vmul.f32 %v1418, %v1299
        %v1630 = vmul.f32 %v1418, %v1301
        %v1631 = vmul.f32 %v1423, %v1299
        %v1632 = vmul.f32 %v1423, %v1301
        %v1633 = vmul.f32 %v1428, %v1299
        %v1634 = vmul.f32 %v1428, %v1301
        %v1635 = vmul.f32 %v1433, %v1299
        %v1636 = vmul.f32 %v1433, %v1301
        %v1637 = vmul.f32 %v1438, %v1299
        %v1638 = vmul.f32 %v1438, %v1301
        %v1639 = vmul.f32 %v1443, %v1299
        %v1640 = vmul.f32 %v1443, %v1301
        %v1641 = vmul.f32 %v1448, %v1299
        %v1642 = vmul.f32 %v1448, %v1301
        %v1643 = vmul.f32 %v1453, %v1299
        %v1644 = vmul.f32 %v1453, %v1301
        %v1645 = vmul.f32 %v1458, %v1299
        %v1646 = vmul.f32 %v1458, %v1301
        %v1647 = vmul.f32 %v1463, %v1299
        %v1648 = vmul.f32 %v1463, %v1301
        %v1649 = vmul.f32 %v1468, %v1299
        %v1650 = vmul.f32 %v1468, %v1301
        %v1651 = vmul.f32 %v1473, %v1299
        %v1652 = vmul.f32 %v1473, %v1301
        %v1653 = vmul.f32 %v1478, %v1299
        %v1654 = vmul.f32 %v1478, %v1301
        %v1655 = vmul.f32 %v1483, %v1299
        %v1656 = vmul.f32 %v1483, %v1301
        %v1657 = vmul.f32 %v1488, %v1299
        %v1658 = vmul.f32 %v1488, %v1301
        %v1659 = vmul.f32 %v1493, %v1299
        %v1660 = vmul.f32 %v1493, %v1301
        %v1661 = vmul.f32 %v1498, %v1299
        %v1662 = vmul.f32 %v1498, %v1301
        %v1663 = vmul.f32 %v1503, %v1299
        %v1664 = vmul.f32 %v1503, %v1301
        %v1665 = vmul.f32 %v1508, %v1299
        %v1666 = vmul.f32 %v1508, %v1301
        %v1667 = vmul.f32 %v1513, %v1299
        %v1668 = vmul.f32 %v1513, %v1301
        %v1669 = vmul.f32 %v1518, %v1299
        %v1670 = vmul.f32 %v1518, %v1301
        %v1671 = vmul.f32 %v1523, %v1299
        %v1672 = vmul.f32 %v1523, %v1301
        %v1673 = vmul.f32 %v1528, %v1299
        %v1674 = vmul.f32 %v1528, %v1301
        %v1675 = vmul.f32 %v1533, %v1299
        %v1676 = vmul.f32 %v1533, %v1301
        %v1677 = vmul.f32 %v1538, %v1299
        %v1678 = vmul.f32 %v1538, %v1301
        %v1679 = vmul.f32 %v1543, %v1299
        %v1680 = vmul.f32 %v1543, %v1301
        %v1681 = vmul.f32 %v1548, %v1299
        %v1682 = vmul.f32 %v1548, %v1301
        %v1683 = vmul.f32 %v1553, %v1299
        %v1684 = vmul.f32 %v1553, %v1301
        %v1685 = vmul.f32 %v1558, %v1299
        %v1686 = vmul.f32 %v1558, %v1301
        %v1687 = vmul.f32 %v1563, %v1299
        %v1688 = vmul.f32 %v1563, %v1301
        %v1689 = vmul.f32 %v1568, %v1299
        %v1690 = vmul.f32 %v1568, %v1301
        %v1691 = vmul.f32 %v1573, %v1299
        %v1692 = vmul.f32 %v1573, %v1301
        %v1693 = vmul.f32 %v1578, %v1299
        %v1694 = vmul.f32 %v1578, %v1301
        %v1695 = vmul.f32 %v1583, %v1299
        %v1696 = vmul.f32 %v1583, %v1301
        %v1697 = vmul.f32 %v1588, %v1299
        %v1698 = vmul.f32 %v1588, %v1301
        %v1699 = vmul.f32 %v1593, %v1299
        %v1700 = vmul.f32 %v1593, %v1301
        %v1701 = vmul.f32 %v1598, %v1299
        %v1702 = vmul.f32 %v1598, %v1301
        %v1703 = vmul.f32 %v1603, %v1299
        %v1704 = vmul.f32 %v1603, %v1301
        %v1705 = vpack.c.bf16 %v1605, %v1605
        %v1706 = vpack.c.bf16 %v1606, %v1606
        %v1707 = vpack.c.bf16 %v1607, %v1607
        %v1708 = vpack.c.bf16 %v1608, %v1608
        %v1709 = vpack.c.bf16 %v1609, %v1609
        %v1710 = vpack.c.bf16 %v1610, %v1610
        %v1711 = vpack.c.bf16 %v1611, %v1611
        %v1712 = vpack.c.bf16 %v1612, %v1612
        %v1713 = vpack.c.bf16 %v1613, %v1613
        %v1714 = vpack.c.bf16 %v1614, %v1614
        %v1715 = vpack.c.bf16 %v1615, %v1615
        %v1716 = vpack.c.bf16 %v1616, %v1616
        %v1717 = vpack.c.bf16 %v1617, %v1617
        %v1718 = vpack.c.bf16 %v1618, %v1618
        %v1719 = vpack.c.bf16 %v1619, %v1619
        %v1720 = vpack.c.bf16 %v1620, %v1620
        %v1721 = vpack.c.bf16 %v1621, %v1621
        %v1722 = vpack.c.bf16 %v1622, %v1622
        %v1723 = vpack.c.bf16 %v1623, %v1623
        %v1724 = vpack.c.bf16 %v1624, %v1624
        %v1725 = vpack.c.bf16 %v1625, %v1625
        %v1726 = vpack.c.bf16 %v1626, %v1626
        %v1727 = vpack.c.bf16 %v1627, %v1627
        %v1728 = vpack.c.bf16 %v1628, %v1628
        %v1729 = vpack.c.bf16 %v1629, %v1629
        %v1730 = vpack.c.bf16 %v1630, %v1630
        %v1731 = vpack.c.bf16 %v1631, %v1631
        %v1732 = vpack.c.bf16 %v1632, %v1632
        %v1733 = vpack.c.bf16 %v1633, %v1633
        %v1734 = vpack.c.bf16 %v1634, %v1634
        %v1735 = vpack.c.bf16 %v1635, %v1635
        %v1736 = vpack.c.bf16 %v1636, %v1636
        %v1737 = vpack.c.bf16 %v1637, %v1637
        %v1738 = vpack.c.bf16 %v1638, %v1638
        %v1739 = vpack.c.bf16 %v1639, %v1639
        %v1740 = vpack.c.bf16 %v1640, %v1640
        %v1741 = vpack.c.bf16 %v1641, %v1641
        %v1742 = vpack.c.bf16 %v1642, %v1642
        %v1743 = vpack.c.bf16 %v1643, %v1643
        %v1744 = vpack.c.bf16 %v1644, %v1644
        %v1745 = vpack.c.bf16 %v1645, %v1645
        %v1746 = vpack.c.bf16 %v1646, %v1646
        %v1747 = vpack.c.bf16 %v1647, %v1647
        %v1748 = vpack.c.bf16 %v1648, %v1648
        %v1749 = vpack.c.bf16 %v1649, %v1649
        %v1750 = vpack.c.bf16 %v1650, %v1650
        %v1751 = vpack.c.bf16 %v1651, %v1651
        %v1752 = vpack.c.bf16 %v1652, %v1652
        %v1753 = vpack.c.bf16 %v1653, %v1653
        %v1754 = vpack.c.bf16 %v1654, %v1654
        %v1755 = vpack.c.bf16 %v1655, %v1655
        %v1756 = vpack.c.bf16 %v1656, %v1656
        %v1757 = vpack.c.bf16 %v1657, %v1657
        %v1758 = vpack.c.bf16 %v1658, %v1658
        %v1759 = vpack.c.bf16 %v1659, %v1659
        %v1760 = vpack.c.bf16 %v1660, %v1660
        %v1761 = vpack.c.bf16 %v1661, %v1661
        %v1762 = vpack.c.bf16 %v1662, %v1662
        %v1763 = vpack.c.bf16 %v1663, %v1663
        %v1764 = vpack.c.bf16 %v1664, %v1664
        %v1765 = vpack.c.bf16 %v1665, %v1665
        %v1766 = vpack.c.bf16 %v1666, %v1666
        %v1767 = vpack.c.bf16 %v1667, %v1667
        %v1768 = vpack.c.bf16 %v1668, %v1668
        %v1769 = vpack.c.bf16 %v1669, %v1669
        %v1770 = vpack.c.bf16 %v1670, %v1670
        %v1771 = vpack.c.bf16 %v1671, %v1671
        %v1772 = vpack.c.bf16 %v1672, %v1672
        %v1773 = vpack.c.bf16 %v1673, %v1673
        %v1774 = vpack.c.bf16 %v1674, %v1674
        %v1775 = vpack.c.bf16 %v1675, %v1675
        %v1776 = vpack.c.bf16 %v1676, %v1676
        %v1777 = vpack.c.bf16 %v1677, %v1677
        %v1778 = vpack.c.bf16 %v1678, %v1678
        %v1779 = vpack.c.bf16 %v1679, %v1679
        %v1780 = vpack.c.bf16 %v1680, %v1680
        %v1781 = vpack.c.bf16 %v1681, %v1681
        %v1782 = vpack.c.bf16 %v1682, %v1682
        %v1783 = vpack.c.bf16 %v1683, %v1683
        %v1784 = vpack.c.bf16 %v1684, %v1684
        %v1785 = vpack.c.bf16 %v1685, %v1685
        %v1786 = vpack.c.bf16 %v1686, %v1686
        %v1787 = vpack.c.bf16 %v1687, %v1687
        %v1788 = vpack.c.bf16 %v1688, %v1688
        %v1789 = vpack.c.bf16 %v1689, %v1689
        %v1790 = vpack.c.bf16 %v1690, %v1690
        %v1791 = vpack.c.bf16 %v1691, %v1691
        %v1792 = vpack.c.bf16 %v1692, %v1692
        %v1793 = vpack.c.bf16 %v1693, %v1693
        %v1794 = vpack.c.bf16 %v1694, %v1694
        %v1795 = vpack.c.bf16 %v1695, %v1695
        %v1796 = vpack.c.bf16 %v1696, %v1696
        %v1797 = vpack.c.bf16 %v1697, %v1697
        %v1798 = vpack.c.bf16 %v1698, %v1698
        %v1799 = vpack.c.bf16 %v1699, %v1699
        %v1800 = vpack.c.bf16 %v1700, %v1700
        %v1801 = vpack.c.bf16 %v1701, %v1701
        %v1802 = vpack.c.bf16 %v1702, %v1702
        %v1803 = vpack.c.bf16 %v1703, %v1703
        %v1804 = vpack.c.bf16 %v1704, %v1704
        %v1905 = vunpack.c.l.b16 %v1705
        %v1906 = vunpack.c.l.b16 %v1706
        %v1907 = vunpack.c.l.b16 %v1707
        %v1908 = vunpack.c.l.b16 %v1708
        %v1909 = vunpack.c.l.b16 %v1709
        %v1910 = vunpack.c.l.b16 %v1710
        %v1911 = vunpack.c.l.b16 %v1711
        %v1912 = vunpack.c.l.b16 %v1712
        %v1913 = vunpack.c.l.b16 %v1713
        %v1914 = vunpack.c.l.b16 %v1714
        %v1915 = vunpack.c.l.b16 %v1715
        %v1916 = vunpack.c.l.b16 %v1716
        %v1917 = vunpack.c.l.b16 %v1717
        %v1918 = vunpack.c.l.b16 %v1718
        %v1919 = vunpack.c.l.b16 %v1719
        %v1920 = vunpack.c.l.b16 %v1720
        %v1921 = vunpack.c.l.b16 %v1721
        %v1922 = vunpack.c.l.b16 %v1722
        %v1923 = vunpack.c.l.b16 %v1723
        %v1924 = vunpack.c.l.b16 %v1724
        %v1925 = vunpack.c.l.b16 %v1725
        %v1926 = vunpack.c.l.b16 %v1726
        %v1927 = vunpack.c.l.b16 %v1727
        %v1928 = vunpack.c.l.b16 %v1728
        %v1929 = vunpack.c.l.b16 %v1729
        %v1930 = vunpack.c.l.b16 %v1730
        %v1931 = vunpack.c.l.b16 %v1731
        %v1932 = vunpack.c.l.b16 %v1732
        %v1933 = vunpack.c.l.b16 %v1733
        %v1934 = vunpack.c.l.b16 %v1734
        %v1935 = vunpack.c.l.b16 %v1735
        %v1936 = vunpack.c.l.b16 %v1736
        %v1937 = vunpack.c.l.b16 %v1737
        %v1938 = vunpack.c.l.b16 %v1738
        %v1939 = vunpack.c.l.b16 %v1739
        %v1940 = vunpack.c.l.b16 %v1740
        %v1941 = vunpack.c.l.b16 %v1741
        %v1942 = vunpack.c.l.b16 %v1742
        %v1943 = vunpack.c.l.b16 %v1743
        %v1944 = vunpack.c.l.b16 %v1744
        %v1945 = vunpack.c.l.b16 %v1745
        %v1946 = vunpack.c.l.b16 %v1746
        %v1947 = vunpack.c.l.b16 %v1747
        %v1948 = vunpack.c.l.b16 %v1748
        %v1949 = vunpack.c.l.b16 %v1749
        %v1950 = vunpack.c.l.b16 %v1750
        %v1951 = vunpack.c.l.b16 %v1751
        %v1952 = vunpack.c.l.b16 %v1752
        %v1953 = vunpack.c.l.b16 %v1753
        %v1954 = vunpack.c.l.b16 %v1754
        %v1955 = vunpack.c.l.b16 %v1755
        %v1956 = vunpack.c.l.b16 %v1756
        %v1957 = vunpack.c.l.b16 %v1757
        %v1958 = vunpack.c.l.b16 %v1758
        %v1959 = vunpack.c.l.b16 %v1759
        %v1960 = vunpack.c.l.b16 %v1760
        %v1961 = vunpack.c.l.b16 %v1761
        %v1962 = vunpack.c.l.b16 %v1762
        %v1963 = vunpack.c.l.b16 %v1763
        %v1964 = vunpack.c.l.b16 %v1764
        %v1965 = vunpack.c.l.b16 %v1765
        %v1966 = vunpack.c.l.b16 %v1766
        %v1967 = vunpack.c.l.b16 %v1767
        %v1968 = vunpack.c.l.b16 %v1768
        %v1969 = vunpack.c.l.b16 %v1769
        %v1970 = vunpack.c.l.b16 %v1770
        %v1971 = vunpack.c.l.b16 %v1771
        %v1972 = vunpack.c.l.b16 %v1772
        %v1973 = vunpack.c.l.b16 %v1773
        %v1974 = vunpack.c.l.b16 %v1774
        %v1975 = vunpack.c.l.b16 %v1775
        %v1976 = vunpack.c.l.b16 %v1776
        %v1977 = vunpack.c.l.b16 %v1777
        %v1978 = vunpack.c.l.b16 %v1778
        %v1979 = vunpack.c.l.b16 %v1779
        %v1980 = vunpack.c.l.b16 %v1780
        %v1981 = vunpack.c.l.b16 %v1781
        %v1982 = vunpack.c.l.b16 %v1782
        %v1983 = vunpack.c.l.b16 %v1783
        %v1984 = vunpack.c.l.b16 %v1784
        %v1985 = vunpack.c.l.b16 %v1785
        %v1986 = vunpack.c.l.b16 %v1786
        %v1987 = vunpack.c.l.b16 %v1787
        %v1988 = vunpack.c.l.b16 %v1788
        %v1989 = vunpack.c.l.b16 %v1789
        %v1990 = vunpack.c.l.b16 %v1790
        %v1991 = vunpack.c.l.b16 %v1791
        %v1992 = vunpack.c.l.b16 %v1792
        %v1993 = vunpack.c.l.b16 %v1793
        %v1994 = vunpack.c.l.b16 %v1794
        %v1995 = vunpack.c.l.b16 %v1795
        %v1996 = vunpack.c.l.b16 %v1796
        %v1997 = vunpack.c.l.b16 %v1797
        %v1998 = vunpack.c.l.b16 %v1798
        %v1999 = vunpack.c.l.b16 %v1799
        %v2000 = vunpack.c.l.b16 %v1800
        %v2001 = vunpack.c.l.b16 %v1801
        %v2002 = vunpack.c.l.b16 %v1802
        %v2003 = vunpack.c.l.b16 %v1803
        %v2004 = vunpack.c.l.b16 %v1804
        %v2005 = vpack.c.b16 %v1906, %v1905
        %v2006 = vpack.c.b16 %v1908, %v1907
        %v2007 = vpack.c.b16 %v1910, %v1909
        %v2008 = vpack.c.b16 %v1912, %v1911
        %v2009 = vpack.c.b16 %v1914, %v1913
        %v2010 = vpack.c.b16 %v1916, %v1915
        %v2011 = vpack.c.b16 %v1918, %v1917
        %v2012 = vpack.c.b16 %v1920, %v1919
        %v2013 = vpack.c.b16 %v1922, %v1921
        %v2014 = vpack.c.b16 %v1924, %v1923
        %v2015 = vpack.c.b16 %v1926, %v1925
        %v2016 = vpack.c.b16 %v1928, %v1927
        %v2017 = vpack.c.b16 %v1930, %v1929
        %v2018 = vpack.c.b16 %v1932, %v1931
        %v2019 = vpack.c.b16 %v1934, %v1933
        %v2020 = vpack.c.b16 %v1936, %v1935
        %v2021 = vpack.c.b16 %v1938, %v1937
        %v2022 = vpack.c.b16 %v1940, %v1939
        %v2023 = vpack.c.b16 %v1942, %v1941
        %v2024 = vpack.c.b16 %v1944, %v1943
        %v2025 = vpack.c.b16 %v1946, %v1945
        %v2026 = vpack.c.b16 %v1948, %v1947
        %v2027 = vpack.c.b16 %v1950, %v1949
        %v2028 = vpack.c.b16 %v1952, %v1951
        %v2029 = vpack.c.b16 %v1954, %v1953
        %v2030 = vpack.c.b16 %v1956, %v1955
        %v2031 = vpack.c.b16 %v1958, %v1957
        %v2032 = vpack.c.b16 %v1960, %v1959
        %v2033 = vpack.c.b16 %v1962, %v1961
        %v2034 = vpack.c.b16 %v1964, %v1963
        %v2035 = vpack.c.b16 %v1966, %v1965
        %v2036 = vpack.c.b16 %v1968, %v1967
        %v2037 = vpack.c.b16 %v1970, %v1969
        %v2038 = vpack.c.b16 %v1972, %v1971
        %v2039 = vpack.c.b16 %v1974, %v1973
        %v2040 = vpack.c.b16 %v1976, %v1975
        %v2041 = vpack.c.b16 %v1978, %v1977
        %v2042 = vpack.c.b16 %v1980, %v1979
        %v2043 = vpack.c.b16 %v1982, %v1981
        %v2044 = vpack.c.b16 %v1984, %v1983
        %v2045 = vpack.c.b16 %v1986, %v1985
        %v2046 = vpack.c.b16 %v1988, %v1987
        %v2047 = vpack.c.b16 %v1990, %v1989
        %v2048 = vpack.c.b16 %v1992, %v1991
        %v2049 = vpack.c.b16 %v1994, %v1993
        %v2050 = vpack.c.b16 %v1996, %v1995
        %v2051 = vpack.c.b16 %v1998, %v1997
        %v2052 = vpack.c.b16 %v2000, %v1999
        %v2053 = vpack.c.b16 %v2002, %v2001
        %v2054 = vpack.c.b16 %v2004, %v2003
        %2105 = vst [vmem:[%s586] sm:$0xff] %v2005
        %2106 = vst [vmem:[%s586 + $0x8] sm:$0xff] %v2006
        %2107 = vst [vmem:[%s586 + $0x10] sm:$0xff] %v2007
        %2108 = vst [vmem:[%s586 + $0x18] sm:$0xff] %v2008
        %2109 = vst [vmem:[%s586 + $0x20] sm:$0xff] %v2009
        %2110 = vst [vmem:[%s586 + $0x28] sm:$0xff] %v2010
        %2111 = vst [vmem:[%s586 + $0x30] sm:$0xff] %v2011
        %2112 = vst [vmem:[%s586 + $0x38] sm:$0xff] %v2012
        %2113 = vst [vmem:[%s586 + $0x40] sm:$0xff] %v2013
        %2114 = vst [vmem:[%s586 + $0x48] sm:$0xff] %v2014
        %2115 = vst [vmem:[%s586 + $0x50] sm:$0xff] %v2015
        %2116 = vst [vmem:[%s586 + $0x58] sm:$0xff] %v2016
        %2117 = vst [vmem:[%s586 + $0x60] sm:$0xff] %v2017
        %2118 = vst [vmem:[%s586 + $0x68] sm:$0xff] %v2018
        %2119 = vst [vmem:[%s586 + $0x70] sm:$0xff] %v2019
        %2120 = vst [vmem:[%s586 + $0x78] sm:$0xff] %v2020
        %2121 = vst [vmem:[%s586 + $0x80] sm:$0xff] %v2021
        %2122 = vst [vmem:[%s586 + $0x88] sm:$0xff] %v2022
        %2123 = vst [vmem:[%s586 + $0x90] sm:$0xff] %v2023
        %2124 = vst [vmem:[%s586 + $0x98] sm:$0xff] %v2024
        %2125 = vst [vmem:[%s586 + $0xa0] sm:$0xff] %v2025
        %2126 = vst [vmem:[%s586 + $0xa8] sm:$0xff] %v2026
        %2127 = vst [vmem:[%s586 + $0xb0] sm:$0xff] %v2027
        %2128 = vst [vmem:[%s586 + $0xb8] sm:$0xff] %v2028
        %2129 = vst [vmem:[%s586 + $0xc0] sm:$0xff] %v2029
        %2130 = vst [vmem:[%s586 + $0xc8] sm:$0xff] %v2030
        %2131 = vst [vmem:[%s586 + $0xd0] sm:$0xff] %v2031
        %2132 = vst [vmem:[%s586 + $0xd8] sm:$0xff] %v2032
        %2133 = vst [vmem:[%s586 + $0xe0] sm:$0xff] %v2033
        %2134 = vst [vmem:[%s586 + $0xe8] sm:$0xff] %v2034
        %2135 = vst [vmem:[%s586 + $0xf0] sm:$0xff] %v2035
        %2136 = vst [vmem:[%s586 + $0xf8] sm:$0xff] %v2036
        %2137 = vst [vmem:[%s586 + $0x100] sm:$0xff] %v2037
        %2138 = vst [vmem:[%s586 + $0x108] sm:$0xff] %v2038
        %2139 = vst [vmem:[%s586 + $0x110] sm:$0xff] %v2039
        %2140 = vst [vmem:[%s586 + $0x118] sm:$0xff] %v2040
        %2141 = vst [vmem:[%s586 + $0x120] sm:$0xff] %v2041
        %2142 = vst [vmem:[%s586 + $0x128] sm:$0xff] %v2042
        %2143 = vst [vmem:[%s586 + $0x130] sm:$0xff] %v2043
        %2144 = vst [vmem:[%s586 + $0x138] sm:$0xff] %v2044
        %2145 = vst [vmem:[%s586 + $0x140] sm:$0xff] %v2045
        %2146 = vst [vmem:[%s586 + $0x148] sm:$0xff] %v2046
        %2147 = vst [vmem:[%s586 + $0x150] sm:$0xff] %v2047
        %2148 = vst [vmem:[%s586 + $0x158] sm:$0xff] %v2048
        %2149 = vst [vmem:[%s586 + $0x160] sm:$0xff] %v2049
        %2150 = vst [vmem:[%s586 + $0x168] sm:$0xff] %v2050
        %2151 = vst [vmem:[%s586 + $0x170] sm:$0xff] %v2051
        %2152 = vst [vmem:[%s586 + $0x178] sm:$0xff] %v2052
        %2153 = vst [vmem:[%s586 + $0x180] sm:$0xff] %v2053
        %2154 = vst [vmem:[%s586 + $0x188] sm:$0xff] %v2054
        %v2155 = vld [vmem:[%s625] sm:$0xff]
        %v2156 = vld [vmem:[%s625 + $0x8] sm:$0xff]
        %v2157 = vld [vmem:[%s625 + $0x10] sm:$0xff]
        %v2158 = vld [vmem:[%s625 + $0x18] sm:$0xff]
        %v2159 = vld [vmem:[%s625 + $0x20] sm:$0xff]
        %v2160 = vld [vmem:[%s625 + $0x28] sm:$0xff]
        %v2161 = vld [vmem:[%s625 + $0x30] sm:$0xff]
        %v2162 = vld [vmem:[%s625 + $0x38] sm:$0xff]
        %v2163 = vld [vmem:[%s625 + $0x40] sm:$0xff]
        %v2164 = vld [vmem:[%s625 + $0x48] sm:$0xff]
        %v2165 = vld [vmem:[%s625 + $0x50] sm:$0xff]
        %v2166 = vld [vmem:[%s625 + $0x58] sm:$0xff]
        %v2167 = vld [vmem:[%s625 + $0x60] sm:$0xff]
        %v2168 = vld [vmem:[%s625 + $0x68] sm:$0xff]
        %v2169 = vld [vmem:[%s625 + $0x70] sm:$0xff]
        %v2170 = vld [vmem:[%s625 + $0x78] sm:$0xff]
        %v2171 = vld [vmem:[%s625 + $0x80] sm:$0xff]
        %v2172 = vld [vmem:[%s625 + $0x88] sm:$0xff]
        %v2173 = vld [vmem:[%s625 + $0x90] sm:$0xff]
        %v2174 = vld [vmem:[%s625 + $0x98] sm:$0xff]
        %v2175 = vld [vmem:[%s625 + $0xa0] sm:$0xff]
        %v2176 = vld [vmem:[%s625 + $0xa8] sm:$0xff]
        %v2177 = vld [vmem:[%s625 + $0xb0] sm:$0xff]
        %v2178 = vld [vmem:[%s625 + $0xb8] sm:$0xff]
        %v2179 = vld [vmem:[%s625 + $0xc0] sm:$0xff]
        %v2180 = vld [vmem:[%s625 + $0xc8] sm:$0xff]
        %v2181 = vld [vmem:[%s625 + $0xd0] sm:$0xff]
        %v2182 = vld [vmem:[%s625 + $0xd8] sm:$0xff]
        %v2183 = vld [vmem:[%s625 + $0xe0] sm:$0xff]
        %v2184 = vld [vmem:[%s625 + $0xe8] sm:$0xff]
        %v2185 = vld [vmem:[%s625 + $0xf0] sm:$0xff]
        %v2186 = vld [vmem:[%s625 + $0xf8] sm:$0xff]
        %v2187 = vld [vmem:[%s625 + $0x100] sm:$0xff]
        %v2188 = vld [vmem:[%s625 + $0x108] sm:$0xff]
        %v2189 = vld [vmem:[%s625 + $0x110] sm:$0xff]
        %v2190 = vld [vmem:[%s625 + $0x118] sm:$0xff]
        %v2191 = vld [vmem:[%s625 + $0x120] sm:$0xff]
        %v2192 = vld [vmem:[%s625 + $0x128] sm:$0xff]
        %v2193 = vld [vmem:[%s625 + $0x130] sm:$0xff]
        %v2194 = vld [vmem:[%s625 + $0x138] sm:$0xff]
        %v2195 = vld [vmem:[%s625 + $0x140] sm:$0xff]
        %v2196 = vld [vmem:[%s625 + $0x148] sm:$0xff]
        %v2197 = vld [vmem:[%s625 + $0x150] sm:$0xff]
        %v2198 = vld [vmem:[%s625 + $0x158] sm:$0xff]
        %v2199 = vld [vmem:[%s625 + $0x160] sm:$0xff]
        %v2200 = vld [vmem:[%s625 + $0x168] sm:$0xff]
        %v2201 = vld [vmem:[%s625 + $0x170] sm:$0xff]
        %v2202 = vld [vmem:[%s625 + $0x178] sm:$0xff]
        %v2203 = vld [vmem:[%s625 + $0x180] sm:$0xff]
        %v2204 = vld [vmem:[%s625 + $0x188] sm:$0xff]
        %v2205 = vunpack.c.l.bf16 %v2155
        %v2206 = vunpack.c.h.bf16 %v2155
        %v2207 = vunpack.c.l.bf16 %v2156
        %v2208 = vunpack.c.h.bf16 %v2156
        %v2209 = vunpack.c.l.bf16 %v2157
        %v2210 = vunpack.c.h.bf16 %v2157
        %v2211 = vunpack.c.l.bf16 %v2158
        %v2212 = vunpack.c.h.bf16 %v2158
        %v2213 = vunpack.c.l.bf16 %v2159
        %v2214 = vunpack.c.h.bf16 %v2159
        %v2215 = vunpack.c.l.bf16 %v2160
        %v2216 = vunpack.c.h.bf16 %v2160
        %v2217 = vunpack.c.l.bf16 %v2161
        %v2218 = vunpack.c.h.bf16 %v2161
        %v2219 = vunpack.c.l.bf16 %v2162
        %v2220 = vunpack.c.h.bf16 %v2162
        %v2221 = vunpack.c.l.bf16 %v2163
        %v2222 = vunpack.c.h.bf16 %v2163
        %v2223 = vunpack.c.l.bf16 %v2164
        %v2224 = vunpack.c.h.bf16 %v2164
        %v2225 = vunpack.c.l.bf16 %v2165
        %v2226 = vunpack.c.h.bf16 %v2165
        %v2227 = vunpack.c.l.bf16 %v2166
        %v2228 = vunpack.c.h.bf16 %v2166
        %v2229 = vunpack.c.l.bf16 %v2167
        %v2230 = vunpack.c.h.bf16 %v2167
        %v2231 = vunpack.c.l.bf16 %v2168
        %v2232 = vunpack.c.h.bf16 %v2168
        %v2233 = vunpack.c.l.bf16 %v2169
        %v2234 = vunpack.c.h.bf16 %v2169
        %v2235 = vunpack.c.l.bf16 %v2170
        %v2236 = vunpack.c.h.bf16 %v2170
        %v2237 = vunpack.c.l.bf16 %v2171
        %v2238 = vunpack.c.h.bf16 %v2171
        %v2239 = vunpack.c.l.bf16 %v2172
        %v2240 = vunpack.c.h.bf16 %v2172
        %v2241 = vunpack.c.l.bf16 %v2173
        %v2242 = vunpack.c.h.bf16 %v2173
        %v2243 = vunpack.c.l.bf16 %v2174
        %v2244 = vunpack.c.h.bf16 %v2174
        %v2245 = vunpack.c.l.bf16 %v2175
        %v2246 = vunpack.c.h.bf16 %v2175
        %v2247 = vunpack.c.l.bf16 %v2176
        %v2248 = vunpack.c.h.bf16 %v2176
        %v2249 = vunpack.c.l.bf16 %v2177
        %v2250 = vunpack.c.h.bf16 %v2177
        %v2251 = vunpack.c.l.bf16 %v2178
        %v2252 = vunpack.c.h.bf16 %v2178
        %v2253 = vunpack.c.l.bf16 %v2179
        %v2254 = vunpack.c.h.bf16 %v2179
        %v2255 = vunpack.c.l.bf16 %v2180
        %v2256 = vunpack.c.h.bf16 %v2180
        %v2257 = vunpack.c.l.bf16 %v2181
        %v2258 = vunpack.c.h.bf16 %v2181
        %v2259 = vunpack.c.l.bf16 %v2182
        %v2260 = vunpack.c.h.bf16 %v2182
        %v2261 = vunpack.c.l.bf16 %v2183
        %v2262 = vunpack.c.h.bf16 %v2183
        %v2263 = vunpack.c.l.bf16 %v2184
        %v2264 = vunpack.c.h.bf16 %v2184
        %v2265 = vunpack.c.l.bf16 %v2185
        %v2266 = vunpack.c.h.bf16 %v2185
        %v2267 = vunpack.c.l.bf16 %v2186
        %v2268 = vunpack.c.h.bf16 %v2186
        %v2269 = vunpack.c.l.bf16 %v2187
        %v2270 = vunpack.c.h.bf16 %v2187
        %v2271 = vunpack.c.l.bf16 %v2188
        %v2272 = vunpack.c.h.bf16 %v2188
        %v2273 = vunpack.c.l.bf16 %v2189
        %v2274 = vunpack.c.h.bf16 %v2189
        %v2275 = vunpack.c.l.bf16 %v2190
        %v2276 = vunpack.c.h.bf16 %v2190
        %v2277 = vunpack.c.l.bf16 %v2191
        %v2278 = vunpack.c.h.bf16 %v2191
        %v2279 = vunpack.c.l.bf16 %v2192
        %v2280 = vunpack.c.h.bf16 %v2192
        %v2281 = vunpack.c.l.bf16 %v2193
        %v2282 = vunpack.c.h.bf16 %v2193
        %v2283 = vunpack.c.l.bf16 %v2194
        %v2284 = vunpack.c.h.bf16 %v2194
        %v2285 = vunpack.c.l.bf16 %v2195
        %v2286 = vunpack.c.h.bf16 %v2195
        %v2287 = vunpack.c.l.bf16 %v2196
        %v2288 = vunpack.c.h.bf16 %v2196
        %v2289 = vunpack.c.l.bf16 %v2197
        %v2290 = vunpack.c.h.bf16 %v2197
        %v2291 = vunpack.c.l.bf16 %v2198
        %v2292 = vunpack.c.h.bf16 %v2198
        %v2293 = vunpack.c.l.bf16 %v2199
        %v2294 = vunpack.c.h.bf16 %v2199
        %v2295 = vunpack.c.l.bf16 %v2200
        %v2296 = vunpack.c.h.bf16 %v2200
        %v2297 = vunpack.c.l.bf16 %v2201
        %v2298 = vunpack.c.h.bf16 %v2201
        %v2299 = vunpack.c.l.bf16 %v2202
        %v2300 = vunpack.c.h.bf16 %v2202
        %v2301 = vunpack.c.l.bf16 %v2203
        %v2302 = vunpack.c.h.bf16 %v2203
        %v2303 = vunpack.c.l.bf16 %v2204
        %v2304 = vunpack.c.h.bf16 %v2204
        %v2305 = vmul.f32 %v2205, 2.0
        %v2306 = vmul.f32 %v2206, 2.0
        %v2307 = vmul.f32 %v2207, 2.0
        %v2308 = vmul.f32 %v2208, 2.0
        %v2309 = vmul.f32 %v2209, 2.0
        %v2310 = vmul.f32 %v2210, 2.0
        %v2311 = vmul.f32 %v2211, 2.0
        %v2312 = vmul.f32 %v2212, 2.0
        %v2313 = vmul.f32 %v2213, 2.0
        %v2314 = vmul.f32 %v2214, 2.0
        %v2315 = vmul.f32 %v2215, 2.0
        %v2316 = vmul.f32 %v2216, 2.0
        %v2317 = vmul.f32 %v2217, 2.0
        %v2318 = vmul.f32 %v2218, 2.0
        %v2319 = vmul.f32 %v2219, 2.0
        %v2320 = vmul.f32 %v2220, 2.0
        %v2321 = vmul.f32 %v2221, 2.0
        %v2322 = vmul.f32 %v2222, 2.0
        %v2323 = vmul.f32 %v2223, 2.0
        %v2324 = vmul.f32 %v2224, 2.0
        %v2325 = vmul.f32 %v2225, 2.0
        %v2326 = vmul.f32 %v2226, 2.0
        %v2327 = vmul.f32 %v2227, 2.0
        %v2328 = vmul.f32 %v2228, 2.0
        %v2329 = vmul.f32 %v2229, 2.0
        %v2330 = vmul.f32 %v2230, 2.0
        %v2331 = vmul.f32 %v2231, 2.0
        %v2332 = vmul.f32 %v2232, 2.0
        %v2333 = vmul.f32 %v2233, 2.0
        %v2334 = vmul.f32 %v2234, 2.0
        %v2335 = vmul.f32 %v2235, 2.0
        %v2336 = vmul.f32 %v2236, 2.0
        %v2337 = vmul.f32 %v2237, 2.0
        %v2338 = vmul.f32 %v2238, 2.0
        %v2339 = vmul.f32 %v2239, 2.0
        %v2340 = vmul.f32 %v2240, 2.0
        %v2341 = vmul.f32 %v2241, 2.0
        %v2342 = vmul.f32 %v2242, 2.0
        %v2343 = vmul.f32 %v2243, 2.0
        %v2344 = vmul.f32 %v2244, 2.0
        %v2345 = vmul.f32 %v2245, 2.0
        %v2346 = vmul.f32 %v2246, 2.0
        %v2347 = vmul.f32 %v2247, 2.0
        %v2348 = vmul.f32 %v2248, 2.0
        %v2349 = vmul.f32 %v2249, 2.0
        %v2350 = vmul.f32 %v2250, 2.0
        %v2351 = vmul.f32 %v2251, 2.0
        %v2352 = vmul.f32 %v2252, 2.0
        %v2353 = vmul.f32 %v2253, 2.0
        %v2354 = vmul.f32 %v2254, 2.0
        %v2355 = vmul.f32 %v2255, 2.0
        %v2356 = vmul.f32 %v2256, 2.0
        %v2357 = vmul.f32 %v2257, 2.0
        %v2358 = vmul.f32 %v2258, 2.0
        %v2359 = vmul.f32 %v2259, 2.0
        %v2360 = vmul.f32 %v2260, 2.0
        %v2361 = vmul.f32 %v2261, 2.0
        %v2362 = vmul.f32 %v2262, 2.0
        %v2363 = vmul.f32 %v2263, 2.0
        %v2364 = vmul.f32 %v2264, 2.0
        %v2365 = vmul.f32 %v2265, 2.0
        %v2366 = vmul.f32 %v2266, 2.0
        %v2367 = vmul.f32 %v2267, 2.0
        %v2368 = vmul.f32 %v2268, 2.0
        %v2369 = vmul.f32 %v2269, 2.0
        %v2370 = vmul.f32 %v2270, 2.0
        %v2371 = vmul.f32 %v2271, 2.0
        %v2372 = vmul.f32 %v2272, 2.0
        %v2373 = vmul.f32 %v2273, 2.0
        %v2374 = vmul.f32 %v2274, 2.0
        %v2375 = vmul.f32 %v2275, 2.0
        %v2376 = vmul.f32 %v2276, 2.0
        %v2377 = vmul.f32 %v2277, 2.0
        %v2378 = vmul.f32 %v2278, 2.0
        %v2379 = vmul.f32 %v2279, 2.0
        %v2380 = vmul.f32 %v2280, 2.0
        %v2381 = vmul.f32 %v2281, 2.0
        %v2382 = vmul.f32 %v2282, 2.0
        %v2383 = vmul.f32 %v2283, 2.0
        %v2384 = vmul.f32 %v2284, 2.0
        %v2385 = vmul.f32 %v2285, 2.0
        %v2386 = vmul.f32 %v2286, 2.0
        %v2387 = vmul.f32 %v2287, 2.0
        %v2388 = vmul.f32 %v2288, 2.0
        %v2389 = vmul.f32 %v2289, 2.0
        %v2390 = vmul.f32 %v2290, 2.0
        %v2391 = vmul.f32 %v2291, 2.0
        %v2392 = vmul.f32 %v2292, 2.0
        %v2393 = vmul.f32 %v2293, 2.0
        %v2394 = vmul.f32 %v2294, 2.0
        %v2395 = vmul.f32 %v2295, 2.0
        %v2396 = vmul.f32 %v2296, 2.0
        %v2397 = vmul.f32 %v2297, 2.0
        %v2398 = vmul.f32 %v2298, 2.0
        %v2399 = vmul.f32 %v2299, 2.0
        %v2400 = vmul.f32 %v2300, 2.0
        %v2401 = vmul.f32 %v2301, 2.0
        %v2402 = vmul.f32 %v2302, 2.0
        %v2403 = vmul.f32 %v2303, 2.0
        %v2404 = vmul.f32 %v2304, 2.0
        %v2405 = vld [vmem:[%s632] sm:$0xff]
        %v2406 = vld [vmem:[%s632 + $0x8] sm:$0xff]
        %v2407 = vld [vmem:[%s632 + $0x10] sm:$0xff]
        %v2408 = vld [vmem:[%s632 + $0x18] sm:$0xff]
        %v2409 = vld [vmem:[%s632 + $0x20] sm:$0xff]
        %v2410 = vld [vmem:[%s632 + $0x28] sm:$0xff]
        %v2411 = vld [vmem:[%s632 + $0x30] sm:$0xff]
        %v2412 = vld [vmem:[%s632 + $0x38] sm:$0xff]
        %v2413 = vld [vmem:[%s632 + $0x40] sm:$0xff]
        %v2414 = vld [vmem:[%s632 + $0x48] sm:$0xff]
        %v2415 = vld [vmem:[%s632 + $0x50] sm:$0xff]
        %v2416 = vld [vmem:[%s632 + $0x58] sm:$0xff]
        %v2417 = vld [vmem:[%s632 + $0x60] sm:$0xff]
        %v2418 = vld [vmem:[%s632 + $0x68] sm:$0xff]
        %v2419 = vld [vmem:[%s632 + $0x70] sm:$0xff]
        %v2420 = vld [vmem:[%s632 + $0x78] sm:$0xff]
        %v2421 = vld [vmem:[%s632 + $0x80] sm:$0xff]
        %v2422 = vld [vmem:[%s632 + $0x88] sm:$0xff]
        %v2423 = vld [vmem:[%s632 + $0x90] sm:$0xff]
        %v2424 = vld [vmem:[%s632 + $0x98] sm:$0xff]
        %v2425 = vld [vmem:[%s632 + $0xa0] sm:$0xff]
        %v2426 = vld [vmem:[%s632 + $0xa8] sm:$0xff]
        %v2427 = vld [vmem:[%s632 + $0xb0] sm:$0xff]
        %v2428 = vld [vmem:[%s632 + $0xb8] sm:$0xff]
        %v2429 = vld [vmem:[%s632 + $0xc0] sm:$0xff]
        %v2430 = vld [vmem:[%s632 + $0xc8] sm:$0xff]
        %v2431 = vld [vmem:[%s632 + $0xd0] sm:$0xff]
        %v2432 = vld [vmem:[%s632 + $0xd8] sm:$0xff]
        %v2433 = vld [vmem:[%s632 + $0xe0] sm:$0xff]
        %v2434 = vld [vmem:[%s632 + $0xe8] sm:$0xff]
        %v2435 = vld [vmem:[%s632 + $0xf0] sm:$0xff]
        %v2436 = vld [vmem:[%s632 + $0xf8] sm:$0xff]
        %v2437 = vld [vmem:[%s632 + $0x100] sm:$0xff]
        %v2438 = vld [vmem:[%s632 + $0x108] sm:$0xff]
        %v2439 = vld [vmem:[%s632 + $0x110] sm:$0xff]
        %v2440 = vld [vmem:[%s632 + $0x118] sm:$0xff]
        %v2441 = vld [vmem:[%s632 + $0x120] sm:$0xff]
        %v2442 = vld [vmem:[%s632 + $0x128] sm:$0xff]
        %v2443 = vld [vmem:[%s632 + $0x130] sm:$0xff]
        %v2444 = vld [vmem:[%s632 + $0x138] sm:$0xff]
        %v2445 = vld [vmem:[%s632 + $0x140] sm:$0xff]
        %v2446 = vld [vmem:[%s632 + $0x148] sm:$0xff]
        %v2447 = vld [vmem:[%s632 + $0x150] sm:$0xff]
        %v2448 = vld [vmem:[%s632 + $0x158] sm:$0xff]
        %v2449 = vld [vmem:[%s632 + $0x160] sm:$0xff]
        %v2450 = vld [vmem:[%s632 + $0x168] sm:$0xff]
        %v2451 = vld [vmem:[%s632 + $0x170] sm:$0xff]
        %v2452 = vld [vmem:[%s632 + $0x178] sm:$0xff]
        %v2453 = vld [vmem:[%s632 + $0x180] sm:$0xff]
        %v2454 = vld [vmem:[%s632 + $0x188] sm:$0xff]
        %v2455 = vunpack.c.l.bf16 %v2405
        %v2456 = vunpack.c.h.bf16 %v2405
        %v2457 = vunpack.c.l.bf16 %v2406
        %v2458 = vunpack.c.h.bf16 %v2406
        %v2459 = vunpack.c.l.bf16 %v2407
        %v2460 = vunpack.c.h.bf16 %v2407
        %v2461 = vunpack.c.l.bf16 %v2408
        %v2462 = vunpack.c.h.bf16 %v2408
        %v2463 = vunpack.c.l.bf16 %v2409
        %v2464 = vunpack.c.h.bf16 %v2409
        %v2465 = vunpack.c.l.bf16 %v2410
        %v2466 = vunpack.c.h.bf16 %v2410
        %v2467 = vunpack.c.l.bf16 %v2411
        %v2468 = vunpack.c.h.bf16 %v2411
        %v2469 = vunpack.c.l.bf16 %v2412
        %v2470 = vunpack.c.h.bf16 %v2412
        %v2471 = vunpack.c.l.bf16 %v2413
        %v2472 = vunpack.c.h.bf16 %v2413
        %v2473 = vunpack.c.l.bf16 %v2414
        %v2474 = vunpack.c.h.bf16 %v2414
        %v2475 = vunpack.c.l.bf16 %v2415
        %v2476 = vunpack.c.h.bf16 %v2415
        %v2477 = vunpack.c.l.bf16 %v2416
        %v2478 = vunpack.c.h.bf16 %v2416
        %v2479 = vunpack.c.l.bf16 %v2417
        %v2480 = vunpack.c.h.bf16 %v2417
        %v2481 = vunpack.c.l.bf16 %v2418
        %v2482 = vunpack.c.h.bf16 %v2418
        %v2483 = vunpack.c.l.bf16 %v2419
        %v2484 = vunpack.c.h.bf16 %v2419
        %v2485 = vunpack.c.l.bf16 %v2420
        %v2486 = vunpack.c.h.bf16 %v2420
        %v2487 = vunpack.c.l.bf16 %v2421
        %v2488 = vunpack.c.h.bf16 %v2421
        %v2489 = vunpack.c.l.bf16 %v2422
        %v2490 = vunpack.c.h.bf16 %v2422
        %v2491 = vunpack.c.l.bf16 %v2423
        %v2492 = vunpack.c.h.bf16 %v2423
        %v2493 = vunpack.c.l.bf16 %v2424
        %v2494 = vunpack.c.h.bf16 %v2424
        %v2495 = vunpack.c.l.bf16 %v2425
        %v2496 = vunpack.c.h.bf16 %v2425
        %v2497 = vunpack.c.l.bf16 %v2426
        %v2498 = vunpack.c.h.bf16 %v2426
        %v2499 = vunpack.c.l.bf16 %v2427
        %v2500 = vunpack.c.h.bf16 %v2427
        %v2501 = vunpack.c.l.bf16 %v2428
        %v2502 = vunpack.c.h.bf16 %v2428
        %v2503 = vunpack.c.l.bf16 %v2429
        %v2504 = vunpack.c.h.bf16 %v2429
        %v2505 = vunpack.c.l.bf16 %v2430
        %v2506 = vunpack.c.h.bf16 %v2430
        %v2507 = vunpack.c.l.bf16 %v2431
        %v2508 = vunpack.c.h.bf16 %v2431
        %v2509 = vunpack.c.l.bf16 %v2432
        %v2510 = vunpack.c.h.bf16 %v2432
        %v2511 = vunpack.c.l.bf16 %v2433
        %v2512 = vunpack.c.h.bf16 %v2433
        %v2513 = vunpack.c.l.bf16 %v2434
        %v2514 = vunpack.c.h.bf16 %v2434
        %v2515 = vunpack.c.l.bf16 %v2435
        %v2516 = vunpack.c.h.bf16 %v2435
        %v2517 = vunpack.c.l.bf16 %v2436
        %v2518 = vunpack.c.h.bf16 %v2436
        %v2519 = vunpack.c.l.bf16 %v2437
        %v2520 = vunpack.c.h.bf16 %v2437
        %v2521 = vunpack.c.l.bf16 %v2438
        %v2522 = vunpack.c.h.bf16 %v2438
        %v2523 = vunpack.c.l.bf16 %v2439
        %v2524 = vunpack.c.h.bf16 %v2439
        %v2525 = vunpack.c.l.bf16 %v2440
        %v2526 = vunpack.c.h.bf16 %v2440
        %v2527 = vunpack.c.l.bf16 %v2441
        %v2528 = vunpack.c.h.bf16 %v2441
        %v2529 = vunpack.c.l.bf16 %v2442
        %v2530 = vunpack.c.h.bf16 %v2442
        %v2531 = vunpack.c.l.bf16 %v2443
        %v2532 = vunpack.c.h.bf16 %v2443
        %v2533 = vunpack.c.l.bf16 %v2444
        %v2534 = vunpack.c.h.bf16 %v2444
        %v2535 = vunpack.c.l.bf16 %v2445
        %v2536 = vunpack.c.h.bf16 %v2445
        %v2537 = vunpack.c.l.bf16 %v2446
        %v2538 = vunpack.c.h.bf16 %v2446
        %v2539 = vunpack.c.l.bf16 %v2447
        %v2540 = vunpack.c.h.bf16 %v2447
        %v2541 = vunpack.c.l.bf16 %v2448
        %v2542 = vunpack.c.h.bf16 %v2448
        %v2543 = vunpack.c.l.bf16 %v2449
        %v2544 = vunpack.c.h.bf16 %v2449
        %v2545 = vunpack.c.l.bf16 %v2450
        %v2546 = vunpack.c.h.bf16 %v2450
        %v2547 = vunpack.c.l.bf16 %v2451
        %v2548 = vunpack.c.h.bf16 %v2451
        %v2549 = vunpack.c.l.bf16 %v2452
        %v2550 = vunpack.c.h.bf16 %v2452
        %v2551 = vunpack.c.l.bf16 %v2453
        %v2552 = vunpack.c.h.bf16 %v2453
        %v2553 = vunpack.c.l.bf16 %v2454
        %v2554 = vunpack.c.h.bf16 %v2454
        %v2555 = vsub.f32 %v2305, %v2455
        %v2556 = vsub.f32 %v2306, %v2456
        %v2557 = vsub.f32 %v2307, %v2457
        %v2558 = vsub.f32 %v2308, %v2458
        %v2559 = vsub.f32 %v2309, %v2459
        %v2560 = vsub.f32 %v2310, %v2460
        %v2561 = vsub.f32 %v2311, %v2461
        %v2562 = vsub.f32 %v2312, %v2462
        %v2563 = vsub.f32 %v2313, %v2463
        %v2564 = vsub.f32 %v2314, %v2464
        %v2565 = vsub.f32 %v2315, %v2465
        %v2566 = vsub.f32 %v2316, %v2466
        %v2567 = vsub.f32 %v2317, %v2467
        %v2568 = vsub.f32 %v2318, %v2468
        %v2569 = vsub.f32 %v2319, %v2469
        %v2570 = vsub.f32 %v2320, %v2470
        %v2571 = vsub.f32 %v2321, %v2471
        %v2572 = vsub.f32 %v2322, %v2472
        %v2573 = vsub.f32 %v2323, %v2473
        %v2574 = vsub.f32 %v2324, %v2474
        %v2575 = vsub.f32 %v2325, %v2475
        %v2576 = vsub.f32 %v2326, %v2476
        %v2577 = vsub.f32 %v2327, %v2477
        %v2578 = vsub.f32 %v2328, %v2478
        %v2579 = vsub.f32 %v2329, %v2479
        %v2580 = vsub.f32 %v2330, %v2480
        %v2581 = vsub.f32 %v2331, %v2481
        %v2582 = vsub.f32 %v2332, %v2482
        %v2583 = vsub.f32 %v2333, %v2483
        %v2584 = vsub.f32 %v2334, %v2484
        %v2585 = vsub.f32 %v2335, %v2485
        %v2586 = vsub.f32 %v2336, %v2486
        %v2587 = vsub.f32 %v2337, %v2487
        %v2588 = vsub.f32 %v2338, %v2488
        %v2589 = vsub.f32 %v2339, %v2489
        %v2590 = vsub.f32 %v2340, %v2490
        %v2591 = vsub.f32 %v2341, %v2491
        %v2592 = vsub.f32 %v2342, %v2492
        %v2593 = vsub.f32 %v2343, %v2493
        %v2594 = vsub.f32 %v2344, %v2494
        %v2595 = vsub.f32 %v2345, %v2495
        %v2596 = vsub.f32 %v2346, %v2496
        %v2597 = vsub.f32 %v2347, %v2497
        %v2598 = vsub.f32 %v2348, %v2498
        %v2599 = vsub.f32 %v2349, %v2499
        %v2600 = vsub.f32 %v2350, %v2500
        %v2601 = vsub.f32 %v2351, %v2501
        %v2602 = vsub.f32 %v2352, %v2502
        %v2603 = vsub.f32 %v2353, %v2503
        %v2604 = vsub.f32 %v2354, %v2504
        %v2605 = vsub.f32 %v2355, %v2505
        %v2606 = vsub.f32 %v2356, %v2506
        %v2607 = vsub.f32 %v2357, %v2507
        %v2608 = vsub.f32 %v2358, %v2508
        %v2609 = vsub.f32 %v2359, %v2509
        %v2610 = vsub.f32 %v2360, %v2510
        %v2611 = vsub.f32 %v2361, %v2511
        %v2612 = vsub.f32 %v2362, %v2512
        %v2613 = vsub.f32 %v2363, %v2513
        %v2614 = vsub.f32 %v2364, %v2514
        %v2615 = vsub.f32 %v2365, %v2515
        %v2616 = vsub.f32 %v2366, %v2516
        %v2617 = vsub.f32 %v2367, %v2517
        %v2618 = vsub.f32 %v2368, %v2518
        %v2619 = vsub.f32 %v2369, %v2519
        %v2620 = vsub.f32 %v2370, %v2520
        %v2621 = vsub.f32 %v2371, %v2521
        %v2622 = vsub.f32 %v2372, %v2522
        %v2623 = vsub.f32 %v2373, %v2523
        %v2624 = vsub.f32 %v2374, %v2524
        %v2625 = vsub.f32 %v2375, %v2525
        %v2626 = vsub.f32 %v2376, %v2526
        %v2627 = vsub.f32 %v2377, %v2527
        %v2628 = vsub.f32 %v2378, %v2528
        %v2629 = vsub.f32 %v2379, %v2529
        %v2630 = vsub.f32 %v2380, %v2530
        %v2631 = vsub.f32 %v2381, %v2531
        %v2632 = vsub.f32 %v2382, %v2532
        %v2633 = vsub.f32 %v2383, %v2533
        %v2634 = vsub.f32 %v2384, %v2534
        %v2635 = vsub.f32 %v2385, %v2535
        %v2636 = vsub.f32 %v2386, %v2536
        %v2637 = vsub.f32 %v2387, %v2537
        %v2638 = vsub.f32 %v2388, %v2538
        %v2639 = vsub.f32 %v2389, %v2539
        %v2640 = vsub.f32 %v2390, %v2540
        %v2641 = vsub.f32 %v2391, %v2541
        %v2642 = vsub.f32 %v2392, %v2542
        %v2643 = vsub.f32 %v2393, %v2543
        %v2644 = vsub.f32 %v2394, %v2544
        %v2645 = vsub.f32 %v2395, %v2545
        %v2646 = vsub.f32 %v2396, %v2546
        %v2647 = vsub.f32 %v2397, %v2547
        %v2648 = vsub.f32 %v2398, %v2548
        %v2649 = vsub.f32 %v2399, %v2549
        %v2650 = vsub.f32 %v2400, %v2550
        %v2651 = vsub.f32 %v2401, %v2551
        %v2652 = vsub.f32 %v2402, %v2552
        %v2653 = vsub.f32 %v2403, %v2553
        %v2654 = vsub.f32 %v2404, %v2554
        %v2655 = vpack.c.bf16 %v2557, %v2555
        %v2656 = vpack.c.bf16 %v2558, %v2556
        %v2657 = vpack.c.bf16 %v2561, %v2559
        %v2658 = vpack.c.bf16 %v2562, %v2560
        %v2659 = vpack.c.bf16 %v2565, %v2563
        %v2660 = vpack.c.bf16 %v2566, %v2564
        %v2661 = vpack.c.bf16 %v2569, %v2567
        %v2662 = vpack.c.bf16 %v2570, %v2568
        %v2663 = vpack.c.bf16 %v2573, %v2571
        %v2664 = vpack.c.bf16 %v2574, %v2572
        %v2665 = vpack.c.bf16 %v2577, %v2575
        %v2666 = vpack.c.bf16 %v2578, %v2576
        %v2667 = vpack.c.bf16 %v2581, %v2579
        %v2668 = vpack.c.bf16 %v2582, %v2580
        %v2669 = vpack.c.bf16 %v2585, %v2583
        %v2670 = vpack.c.bf16 %v2586, %v2584
        %v2671 = vpack.c.bf16 %v2589, %v2587
        %v2672 = vpack.c.bf16 %v2590, %v2588
        %v2673 = vpack.c.bf16 %v2593, %v2591
        %v2674 = vpack.c.bf16 %v2594, %v2592
        %v2675 = vpack.c.bf16 %v2597, %v2595
        %v2676 = vpack.c.bf16 %v2598, %v2596
        %v2677 = vpack.c.bf16 %v2601, %v2599
        %v2678 = vpack.c.bf16 %v2602, %v2600
        %v2679 = vpack.c.bf16 %v2605, %v2603
        %v2680 = vpack.c.bf16 %v2606, %v2604
        %v2681 = vpack.c.bf16 %v2609, %v2607
        %v2682 = vpack.c.bf16 %v2610, %v2608
        %v2683 = vpack.c.bf16 %v2613, %v2611
        %v2684 = vpack.c.bf16 %v2614, %v2612
        %v2685 = vpack.c.bf16 %v2617, %v2615
        %v2686 = vpack.c.bf16 %v2618, %v2616
        %v2687 = vpack.c.bf16 %v2621, %v2619
        %v2688 = vpack.c.bf16 %v2622, %v2620
        %v2689 = vpack.c.bf16 %v2625, %v2623
        %v2690 = vpack.c.bf16 %v2626, %v2624
        %v2691 = vpack.c.bf16 %v2629, %v2627
        %v2692 = vpack.c.bf16 %v2630, %v2628
        %v2693 = vpack.c.bf16 %v2633, %v2631
        %v2694 = vpack.c.bf16 %v2634, %v2632
        %v2695 = vpack.c.bf16 %v2637, %v2635
        %v2696 = vpack.c.bf16 %v2638, %v2636
        %v2697 = vpack.c.bf16 %v2641, %v2639
        %v2698 = vpack.c.bf16 %v2642, %v2640
        %v2699 = vpack.c.bf16 %v2645, %v2643
        %v2700 = vpack.c.bf16 %v2646, %v2644
        %v2701 = vpack.c.bf16 %v2649, %v2647
        %v2702 = vpack.c.bf16 %v2650, %v2648
        %v2703 = vpack.c.bf16 %v2653, %v2651
        %v2704 = vpack.c.bf16 %v2654, %v2652
        %v2755 = vunpack.c.l.b16 %v2655
        %v2756 = vunpack.c.l.b16 %v2656
        %v2757 = vunpack.c.h.b16 %v2655
        %v2758 = vunpack.c.h.b16 %v2656
        %v2759 = vunpack.c.l.b16 %v2657
        %v2760 = vunpack.c.l.b16 %v2658
        %v2761 = vunpack.c.h.b16 %v2657
        %v2762 = vunpack.c.h.b16 %v2658
        %v2763 = vunpack.c.l.b16 %v2659
        %v2764 = vunpack.c.l.b16 %v2660
        %v2765 = vunpack.c.h.b16 %v2659
        %v2766 = vunpack.c.h.b16 %v2660
        %v2767 = vunpack.c.l.b16 %v2661
        %v2768 = vunpack.c.l.b16 %v2662
        %v2769 = vunpack.c.h.b16 %v2661
        %v2770 = vunpack.c.h.b16 %v2662
        %v2771 = vunpack.c.l.b16 %v2663
        %v2772 = vunpack.c.l.b16 %v2664
        %v2773 = vunpack.c.h.b16 %v2663
        %v2774 = vunpack.c.h.b16 %v2664
        %v2775 = vunpack.c.l.b16 %v2665
        %v2776 = vunpack.c.l.b16 %v2666
        %v2777 = vunpack.c.h.b16 %v2665
        %v2778 = vunpack.c.h.b16 %v2666
        %v2779 = vunpack.c.l.b16 %v2667
        %v2780 = vunpack.c.l.b16 %v2668
        %v2781 = vunpack.c.h.b16 %v2667
        %v2782 = vunpack.c.h.b16 %v2668
        %v2783 = vunpack.c.l.b16 %v2669
        %v2784 = vunpack.c.l.b16 %v2670
        %v2785 = vunpack.c.h.b16 %v2669
        %v2786 = vunpack.c.h.b16 %v2670
        %v2787 = vunpack.c.l.b16 %v2671
        %v2788 = vunpack.c.l.b16 %v2672
        %v2789 = vunpack.c.h.b16 %v2671
        %v2790 = vunpack.c.h.b16 %v2672
        %v2791 = vunpack.c.l.b16 %v2673
        %v2792 = vunpack.c.l.b16 %v2674
        %v2793 = vunpack.c.h.b16 %v2673
        %v2794 = vunpack.c.h.b16 %v2674
        %v2795 = vunpack.c.l.b16 %v2675
        %v2796 = vunpack.c.l.b16 %v2676
        %v2797 = vunpack.c.h.b16 %v2675
        %v2798 = vunpack.c.h.b16 %v2676
        %v2799 = vunpack.c.l.b16 %v2677
        %v2800 = vunpack.c.l.b16 %v2678
        %v2801 = vunpack.c.h.b16 %v2677
        %v2802 = vunpack.c.h.b16 %v2678
        %v2803 = vunpack.c.l.b16 %v2679
        %v2804 = vunpack.c.l.b16 %v2680
        %v2805 = vunpack.c.h.b16 %v2679
        %v2806 = vunpack.c.h.b16 %v2680
        %v2807 = vunpack.c.l.b16 %v2681
        %v2808 = vunpack.c.l.b16 %v2682
        %v2809 = vunpack.c.h.b16 %v2681
        %v2810 = vunpack.c.h.b16 %v2682
        %v2811 = vunpack.c.l.b16 %v2683
        %v2812 = vunpack.c.l.b16 %v2684
        %v2813 = vunpack.c.h.b16 %v2683
        %v2814 = vunpack.c.h.b16 %v2684
        %v2815 = vunpack.c.l.b16 %v2685
        %v2816 = vunpack.c.l.b16 %v2686
        %v2817 = vunpack.c.h.b16 %v2685
        %v2818 = vunpack.c.h.b16 %v2686
        %v2819 = vunpack.c.l.b16 %v2687
        %v2820 = vunpack.c.l.b16 %v2688
        %v2821 = vunpack.c.h.b16 %v2687
        %v2822 = vunpack.c.h.b16 %v2688
        %v2823 = vunpack.c.l.b16 %v2689
        %v2824 = vunpack.c.l.b16 %v2690
        %v2825 = vunpack.c.h.b16 %v2689
        %v2826 = vunpack.c.h.b16 %v2690
        %v2827 = vunpack.c.l.b16 %v2691
        %v2828 = vunpack.c.l.b16 %v2692
        %v2829 = vunpack.c.h.b16 %v2691
        %v2830 = vunpack.c.h.b16 %v2692
        %v2831 = vunpack.c.l.b16 %v2693
        %v2832 = vunpack.c.l.b16 %v2694
        %v2833 = vunpack.c.h.b16 %v2693
        %v2834 = vunpack.c.h.b16 %v2694
        %v2835 = vunpack.c.l.b16 %v2695
        %v2836 = vunpack.c.l.b16 %v2696
        %v2837 = vunpack.c.h.b16 %v2695
        %v2838 = vunpack.c.h.b16 %v2696
        %v2839 = vunpack.c.l.b16 %v2697
        %v2840 = vunpack.c.l.b16 %v2698
        %v2841 = vunpack.c.h.b16 %v2697
        %v2842 = vunpack.c.h.b16 %v2698
        %v2843 = vunpack.c.l.b16 %v2699
        %v2844 = vunpack.c.l.b16 %v2700
        %v2845 = vunpack.c.h.b16 %v2699
        %v2846 = vunpack.c.h.b16 %v2700
        %v2847 = vunpack.c.l.b16 %v2701
        %v2848 = vunpack.c.l.b16 %v2702
        %v2849 = vunpack.c.h.b16 %v2701
        %v2850 = vunpack.c.h.b16 %v2702
        %v2851 = vunpack.c.l.b16 %v2703
        %v2852 = vunpack.c.l.b16 %v2704
        %v2853 = vunpack.c.h.b16 %v2703
        %v2854 = vunpack.c.h.b16 %v2704
        %v2855 = vpack.c.b16 %v2756, %v2755
        %v2856 = vpack.c.b16 %v2758, %v2757
        %v2857 = vpack.c.b16 %v2760, %v2759
        %v2858 = vpack.c.b16 %v2762, %v2761
        %v2859 = vpack.c.b16 %v2764, %v2763
        %v2860 = vpack.c.b16 %v2766, %v2765
        %v2861 = vpack.c.b16 %v2768, %v2767
        %v2862 = vpack.c.b16 %v2770, %v2769
        %v2863 = vpack.c.b16 %v2772, %v2771
        %v2864 = vpack.c.b16 %v2774, %v2773
        %v2865 = vpack.c.b16 %v2776, %v2775
        %v2866 = vpack.c.b16 %v2778, %v2777
        %v2867 = vpack.c.b16 %v2780, %v2779
        %v2868 = vpack.c.b16 %v2782, %v2781
        %v2869 = vpack.c.b16 %v2784, %v2783
        %v2870 = vpack.c.b16 %v2786, %v2785
        %v2871 = vpack.c.b16 %v2788, %v2787
        %v2872 = vpack.c.b16 %v2790, %v2789
        %v2873 = vpack.c.b16 %v2792, %v2791
        %v2874 = vpack.c.b16 %v2794, %v2793
        %v2875 = vpack.c.b16 %v2796, %v2795
        %v2876 = vpack.c.b16 %v2798, %v2797
        %v2877 = vpack.c.b16 %v2800, %v2799
        %v2878 = vpack.c.b16 %v2802, %v2801
        %v2879 = vpack.c.b16 %v2804, %v2803
        %v2880 = vpack.c.b16 %v2806, %v2805
        %v2881 = vpack.c.b16 %v2808, %v2807
        %v2882 = vpack.c.b16 %v2810, %v2809
        %v2883 = vpack.c.b16 %v2812, %v2811
        %v2884 = vpack.c.b16 %v2814, %v2813
        %v2885 = vpack.c.b16 %v2816, %v2815
        %v2886 = vpack.c.b16 %v2818, %v2817
        %v2887 = vpack.c.b16 %v2820, %v2819
        %v2888 = vpack.c.b16 %v2822, %v2821
        %v2889 = vpack.c.b16 %v2824, %v2823
        %v2890 = vpack.c.b16 %v2826, %v2825
        %v2891 = vpack.c.b16 %v2828, %v2827
        %v2892 = vpack.c.b16 %v2830, %v2829
        %v2893 = vpack.c.b16 %v2832, %v2831
        %v2894 = vpack.c.b16 %v2834, %v2833
        %v2895 = vpack.c.b16 %v2836, %v2835
        %v2896 = vpack.c.b16 %v2838, %v2837
        %v2897 = vpack.c.b16 %v2840, %v2839
        %v2898 = vpack.c.b16 %v2842, %v2841
        %v2899 = vpack.c.b16 %v2844, %v2843
        %v2900 = vpack.c.b16 %v2846, %v2845
        %v2901 = vpack.c.b16 %v2848, %v2847
        %v2902 = vpack.c.b16 %v2850, %v2849
        %v2903 = vpack.c.b16 %v2852, %v2851
        %v2904 = vpack.c.b16 %v2854, %v2853
        %2955 = vst [vmem:[%s593] sm:$0xff] %v2855
        %2956 = vst [vmem:[%s593 + $0x8] sm:$0xff] %v2856
        %2957 = vst [vmem:[%s593 + $0x10] sm:$0xff] %v2857
        %2958 = vst [vmem:[%s593 + $0x18] sm:$0xff] %v2858
        %2959 = vst [vmem:[%s593 + $0x20] sm:$0xff] %v2859
        %2960 = vst [vmem:[%s593 + $0x28] sm:$0xff] %v2860
        %2961 = vst [vmem:[%s593 + $0x30] sm:$0xff] %v2861
        %2962 = vst [vmem:[%s593 + $0x38] sm:$0xff] %v2862
        %2963 = vst [vmem:[%s593 + $0x40] sm:$0xff] %v2863
        %2964 = vst [vmem:[%s593 + $0x48] sm:$0xff] %v2864
        %2965 = vst [vmem:[%s593 + $0x50] sm:$0xff] %v2865
        %2966 = vst [vmem:[%s593 + $0x58] sm:$0xff] %v2866
        %2967 = vst [vmem:[%s593 + $0x60] sm:$0xff] %v2867
        %2968 = vst [vmem:[%s593 + $0x68] sm:$0xff] %v2868
        %2969 = vst [vmem:[%s593 + $0x70] sm:$0xff] %v2869
        %2970 = vst [vmem:[%s593 + $0x78] sm:$0xff] %v2870
        %2971 = vst [vmem:[%s593 + $0x80] sm:$0xff] %v2871
        %2972 = vst [vmem:[%s593 + $0x88] sm:$0xff] %v2872
        %2973 = vst [vmem:[%s593 + $0x90] sm:$0xff] %v2873
        %2974 = vst [vmem:[%s593 + $0x98] sm:$0xff] %v2874
        %2975 = vst [vmem:[%s593 + $0xa0] sm:$0xff] %v2875
        %2976 = vst [vmem:[%s593 + $0xa8] sm:$0xff] %v2876
        %2977 = vst [vmem:[%s593 + $0xb0] sm:$0xff] %v2877
        %2978 = vst [vmem:[%s593 + $0xb8] sm:$0xff] %v2878
        %2979 = vst [vmem:[%s593 + $0xc0] sm:$0xff] %v2879
        %2980 = vst [vmem:[%s593 + $0xc8] sm:$0xff] %v2880
        %2981 = vst [vmem:[%s593 + $0xd0] sm:$0xff] %v2881
        %2982 = vst [vmem:[%s593 + $0xd8] sm:$0xff] %v2882
        %2983 = vst [vmem:[%s593 + $0xe0] sm:$0xff] %v2883
        %2984 = vst [vmem:[%s593 + $0xe8] sm:$0xff] %v2884
        %2985 = vst [vmem:[%s593 + $0xf0] sm:$0xff] %v2885
        %2986 = vst [vmem:[%s593 + $0xf8] sm:$0xff] %v2886
        %2987 = vst [vmem:[%s593 + $0x100] sm:$0xff] %v2887
        %2988 = vst [vmem:[%s593 + $0x108] sm:$0xff] %v2888
        %2989 = vst [vmem:[%s593 + $0x110] sm:$0xff] %v2889
        %2990 = vst [vmem:[%s593 + $0x118] sm:$0xff] %v2890
        %2991 = vst [vmem:[%s593 + $0x120] sm:$0xff] %v2891
        %2992 = vst [vmem:[%s593 + $0x128] sm:$0xff] %v2892
        %2993 = vst [vmem:[%s593 + $0x130] sm:$0xff] %v2893
        %2994 = vst [vmem:[%s593 + $0x138] sm:$0xff] %v2894
        %2995 = vst [vmem:[%s593 + $0x140] sm:$0xff] %v2895
        %2996 = vst [vmem:[%s593 + $0x148] sm:$0xff] %v2896
        %2997 = vst [vmem:[%s593 + $0x150] sm:$0xff] %v2897
        %2998 = vst [vmem:[%s593 + $0x158] sm:$0xff] %v2898
        %2999 = vst [vmem:[%s593 + $0x160] sm:$0xff] %v2899
        %3000 = vst [vmem:[%s593 + $0x168] sm:$0xff] %v2900
        %3001 = vst [vmem:[%s593 + $0x170] sm:$0xff] %v2901
        %3002 = vst [vmem:[%s593 + $0x178] sm:$0xff] %v2902
        %3003 = vst [vmem:[%s593 + $0x180] sm:$0xff] %v2903
        %3004 = vst [vmem:[%s593 + $0x188] sm:$0xff] %v2904
        %v3005 = vld [vmem:[%s612] sm:$0xff]
        %v3006 = vld [vmem:[%s612 + $0x8] sm:$0xff]
        %v3007 = vld [vmem:[%s612 + $0x10] sm:$0xff]
        %v3008 = vld [vmem:[%s612 + $0x18] sm:$0xff]
        %v3009 = vld [vmem:[%s612 + $0x20] sm:$0xff]
        %v3010 = vld [vmem:[%s612 + $0x28] sm:$0xff]
        %v3011 = vld [vmem:[%s612 + $0x30] sm:$0xff]
        %v3012 = vld [vmem:[%s612 + $0x38] sm:$0xff]
        %v3013 = vld [vmem:[%s612 + $0x40] sm:$0xff]
        %v3014 = vld [vmem:[%s612 + $0x48] sm:$0xff]
        %v3015 = vld [vmem:[%s612 + $0x50] sm:$0xff]
        %v3016 = vld [vmem:[%s612 + $0x58] sm:$0xff]
        %v3017 = vld [vmem:[%s612 + $0x60] sm:$0xff]
        %v3018 = vld [vmem:[%s612 + $0x68] sm:$0xff]
        %v3019 = vld [vmem:[%s612 + $0x70] sm:$0xff]
        %v3020 = vld [vmem:[%s612 + $0x78] sm:$0xff]
        %v3021 = vld [vmem:[%s612 + $0x80] sm:$0xff]
        %v3022 = vld [vmem:[%s612 + $0x88] sm:$0xff]
        %v3023 = vld [vmem:[%s612 + $0x90] sm:$0xff]
        %v3024 = vld [vmem:[%s612 + $0x98] sm:$0xff]
        %v3025 = vld [vmem:[%s612 + $0xa0] sm:$0xff]
        %v3026 = vld [vmem:[%s612 + $0xa8] sm:$0xff]
        %v3027 = vld [vmem:[%s612 + $0xb0] sm:$0xff]
        %v3028 = vld [vmem:[%s612 + $0xb8] sm:$0xff]
        %v3029 = vld [vmem:[%s612 + $0xc0] sm:$0xff]
        %v3030 = vld [vmem:[%s612 + $0xc8] sm:$0xff]
        %v3031 = vld [vmem:[%s612 + $0xd0] sm:$0xff]
        %v3032 = vld [vmem:[%s612 + $0xd8] sm:$0xff]
        %v3033 = vld [vmem:[%s612 + $0xe0] sm:$0xff]
        %v3034 = vld [vmem:[%s612 + $0xe8] sm:$0xff]
        %v3035 = vld [vmem:[%s612 + $0xf0] sm:$0xff]
        %v3036 = vld [vmem:[%s612 + $0xf8] sm:$0xff]
        %v3037 = vld [vmem:[%s612 + $0x100] sm:$0xff]
        %v3038 = vld [vmem:[%s612 + $0x108] sm:$0xff]
        %v3039 = vld [vmem:[%s612 + $0x110] sm:$0xff]
        %v3040 = vld [vmem:[%s612 + $0x118] sm:$0xff]
        %v3041 = vld [vmem:[%s612 + $0x120] sm:$0xff]
        %v3042 = vld [vmem:[%s612 + $0x128] sm:$0xff]
        %v3043 = vld [vmem:[%s612 + $0x130] sm:$0xff]
        %v3044 = vld [vmem:[%s612 + $0x138] sm:$0xff]
        %v3045 = vld [vmem:[%s612 + $0x140] sm:$0xff]
        %v3046 = vld [vmem:[%s612 + $0x148] sm:$0xff]
        %v3047 = vld [vmem:[%s612 + $0x150] sm:$0xff]
        %v3048 = vld [vmem:[%s612 + $0x158] sm:$0xff]
        %v3049 = vld [vmem:[%s612 + $0x160] sm:$0xff]
        %v3050 = vld [vmem:[%s612 + $0x168] sm:$0xff]
        %v3051 = vld [vmem:[%s612 + $0x170] sm:$0xff]
        %v3052 = vld [vmem:[%s612 + $0x178] sm:$0xff]
        %v3053 = vld [vmem:[%s612 + $0x180] sm:$0xff]
        %v3054 = vld [vmem:[%s612 + $0x188] sm:$0xff]
        %v3055 = vld [vmem:[%s625] sm:$0xff]
        %v3056 = vld [vmem:[%s625 + $0x8] sm:$0xff]
        %v3057 = vld [vmem:[%s625 + $0x10] sm:$0xff]
        %v3058 = vld [vmem:[%s625 + $0x18] sm:$0xff]
        %v3059 = vld [vmem:[%s625 + $0x20] sm:$0xff]
        %v3060 = vld [vmem:[%s625 + $0x28] sm:$0xff]
        %v3061 = vld [vmem:[%s625 + $0x30] sm:$0xff]
        %v3062 = vld [vmem:[%s625 + $0x38] sm:$0xff]
        %v3063 = vld [vmem:[%s625 + $0x40] sm:$0xff]
        %v3064 = vld [vmem:[%s625 + $0x48] sm:$0xff]
        %v3065 = vld [vmem:[%s625 + $0x50] sm:$0xff]
        %v3066 = vld [vmem:[%s625 + $0x58] sm:$0xff]
        %v3067 = vld [vmem:[%s625 + $0x60] sm:$0xff]
        %v3068 = vld [vmem:[%s625 + $0x68] sm:$0xff]
        %v3069 = vld [vmem:[%s625 + $0x70] sm:$0xff]
        %v3070 = vld [vmem:[%s625 + $0x78] sm:$0xff]
        %v3071 = vld [vmem:[%s625 + $0x80] sm:$0xff]
        %v3072 = vld [vmem:[%s625 + $0x88] sm:$0xff]
        %v3073 = vld [vmem:[%s625 + $0x90] sm:$0xff]
        %v3074 = vld [vmem:[%s625 + $0x98] sm:$0xff]
        %v3075 = vld [vmem:[%s625 + $0xa0] sm:$0xff]
        %v3076 = vld [vmem:[%s625 + $0xa8] sm:$0xff]
        %v3077 = vld [vmem:[%s625 + $0xb0] sm:$0xff]
        %v3078 = vld [vmem:[%s625 + $0xb8] sm:$0xff]
        %v3079 = vld [vmem:[%s625 + $0xc0] sm:$0xff]
        %v3080 = vld [vmem:[%s625 + $0xc8] sm:$0xff]
        %v3081 = vld [vmem:[%s625 + $0xd0] sm:$0xff]
        %v3082 = vld [vmem:[%s625 + $0xd8] sm:$0xff]
        %v3083 = vld [vmem:[%s625 + $0xe0] sm:$0xff]
        %v3084 = vld [vmem:[%s625 + $0xe8] sm:$0xff]
        %v3085 = vld [vmem:[%s625 + $0xf0] sm:$0xff]
        %v3086 = vld [vmem:[%s625 + $0xf8] sm:$0xff]
        %v3087 = vld [vmem:[%s625 + $0x100] sm:$0xff]
        %v3088 = vld [vmem:[%s625 + $0x108] sm:$0xff]
        %v3089 = vld [vmem:[%s625 + $0x110] sm:$0xff]
        %v3090 = vld [vmem:[%s625 + $0x118] sm:$0xff]
        %v3091 = vld [vmem:[%s625 + $0x120] sm:$0xff]
        %v3092 = vld [vmem:[%s625 + $0x128] sm:$0xff]
        %v3093 = vld [vmem:[%s625 + $0x130] sm:$0xff]
        %v3094 = vld [vmem:[%s625 + $0x138] sm:$0xff]
        %v3095 = vld [vmem:[%s625 + $0x140] sm:$0xff]
        %v3096 = vld [vmem:[%s625 + $0x148] sm:$0xff]
        %v3097 = vld [vmem:[%s625 + $0x150] sm:$0xff]
        %v3098 = vld [vmem:[%s625 + $0x158] sm:$0xff]
        %v3099 = vld [vmem:[%s625 + $0x160] sm:$0xff]
        %v3100 = vld [vmem:[%s625 + $0x168] sm:$0xff]
        %v3101 = vld [vmem:[%s625 + $0x170] sm:$0xff]
        %v3102 = vld [vmem:[%s625 + $0x178] sm:$0xff]
        %v3103 = vld [vmem:[%s625 + $0x180] sm:$0xff]
        %v3104 = vld [vmem:[%s625 + $0x188] sm:$0xff]
        %v3105 = vunpack.c.l.bf16 %v3055
        %v3106 = vunpack.c.h.bf16 %v3055
        %v3107 = vunpack.c.l.bf16 %v3056
        %v3108 = vunpack.c.h.bf16 %v3056
        %v3109 = vunpack.c.l.bf16 %v3057
        %v3110 = vunpack.c.h.bf16 %v3057
        %v3111 = vunpack.c.l.bf16 %v3058
        %v3112 = vunpack.c.h.bf16 %v3058
        %v3113 = vunpack.c.l.bf16 %v3059
        %v3114 = vunpack.c.h.bf16 %v3059
        %v3115 = vunpack.c.l.bf16 %v3060
        %v3116 = vunpack.c.h.bf16 %v3060
        %v3117 = vunpack.c.l.bf16 %v3061
        %v3118 = vunpack.c.h.bf16 %v3061
        %v3119 = vunpack.c.l.bf16 %v3062
        %v3120 = vunpack.c.h.bf16 %v3062
        %v3121 = vunpack.c.l.bf16 %v3063
        %v3122 = vunpack.c.h.bf16 %v3063
        %v3123 = vunpack.c.l.bf16 %v3064
        %v3124 = vunpack.c.h.bf16 %v3064
        %v3125 = vunpack.c.l.bf16 %v3065
        %v3126 = vunpack.c.h.bf16 %v3065
        %v3127 = vunpack.c.l.bf16 %v3066
        %v3128 = vunpack.c.h.bf16 %v3066
        %v3129 = vunpack.c.l.bf16 %v3067
        %v3130 = vunpack.c.h.bf16 %v3067
        %v3131 = vunpack.c.l.bf16 %v3068
        %v3132 = vunpack.c.h.bf16 %v3068
        %v3133 = vunpack.c.l.bf16 %v3069
        %v3134 = vunpack.c.h.bf16 %v3069
        %v3135 = vunpack.c.l.bf16 %v3070
        %v3136 = vunpack.c.h.bf16 %v3070
        %v3137 = vunpack.c.l.bf16 %v3071
        %v3138 = vunpack.c.h.bf16 %v3071
        %v3139 = vunpack.c.l.bf16 %v3072
        %v3140 = vunpack.c.h.bf16 %v3072
        %v3141 = vunpack.c.l.bf16 %v3073
        %v3142 = vunpack.c.h.bf16 %v3073
        %v3143 = vunpack.c.l.bf16 %v3074
        %v3144 = vunpack.c.h.bf16 %v3074
        %v3145 = vunpack.c.l.bf16 %v3075
        %v3146 = vunpack.c.h.bf16 %v3075
        %v3147 = vunpack.c.l.bf16 %v3076
        %v3148 = vunpack.c.h.bf16 %v3076
        %v3149 = vunpack.c.l.bf16 %v3077
        %v3150 = vunpack.c.h.bf16 %v3077
        %v3151 = vunpack.c.l.bf16 %v3078
        %v3152 = vunpack.c.h.bf16 %v3078
        %v3153 = vunpack.c.l.bf16 %v3079
        %v3154 = vunpack.c.h.bf16 %v3079
        %v3155 = vunpack.c.l.bf16 %v3080
        %v3156 = vunpack.c.h.bf16 %v3080
        %v3157 = vunpack.c.l.bf16 %v3081
        %v3158 = vunpack.c.h.bf16 %v3081
        %v3159 = vunpack.c.l.bf16 %v3082
        %v3160 = vunpack.c.h.bf16 %v3082
        %v3161 = vunpack.c.l.bf16 %v3083
        %v3162 = vunpack.c.h.bf16 %v3083
        %v3163 = vunpack.c.l.bf16 %v3084
        %v3164 = vunpack.c.h.bf16 %v3084
        %v3165 = vunpack.c.l.bf16 %v3085
        %v3166 = vunpack.c.h.bf16 %v3085
        %v3167 = vunpack.c.l.bf16 %v3086
        %v3168 = vunpack.c.h.bf16 %v3086
        %v3169 = vunpack.c.l.bf16 %v3087
        %v3170 = vunpack.c.h.bf16 %v3087
        %v3171 = vunpack.c.l.bf16 %v3088
        %v3172 = vunpack.c.h.bf16 %v3088
        %v3173 = vunpack.c.l.bf16 %v3089
        %v3174 = vunpack.c.h.bf16 %v3089
        %v3175 = vunpack.c.l.bf16 %v3090
        %v3176 = vunpack.c.h.bf16 %v3090
        %v3177 = vunpack.c.l.bf16 %v3091
        %v3178 = vunpack.c.h.bf16 %v3091
        %v3179 = vunpack.c.l.bf16 %v3092
        %v3180 = vunpack.c.h.bf16 %v3092
        %v3181 = vunpack.c.l.bf16 %v3093
        %v3182 = vunpack.c.h.bf16 %v3093
        %v3183 = vunpack.c.l.bf16 %v3094
        %v3184 = vunpack.c.h.bf16 %v3094
        %v3185 = vunpack.c.l.bf16 %v3095
        %v3186 = vunpack.c.h.bf16 %v3095
        %v3187 = vunpack.c.l.bf16 %v3096
        %v3188 = vunpack.c.h.bf16 %v3096
        %v3189 = vunpack.c.l.bf16 %v3097
        %v3190 = vunpack.c.h.bf16 %v3097
        %v3191 = vunpack.c.l.bf16 %v3098
        %v3192 = vunpack.c.h.bf16 %v3098
        %v3193 = vunpack.c.l.bf16 %v3099
        %v3194 = vunpack.c.h.bf16 %v3099
        %v3195 = vunpack.c.l.bf16 %v3100
        %v3196 = vunpack.c.h.bf16 %v3100
        %v3197 = vunpack.c.l.bf16 %v3101
        %v3198 = vunpack.c.h.bf16 %v3101
        %v3199 = vunpack.c.l.bf16 %v3102
        %v3200 = vunpack.c.h.bf16 %v3102
        %v3201 = vunpack.c.l.bf16 %v3103
        %v3202 = vunpack.c.h.bf16 %v3103
        %v3203 = vunpack.c.l.bf16 %v3104
        %v3204 = vunpack.c.h.bf16 %v3104
        %v3205 = vmul.f32 %v3105, 2.0
        %v3206 = vmul.f32 %v3106, 2.0
        %v3207 = vmul.f32 %v3107, 2.0
        %v3208 = vmul.f32 %v3108, 2.0
        %v3209 = vmul.f32 %v3109, 2.0
        %v3210 = vmul.f32 %v3110, 2.0
        %v3211 = vmul.f32 %v3111, 2.0
        %v3212 = vmul.f32 %v3112, 2.0
        %v3213 = vmul.f32 %v3113, 2.0
        %v3214 = vmul.f32 %v3114, 2.0
        %v3215 = vmul.f32 %v3115, 2.0
        %v3216 = vmul.f32 %v3116, 2.0
        %v3217 = vmul.f32 %v3117, 2.0
        %v3218 = vmul.f32 %v3118, 2.0
        %v3219 = vmul.f32 %v3119, 2.0
        %v3220 = vmul.f32 %v3120, 2.0
        %v3221 = vmul.f32 %v3121, 2.0
        %v3222 = vmul.f32 %v3122, 2.0
        %v3223 = vmul.f32 %v3123, 2.0
        %v3224 = vmul.f32 %v3124, 2.0
        %v3225 = vmul.f32 %v3125, 2.0
        %v3226 = vmul.f32 %v3126, 2.0
        %v3227 = vmul.f32 %v3127, 2.0
        %v3228 = vmul.f32 %v3128, 2.0
        %v3229 = vmul.f32 %v3129, 2.0
        %v3230 = vmul.f32 %v3130, 2.0
        %v3231 = vmul.f32 %v3131, 2.0
        %v3232 = vmul.f32 %v3132, 2.0
        %v3233 = vmul.f32 %v3133, 2.0
        %v3234 = vmul.f32 %v3134, 2.0
        %v3235 = vmul.f32 %v3135, 2.0
        %v3236 = vmul.f32 %v3136, 2.0
        %v3237 = vmul.f32 %v3137, 2.0
        %v3238 = vmul.f32 %v3138, 2.0
        %v3239 = vmul.f32 %v3139, 2.0
        %v3240 = vmul.f32 %v3140, 2.0
        %v3241 = vmul.f32 %v3141, 2.0
        %v3242 = vmul.f32 %v3142, 2.0
        %v3243 = vmul.f32 %v3143, 2.0
        %v3244 = vmul.f32 %v3144, 2.0
        %v3245 = vmul.f32 %v3145, 2.0
        %v3246 = vmul.f32 %v3146, 2.0
        %v3247 = vmul.f32 %v3147, 2.0
        %v3248 = vmul.f32 %v3148, 2.0
        %v3249 = vmul.f32 %v3149, 2.0
        %v3250 = vmul.f32 %v3150, 2.0
        %v3251 = vmul.f32 %v3151, 2.0
        %v3252 = vmul.f32 %v3152, 2.0
        %v3253 = vmul.f32 %v3153, 2.0
        %v3254 = vmul.f32 %v3154, 2.0
        %v3255 = vmul.f32 %v3155, 2.0
        %v3256 = vmul.f32 %v3156, 2.0
        %v3257 = vmul.f32 %v3157, 2.0
        %v3258 = vmul.f32 %v3158, 2.0
        %v3259 = vmul.f32 %v3159, 2.0
        %v3260 = vmul.f32 %v3160, 2.0
        %v3261 = vmul.f32 %v3161, 2.0
        %v3262 = vmul.f32 %v3162, 2.0
        %v3263 = vmul.f32 %v3163, 2.0
        %v3264 = vmul.f32 %v3164, 2.0
        %v3265 = vmul.f32 %v3165, 2.0
        %v3266 = vmul.f32 %v3166, 2.0
        %v3267 = vmul.f32 %v3167, 2.0
        %v3268 = vmul.f32 %v3168, 2.0
        %v3269 = vmul.f32 %v3169, 2.0
        %v3270 = vmul.f32 %v3170, 2.0
        %v3271 = vmul.f32 %v3171, 2.0
        %v3272 = vmul.f32 %v3172, 2.0
        %v3273 = vmul.f32 %v3173, 2.0
        %v3274 = vmul.f32 %v3174, 2.0
        %v3275 = vmul.f32 %v3175, 2.0
        %v3276 = vmul.f32 %v3176, 2.0
        %v3277 = vmul.f32 %v3177, 2.0
        %v3278 = vmul.f32 %v3178, 2.0
        %v3279 = vmul.f32 %v3179, 2.0
        %v3280 = vmul.f32 %v3180, 2.0
        %v3281 = vmul.f32 %v3181, 2.0
        %v3282 = vmul.f32 %v3182, 2.0
        %v3283 = vmul.f32 %v3183, 2.0
        %v3284 = vmul.f32 %v3184, 2.0
        %v3285 = vmul.f32 %v3185, 2.0
        %v3286 = vmul.f32 %v3186, 2.0
        %v3287 = vmul.f32 %v3187, 2.0
        %v3288 = vmul.f32 %v3188, 2.0
        %v3289 = vmul.f32 %v3189, 2.0
        %v3290 = vmul.f32 %v3190, 2.0
        %v3291 = vmul.f32 %v3191, 2.0
        %v3292 = vmul.f32 %v3192, 2.0
        %v3293 = vmul.f32 %v3193, 2.0
        %v3294 = vmul.f32 %v3194, 2.0
        %v3295 = vmul.f32 %v3195, 2.0
        %v3296 = vmul.f32 %v3196, 2.0
        %v3297 = vmul.f32 %v3197, 2.0
        %v3298 = vmul.f32 %v3198, 2.0
        %v3299 = vmul.f32 %v3199, 2.0
        %v3300 = vmul.f32 %v3200, 2.0
        %v3301 = vmul.f32 %v3201, 2.0
        %v3302 = vmul.f32 %v3202, 2.0
        %v3303 = vmul.f32 %v3203, 2.0
        %v3304 = vmul.f32 %v3204, 2.0
        %v3305 = vld [vmem:[%s632] sm:$0xff]
        %v3306 = vld [vmem:[%s632 + $0x8] sm:$0xff]
        %v3307 = vld [vmem:[%s632 + $0x10] sm:$0xff]
        %v3308 = vld [vmem:[%s632 + $0x18] sm:$0xff]
        %v3309 = vld [vmem:[%s632 + $0x20] sm:$0xff]
        %v3310 = vld [vmem:[%s632 + $0x28] sm:$0xff]
        %v3311 = vld [vmem:[%s632 + $0x30] sm:$0xff]
        %v3312 = vld [vmem:[%s632 + $0x38] sm:$0xff]
        %v3313 = vld [vmem:[%s632 + $0x40] sm:$0xff]
        %v3314 = vld [vmem:[%s632 + $0x48] sm:$0xff]
        %v3315 = vld [vmem:[%s632 + $0x50] sm:$0xff]
        %v3316 = vld [vmem:[%s632 + $0x58] sm:$0xff]
        %v3317 = vld [vmem:[%s632 + $0x60] sm:$0xff]
        %v3318 = vld [vmem:[%s632 + $0x68] sm:$0xff]
        %v3319 = vld [vmem:[%s632 + $0x70] sm:$0xff]
        %v3320 = vld [vmem:[%s632 + $0x78] sm:$0xff]
        %v3321 = vld [vmem:[%s632 + $0x80] sm:$0xff]
        %v3322 = vld [vmem:[%s632 + $0x88] sm:$0xff]
        %v3323 = vld [vmem:[%s632 + $0x90] sm:$0xff]
        %v3324 = vld [vmem:[%s632 + $0x98] sm:$0xff]
        %v3325 = vld [vmem:[%s632 + $0xa0] sm:$0xff]
        %v3326 = vld [vmem:[%s632 + $0xa8] sm:$0xff]
        %v3327 = vld [vmem:[%s632 + $0xb0] sm:$0xff]
        %v3328 = vld [vmem:[%s632 + $0xb8] sm:$0xff]
        %v3329 = vld [vmem:[%s632 + $0xc0] sm:$0xff]
        %v3330 = vld [vmem:[%s632 + $0xc8] sm:$0xff]
        %v3331 = vld [vmem:[%s632 + $0xd0] sm:$0xff]
        %v3332 = vld [vmem:[%s632 + $0xd8] sm:$0xff]
        %v3333 = vld [vmem:[%s632 + $0xe0] sm:$0xff]
        %v3334 = vld [vmem:[%s632 + $0xe8] sm:$0xff]
        %v3335 = vld [vmem:[%s632 + $0xf0] sm:$0xff]
        %v3336 = vld [vmem:[%s632 + $0xf8] sm:$0xff]
        %v3337 = vld [vmem:[%s632 + $0x100] sm:$0xff]
        %v3338 = vld [vmem:[%s632 + $0x108] sm:$0xff]
        %v3339 = vld [vmem:[%s632 + $0x110] sm:$0xff]
        %v3340 = vld [vmem:[%s632 + $0x118] sm:$0xff]
        %v3341 = vld [vmem:[%s632 + $0x120] sm:$0xff]
        %v3342 = vld [vmem:[%s632 + $0x128] sm:$0xff]
        %v3343 = vld [vmem:[%s632 + $0x130] sm:$0xff]
        %v3344 = vld [vmem:[%s632 + $0x138] sm:$0xff]
        %v3345 = vld [vmem:[%s632 + $0x140] sm:$0xff]
        %v3346 = vld [vmem:[%s632 + $0x148] sm:$0xff]
        %v3347 = vld [vmem:[%s632 + $0x150] sm:$0xff]
        %v3348 = vld [vmem:[%s632 + $0x158] sm:$0xff]
        %v3349 = vld [vmem:[%s632 + $0x160] sm:$0xff]
        %v3350 = vld [vmem:[%s632 + $0x168] sm:$0xff]
        %v3351 = vld [vmem:[%s632 + $0x170] sm:$0xff]
        %v3352 = vld [vmem:[%s632 + $0x178] sm:$0xff]
        %v3353 = vld [vmem:[%s632 + $0x180] sm:$0xff]
        %v3354 = vld [vmem:[%s632 + $0x188] sm:$0xff]
        %v3355 = vunpack.c.l.bf16 %v3305
        %v3356 = vunpack.c.h.bf16 %v3305
        %v3357 = vunpack.c.l.bf16 %v3306
        %v3358 = vunpack.c.h.bf16 %v3306
        %v3359 = vunpack.c.l.bf16 %v3307
        %v3360 = vunpack.c.h.bf16 %v3307
        %v3361 = vunpack.c.l.bf16 %v3308
        %v3362 = vunpack.c.h.bf16 %v3308
        %v3363 = vunpack.c.l.bf16 %v3309
        %v3364 = vunpack.c.h.bf16 %v3309
        %v3365 = vunpack.c.l.bf16 %v3310
        %v3366 = vunpack.c.h.bf16 %v3310
        %v3367 = vunpack.c.l.bf16 %v3311
        %v3368 = vunpack.c.h.bf16 %v3311
        %v3369 = vunpack.c.l.bf16 %v3312
        %v3370 = vunpack.c.h.bf16 %v3312
        %v3371 = vunpack.c.l.bf16 %v3313
        %v3372 = vunpack.c.h.bf16 %v3313
        %v3373 = vunpack.c.l.bf16 %v3314
        %v3374 = vunpack.c.h.bf16 %v3314
        %v3375 = vunpack.c.l.bf16 %v3315
        %v3376 = vunpack.c.h.bf16 %v3315
        %v3377 = vunpack.c.l.bf16 %v3316
        %v3378 = vunpack.c.h.bf16 %v3316
        %v3379 = vunpack.c.l.bf16 %v3317
        %v3380 = vunpack.c.h.bf16 %v3317
        %v3381 = vunpack.c.l.bf16 %v3318
        %v3382 = vunpack.c.h.bf16 %v3318
        %v3383 = vunpack.c.l.bf16 %v3319
        %v3384 = vunpack.c.h.bf16 %v3319
        %v3385 = vunpack.c.l.bf16 %v3320
        %v3386 = vunpack.c.h.bf16 %v3320
        %v3387 = vunpack.c.l.bf16 %v3321
        %v3388 = vunpack.c.h.bf16 %v3321
        %v3389 = vunpack.c.l.bf16 %v3322
        %v3390 = vunpack.c.h.bf16 %v3322
        %v3391 = vunpack.c.l.bf16 %v3323
        %v3392 = vunpack.c.h.bf16 %v3323
        %v3393 = vunpack.c.l.bf16 %v3324
        %v3394 = vunpack.c.h.bf16 %v3324
        %v3395 = vunpack.c.l.bf16 %v3325
        %v3396 = vunpack.c.h.bf16 %v3325
        %v3397 = vunpack.c.l.bf16 %v3326
        %v3398 = vunpack.c.h.bf16 %v3326
        %v3399 = vunpack.c.l.bf16 %v3327
        %v3400 = vunpack.c.h.bf16 %v3327
        %v3401 = vunpack.c.l.bf16 %v3328
        %v3402 = vunpack.c.h.bf16 %v3328
        %v3403 = vunpack.c.l.bf16 %v3329
        %v3404 = vunpack.c.h.bf16 %v3329
        %v3405 = vunpack.c.l.bf16 %v3330
        %v3406 = vunpack.c.h.bf16 %v3330
        %v3407 = vunpack.c.l.bf16 %v3331
        %v3408 = vunpack.c.h.bf16 %v3331
        %v3409 = vunpack.c.l.bf16 %v3332
        %v3410 = vunpack.c.h.bf16 %v3332
        %v3411 = vunpack.c.l.bf16 %v3333
        %v3412 = vunpack.c.h.bf16 %v3333
        %v3413 = vunpack.c.l.bf16 %v3334
        %v3414 = vunpack.c.h.bf16 %v3334
        %v3415 = vunpack.c.l.bf16 %v3335
        %v3416 = vunpack.c.h.bf16 %v3335
        %v3417 = vunpack.c.l.bf16 %v3336
        %v3418 = vunpack.c.h.bf16 %v3336
        %v3419 = vunpack.c.l.bf16 %v3337
        %v3420 = vunpack.c.h.bf16 %v3337
        %v3421 = vunpack.c.l.bf16 %v3338
        %v3422 = vunpack.c.h.bf16 %v3338
        %v3423 = vunpack.c.l.bf16 %v3339
        %v3424 = vunpack.c.h.bf16 %v3339
        %v3425 = vunpack.c.l.bf16 %v3340
        %v3426 = vunpack.c.h.bf16 %v3340
        %v3427 = vunpack.c.l.bf16 %v3341
        %v3428 = vunpack.c.h.bf16 %v3341
        %v3429 = vunpack.c.l.bf16 %v3342
        %v3430 = vunpack.c.h.bf16 %v3342
        %v3431 = vunpack.c.l.bf16 %v3343
        %v3432 = vunpack.c.h.bf16 %v3343
        %v3433 = vunpack.c.l.bf16 %v3344
        %v3434 = vunpack.c.h.bf16 %v3344
        %v3435 = vunpack.c.l.bf16 %v3345
        %v3436 = vunpack.c.h.bf16 %v3345
        %v3437 = vunpack.c.l.bf16 %v3346
        %v3438 = vunpack.c.h.bf16 %v3346
        %v3439 = vunpack.c.l.bf16 %v3347
        %v3440 = vunpack.c.h.bf16 %v3347
        %v3441 = vunpack.c.l.bf16 %v3348
        %v3442 = vunpack.c.h.bf16 %v3348
        %v3443 = vunpack.c.l.bf16 %v3349
        %v3444 = vunpack.c.h.bf16 %v3349
        %v3445 = vunpack.c.l.bf16 %v3350
        %v3446 = vunpack.c.h.bf16 %v3350
        %v3447 = vunpack.c.l.bf16 %v3351
        %v3448 = vunpack.c.h.bf16 %v3351
        %v3449 = vunpack.c.l.bf16 %v3352
        %v3450 = vunpack.c.h.bf16 %v3352
        %v3451 = vunpack.c.l.bf16 %v3353
        %v3452 = vunpack.c.h.bf16 %v3353
        %v3453 = vunpack.c.l.bf16 %v3354
        %v3454 = vunpack.c.h.bf16 %v3354
        %v3455 = vsub.f32 %v3205, %v3355
        %v3456 = vsub.f32 %v3206, %v3356
        %v3457 = vsub.f32 %v3207, %v3357
        %v3458 = vsub.f32 %v3208, %v3358
        %v3459 = vsub.f32 %v3209, %v3359
        %v3460 = vsub.f32 %v3210, %v3360
        %v3461 = vsub.f32 %v3211, %v3361
        %v3462 = vsub.f32 %v3212, %v3362
        %v3463 = vsub.f32 %v3213, %v3363
        %v3464 = vsub.f32 %v3214, %v3364
        %v3465 = vsub.f32 %v3215, %v3365
        %v3466 = vsub.f32 %v3216, %v3366
        %v3467 = vsub.f32 %v3217, %v3367
        %v3468 = vsub.f32 %v3218, %v3368
        %v3469 = vsub.f32 %v3219, %v3369
        %v3470 = vsub.f32 %v3220, %v3370
        %v3471 = vsub.f32 %v3221, %v3371
        %v3472 = vsub.f32 %v3222, %v3372
        %v3473 = vsub.f32 %v3223, %v3373
        %v3474 = vsub.f32 %v3224, %v3374
        %v3475 = vsub.f32 %v3225, %v3375
        %v3476 = vsub.f32 %v3226, %v3376
        %v3477 = vsub.f32 %v3227, %v3377
        %v3478 = vsub.f32 %v3228, %v3378
        %v3479 = vsub.f32 %v3229, %v3379
        %v3480 = vsub.f32 %v3230, %v3380
        %v3481 = vsub.f32 %v3231, %v3381
        %v3482 = vsub.f32 %v3232, %v3382
        %v3483 = vsub.f32 %v3233, %v3383
        %v3484 = vsub.f32 %v3234, %v3384
        %v3485 = vsub.f32 %v3235, %v3385
        %v3486 = vsub.f32 %v3236, %v3386
        %v3487 = vsub.f32 %v3237, %v3387
        %v3488 = vsub.f32 %v3238, %v3388
        %v3489 = vsub.f32 %v3239, %v3389
        %v3490 = vsub.f32 %v3240, %v3390
        %v3491 = vsub.f32 %v3241, %v3391
        %v3492 = vsub.f32 %v3242, %v3392
        %v3493 = vsub.f32 %v3243, %v3393
        %v3494 = vsub.f32 %v3244, %v3394
        %v3495 = vsub.f32 %v3245, %v3395
        %v3496 = vsub.f32 %v3246, %v3396
        %v3497 = vsub.f32 %v3247, %v3397
        %v3498 = vsub.f32 %v3248, %v3398
        %v3499 = vsub.f32 %v3249, %v3399
        %v3500 = vsub.f32 %v3250, %v3400
        %v3501 = vsub.f32 %v3251, %v3401
        %v3502 = vsub.f32 %v3252, %v3402
        %v3503 = vsub.f32 %v3253, %v3403
        %v3504 = vsub.f32 %v3254, %v3404
        %v3505 = vsub.f32 %v3255, %v3405
        %v3506 = vsub.f32 %v3256, %v3406
        %v3507 = vsub.f32 %v3257, %v3407
        %v3508 = vsub.f32 %v3258, %v3408
        %v3509 = vsub.f32 %v3259, %v3409
        %v3510 = vsub.f32 %v3260, %v3410
        %v3511 = vsub.f32 %v3261, %v3411
        %v3512 = vsub.f32 %v3262, %v3412
        %v3513 = vsub.f32 %v3263, %v3413
        %v3514 = vsub.f32 %v3264, %v3414
        %v3515 = vsub.f32 %v3265, %v3415
        %v3516 = vsub.f32 %v3266, %v3416
        %v3517 = vsub.f32 %v3267, %v3417
        %v3518 = vsub.f32 %v3268, %v3418
        %v3519 = vsub.f32 %v3269, %v3419
        %v3520 = vsub.f32 %v3270, %v3420
        %v3521 = vsub.f32 %v3271, %v3421
        %v3522 = vsub.f32 %v3272, %v3422
        %v3523 = vsub.f32 %v3273, %v3423
        %v3524 = vsub.f32 %v3274, %v3424
        %v3525 = vsub.f32 %v3275, %v3425
        %v3526 = vsub.f32 %v3276, %v3426
        %v3527 = vsub.f32 %v3277, %v3427
        %v3528 = vsub.f32 %v3278, %v3428
        %v3529 = vsub.f32 %v3279, %v3429
        %v3530 = vsub.f32 %v3280, %v3430
        %v3531 = vsub.f32 %v3281, %v3431
        %v3532 = vsub.f32 %v3282, %v3432
        %v3533 = vsub.f32 %v3283, %v3433
        %v3534 = vsub.f32 %v3284, %v3434
        %v3535 = vsub.f32 %v3285, %v3435
        %v3536 = vsub.f32 %v3286, %v3436
        %v3537 = vsub.f32 %v3287, %v3437
        %v3538 = vsub.f32 %v3288, %v3438
        %v3539 = vsub.f32 %v3289, %v3439
        %v3540 = vsub.f32 %v3290, %v3440
        %v3541 = vsub.f32 %v3291, %v3441
        %v3542 = vsub.f32 %v3292, %v3442
        %v3543 = vsub.f32 %v3293, %v3443
        %v3544 = vsub.f32 %v3294, %v3444
        %v3545 = vsub.f32 %v3295, %v3445
        %v3546 = vsub.f32 %v3296, %v3446
        %v3547 = vsub.f32 %v3297, %v3447
        %v3548 = vsub.f32 %v3298, %v3448
        %v3549 = vsub.f32 %v3299, %v3449
        %v3550 = vsub.f32 %v3300, %v3450
        %v3551 = vsub.f32 %v3301, %v3451
        %v3552 = vsub.f32 %v3302, %v3452
        %v3553 = vsub.f32 %v3303, %v3453
        %v3554 = vsub.f32 %v3304, %v3454
        %3556 = vset.pattern.permute.xlu0 0
        %3557 = vperm.xlu0 %3556, %v3005
        %v3558 = vpop.permute.xlu0 %3557
        %3561 = vset.pattern.permute.xlu0 0
        %3562 = vperm.xlu0 %3561, %v3006
        %v3563 = vpop.permute.xlu0 %3562
        %3566 = vset.pattern.permute.xlu0 0
        %3567 = vperm.xlu0 %3566, %v3007
        %v3568 = vpop.permute.xlu0 %3567
        %3571 = vset.pattern.permute.xlu0 0
        %3572 = vperm.xlu0 %3571, %v3008
        %v3573 = vpop.permute.xlu0 %3572
        %3576 = vset.pattern.permute.xlu0 0
        %3577 = vperm.xlu0 %3576, %v3009
        %v3578 = vpop.permute.xlu0 %3577
        %3581 = vset.pattern.permute.xlu0 0
        %3582 = vperm.xlu0 %3581, %v3010
        %v3583 = vpop.permute.xlu0 %3582
        %3586 = vset.pattern.permute.xlu0 0
        %3587 = vperm.xlu0 %3586, %v3011
        %v3588 = vpop.permute.xlu0 %3587
        %3591 = vset.pattern.permute.xlu0 0
        %3592 = vperm.xlu0 %3591, %v3012
        %v3593 = vpop.permute.xlu0 %3592
        %3596 = vset.pattern.permute.xlu0 0
        %3597 = vperm.xlu0 %3596, %v3013
        %v3598 = vpop.permute.xlu0 %3597
        %3601 = vset.pattern.permute.xlu0 0
        %3602 = vperm.xlu0 %3601, %v3014
        %v3603 = vpop.permute.xlu0 %3602
        %3606 = vset.pattern.permute.xlu0 0
        %3607 = vperm.xlu0 %3606, %v3015
        %v3608 = vpop.permute.xlu0 %3607
        %3611 = vset.pattern.permute.xlu0 0
        %3612 = vperm.xlu0 %3611, %v3016
        %v3613 = vpop.permute.xlu0 %3612
        %3616 = vset.pattern.permute.xlu0 0
        %3617 = vperm.xlu0 %3616, %v3017
        %v3618 = vpop.permute.xlu0 %3617
        %3621 = vset.pattern.permute.xlu0 0
        %3622 = vperm.xlu0 %3621, %v3018
        %v3623 = vpop.permute.xlu0 %3622
        %3626 = vset.pattern.permute.xlu0 0
        %3627 = vperm.xlu0 %3626, %v3019
        %v3628 = vpop.permute.xlu0 %3627
        %3631 = vset.pattern.permute.xlu0 0
        %3632 = vperm.xlu0 %3631, %v3020
        %v3633 = vpop.permute.xlu0 %3632
        %3636 = vset.pattern.permute.xlu0 0
        %3637 = vperm.xlu0 %3636, %v3021
        %v3638 = vpop.permute.xlu0 %3637
        %3641 = vset.pattern.permute.xlu0 0
        %3642 = vperm.xlu0 %3641, %v3022
        %v3643 = vpop.permute.xlu0 %3642
        %3646 = vset.pattern.permute.xlu0 0
        %3647 = vperm.xlu0 %3646, %v3023
        %v3648 = vpop.permute.xlu0 %3647
        %3651 = vset.pattern.permute.xlu0 0
        %3652 = vperm.xlu0 %3651, %v3024
        %v3653 = vpop.permute.xlu0 %3652
        %3656 = vset.pattern.permute.xlu0 0
        %3657 = vperm.xlu0 %3656, %v3025
        %v3658 = vpop.permute.xlu0 %3657
        %3661 = vset.pattern.permute.xlu0 0
        %3662 = vperm.xlu0 %3661, %v3026
        %v3663 = vpop.permute.xlu0 %3662
        %3666 = vset.pattern.permute.xlu0 0
        %3667 = vperm.xlu0 %3666, %v3027
        %v3668 = vpop.permute.xlu0 %3667
        %3671 = vset.pattern.permute.xlu0 0
        %3672 = vperm.xlu0 %3671, %v3028
        %v3673 = vpop.permute.xlu0 %3672
        %3676 = vset.pattern.permute.xlu0 0
        %3677 = vperm.xlu0 %3676, %v3029
        %v3678 = vpop.permute.xlu0 %3677
        %3681 = vset.pattern.permute.xlu0 0
        %3682 = vperm.xlu0 %3681, %v3030
        %v3683 = vpop.permute.xlu0 %3682
        %3686 = vset.pattern.permute.xlu0 0
        %3687 = vperm.xlu0 %3686, %v3031
        %v3688 = vpop.permute.xlu0 %3687
        %3691 = vset.pattern.permute.xlu0 0
        %3692 = vperm.xlu0 %3691, %v3032
        %v3693 = vpop.permute.xlu0 %3692
        %3696 = vset.pattern.permute.xlu0 0
        %3697 = vperm.xlu0 %3696, %v3033
        %v3698 = vpop.permute.xlu0 %3697
        %3701 = vset.pattern.permute.xlu0 0
        %3702 = vperm.xlu0 %3701, %v3034
        %v3703 = vpop.permute.xlu0 %3702
        %3706 = vset.pattern.permute.xlu0 0
        %3707 = vperm.xlu0 %3706, %v3035
        %v3708 = vpop.permute.xlu0 %3707
        %3711 = vset.pattern.permute.xlu0 0
        %3712 = vperm.xlu0 %3711, %v3036
        %v3713 = vpop.permute.xlu0 %3712
        %3716 = vset.pattern.permute.xlu0 0
        %3717 = vperm.xlu0 %3716, %v3037
        %v3718 = vpop.permute.xlu0 %3717
        %3721 = vset.pattern.permute.xlu0 0
        %3722 = vperm.xlu0 %3721, %v3038
        %v3723 = vpop.permute.xlu0 %3722
        %3726 = vset.pattern.permute.xlu0 0
        %3727 = vperm.xlu0 %3726, %v3039
        %v3728 = vpop.permute.xlu0 %3727
        %3731 = vset.pattern.permute.xlu0 0
        %3732 = vperm.xlu0 %3731, %v3040
        %v3733 = vpop.permute.xlu0 %3732
        %3736 = vset.pattern.permute.xlu0 0
        %3737 = vperm.xlu0 %3736, %v3041
        %v3738 = vpop.permute.xlu0 %3737
        %3741 = vset.pattern.permute.xlu0 0
        %3742 = vperm.xlu0 %3741, %v3042
        %v3743 = vpop.permute.xlu0 %3742
        %3746 = vset.pattern.permute.xlu0 0
        %3747 = vperm.xlu0 %3746, %v3043
        %v3748 = vpop.permute.xlu0 %3747
        %3751 = vset.pattern.permute.xlu0 0
        %3752 = vperm.xlu0 %3751, %v3044
        %v3753 = vpop.permute.xlu0 %3752
        %3756 = vset.pattern.permute.xlu0 0
        %3757 = vperm.xlu0 %3756, %v3045
        %v3758 = vpop.permute.xlu0 %3757
        %3761 = vset.pattern.permute.xlu0 0
        %3762 = vperm.xlu0 %3761, %v3046
        %v3763 = vpop.permute.xlu0 %3762
        %3766 = vset.pattern.permute.xlu0 0
        %3767 = vperm.xlu0 %3766, %v3047
        %v3768 = vpop.permute.xlu0 %3767
        %3771 = vset.pattern.permute.xlu0 0
        %3772 = vperm.xlu0 %3771, %v3048
        %v3773 = vpop.permute.xlu0 %3772
        %3776 = vset.pattern.permute.xlu0 0
        %3777 = vperm.xlu0 %3776, %v3049
        %v3778 = vpop.permute.xlu0 %3777
        %3781 = vset.pattern.permute.xlu0 0
        %3782 = vperm.xlu0 %3781, %v3050
        %v3783 = vpop.permute.xlu0 %3782
        %3786 = vset.pattern.permute.xlu0 0
        %3787 = vperm.xlu0 %3786, %v3051
        %v3788 = vpop.permute.xlu0 %3787
        %3791 = vset.pattern.permute.xlu0 0
        %3792 = vperm.xlu0 %3791, %v3052
        %v3793 = vpop.permute.xlu0 %3792
        %3796 = vset.pattern.permute.xlu0 0
        %3797 = vperm.xlu0 %3796, %v3053
        %v3798 = vpop.permute.xlu0 %3797
        %3801 = vset.pattern.permute.xlu0 0
        %3802 = vperm.xlu0 %3801, %v3054
        %v3803 = vpop.permute.xlu0 %3802
        %v3805 = vmul.f32 %v3558, %v3455
        %v3806 = vmul.f32 %v3558, %v3456
        %v3807 = vmul.f32 %v3563, %v3457
        %v3808 = vmul.f32 %v3563, %v3458
        %v3809 = vmul.f32 %v3568, %v3459
        %v3810 = vmul.f32 %v3568, %v3460
        %v3811 = vmul.f32 %v3573, %v3461
        %v3812 = vmul.f32 %v3573, %v3462
        %v3813 = vmul.f32 %v3578, %v3463
        %v3814 = vmul.f32 %v3578, %v3464
        %v3815 = vmul.f32 %v3583, %v3465
        %v3816 = vmul.f32 %v3583, %v3466
        %v3817 = vmul.f32 %v3588, %v3467
        %v3818 = vmul.f32 %v3588, %v3468
        %v3819 = vmul.f32 %v3593, %v3469
        %v3820 = vmul.f32 %v3593, %v3470
        %v3821 = vmul.f32 %v3598, %v3471
        %v3822 = vmul.f32 %v3598, %v3472
        %v3823 = vmul.f32 %v3603, %v3473
        %v3824 = vmul.f32 %v3603, %v3474
        %v3825 = vmul.f32 %v3608, %v3475
        %v3826 = vmul.f32 %v3608, %v3476
        %v3827 = vmul.f32 %v3613, %v3477
        %v3828 = vmul.f32 %v3613, %v3478
        %v3829 = vmul.f32 %v3618, %v3479
        %v3830 = vmul.f32 %v3618, %v3480
        %v3831 = vmul.f32 %v3623, %v3481
        %v3832 = vmul.f32 %v3623, %v3482
        %v3833 = vmul.f32 %v3628, %v3483
        %v3834 = vmul.f32 %v3628, %v3484
        %v3835 = vmul.f32 %v3633, %v3485
        %v3836 = vmul.f32 %v3633, %v3486
        %v3837 = vmul.f32 %v3638, %v3487
        %v3838 = vmul.f32 %v3638, %v3488
        %v3839 = vmul.f32 %v3643, %v3489
        %v3840 = vmul.f32 %v3643, %v3490
        %v3841 = vmul.f32 %v3648, %v3491
        %v3842 = vmul.f32 %v3648, %v3492
        %v3843 = vmul.f32 %v3653, %v3493
        %v3844 = vmul.f32 %v3653, %v3494
        %v3845 = vmul.f32 %v3658, %v3495
        %v3846 = vmul.f32 %v3658, %v3496
        %v3847 = vmul.f32 %v3663, %v3497
        %v3848 = vmul.f32 %v3663, %v3498
        %v3849 = vmul.f32 %v3668, %v3499
        %v3850 = vmul.f32 %v3668, %v3500
        %v3851 = vmul.f32 %v3673, %v3501
        %v3852 = vmul.f32 %v3673, %v3502
        %v3853 = vmul.f32 %v3678, %v3503
        %v3854 = vmul.f32 %v3678, %v3504
        %v3855 = vmul.f32 %v3683, %v3505
        %v3856 = vmul.f32 %v3683, %v3506
        %v3857 = vmul.f32 %v3688, %v3507
        %v3858 = vmul.f32 %v3688, %v3508
        %v3859 = vmul.f32 %v3693, %v3509
        %v3860 = vmul.f32 %v3693, %v3510
        %v3861 = vmul.f32 %v3698, %v3511
        %v3862 = vmul.f32 %v3698, %v3512
        %v3863 = vmul.f32 %v3703, %v3513
        %v3864 = vmul.f32 %v3703, %v3514
        %v3865 = vmul.f32 %v3708, %v3515
        %v3866 = vmul.f32 %v3708, %v3516
        %v3867 = vmul.f32 %v3713, %v3517
        %v3868 = vmul.f32 %v3713, %v3518
        %v3869 = vmul.f32 %v3718, %v3519
        %v3870 = vmul.f32 %v3718, %v3520
        %v3871 = vmul.f32 %v3723, %v3521
        %v3872 = vmul.f32 %v3723, %v3522
        %v3873 = vmul.f32 %v3728, %v3523
        %v3874 = vmul.f32 %v3728, %v3524
        %v3875 = vmul.f32 %v3733, %v3525
        %v3876 = vmul.f32 %v3733, %v3526
        %v3877 = vmul.f32 %v3738, %v3527
        %v3878 = vmul.f32 %v3738, %v3528
        %v3879 = vmul.f32 %v3743, %v3529
        %v3880 = vmul.f32 %v3743, %v3530
        %v3881 = vmul.f32 %v3748, %v3531
        %v3882 = vmul.f32 %v3748, %v3532
        %v3883 = vmul.f32 %v3753, %v3533
        %v3884 = vmul.f32 %v3753, %v3534
        %v3885 = vmul.f32 %v3758, %v3535
        %v3886 = vmul.f32 %v3758, %v3536
        %v3887 = vmul.f32 %v3763, %v3537
        %v3888 = vmul.f32 %v3763, %v3538
        %v3889 = vmul.f32 %v3768, %v3539
        %v3890 = vmul.f32 %v3768, %v3540
        %v3891 = vmul.f32 %v3773, %v3541
        %v3892 = vmul.f32 %v3773, %v3542
        %v3893 = vmul.f32 %v3778, %v3543
        %v3894 = vmul.f32 %v3778, %v3544
        %v3895 = vmul.f32 %v3783, %v3545
        %v3896 = vmul.f32 %v3783, %v3546
        %v3897 = vmul.f32 %v3788, %v3547
        %v3898 = vmul.f32 %v3788, %v3548
        %v3899 = vmul.f32 %v3793, %v3549
        %v3900 = vmul.f32 %v3793, %v3550
        %v3901 = vmul.f32 %v3798, %v3551
        %v3902 = vmul.f32 %v3798, %v3552
        %v3903 = vmul.f32 %v3803, %v3553
        %v3904 = vmul.f32 %v3803, %v3554
        %v3905 = vpack.c.bf16 %v3807, %v3805
        %v3906 = vpack.c.bf16 %v3808, %v3806
        %v3907 = vpack.c.bf16 %v3811, %v3809
        %v3908 = vpack.c.bf16 %v3812, %v3810
        %v3909 = vpack.c.bf16 %v3815, %v3813
        %v3910 = vpack.c.bf16 %v3816, %v3814
        %v3911 = vpack.c.bf16 %v3819, %v3817
        %v3912 = vpack.c.bf16 %v3820, %v3818
        %v3913 = vpack.c.bf16 %v3823, %v3821
        %v3914 = vpack.c.bf16 %v3824, %v3822
        %v3915 = vpack.c.bf16 %v3827, %v3825
        %v3916 = vpack.c.bf16 %v3828, %v3826
        %v3917 = vpack.c.bf16 %v3831, %v3829
        %v3918 = vpack.c.bf16 %v3832, %v3830
        %v3919 = vpack.c.bf16 %v3835, %v3833
        %v3920 = vpack.c.bf16 %v3836, %v3834
        %v3921 = vpack.c.bf16 %v3839, %v3837
        %v3922 = vpack.c.bf16 %v3840, %v3838
        %v3923 = vpack.c.bf16 %v3843, %v3841
        %v3924 = vpack.c.bf16 %v3844, %v3842
        %v3925 = vpack.c.bf16 %v3847, %v3845
        %v3926 = vpack.c.bf16 %v3848, %v3846
        %v3927 = vpack.c.bf16 %v3851, %v3849
        %v3928 = vpack.c.bf16 %v3852, %v3850
        %v3929 = vpack.c.bf16 %v3855, %v3853
        %v3930 = vpack.c.bf16 %v3856, %v3854
        %v3931 = vpack.c.bf16 %v3859, %v3857
        %v3932 = vpack.c.bf16 %v3860, %v3858
        %v3933 = vpack.c.bf16 %v3863, %v3861
        %v3934 = vpack.c.bf16 %v3864, %v3862
        %v3935 = vpack.c.bf16 %v3867, %v3865
        %v3936 = vpack.c.bf16 %v3868, %v3866
        %v3937 = vpack.c.bf16 %v3871, %v3869
        %v3938 = vpack.c.bf16 %v3872, %v3870
        %v3939 = vpack.c.bf16 %v3875, %v3873
        %v3940 = vpack.c.bf16 %v3876, %v3874
        %v3941 = vpack.c.bf16 %v3879, %v3877
        %v3942 = vpack.c.bf16 %v3880, %v3878
        %v3943 = vpack.c.bf16 %v3883, %v3881
        %v3944 = vpack.c.bf16 %v3884, %v3882
        %v3945 = vpack.c.bf16 %v3887, %v3885
        %v3946 = vpack.c.bf16 %v3888, %v3886
        %v3947 = vpack.c.bf16 %v3891, %v3889
        %v3948 = vpack.c.bf16 %v3892, %v3890
        %v3949 = vpack.c.bf16 %v3895, %v3893
        %v3950 = vpack.c.bf16 %v3896, %v3894
        %v3951 = vpack.c.bf16 %v3899, %v3897
        %v3952 = vpack.c.bf16 %v3900, %v3898
        %v3953 = vpack.c.bf16 %v3903, %v3901
        %v3954 = vpack.c.bf16 %v3904, %v3902
        %v4005 = vunpack.c.l.b16 %v3905
        %v4006 = vunpack.c.l.b16 %v3906
        %v4007 = vunpack.c.h.b16 %v3905
        %v4008 = vunpack.c.h.b16 %v3906
        %v4009 = vunpack.c.l.b16 %v3907
        %v4010 = vunpack.c.l.b16 %v3908
        %v4011 = vunpack.c.h.b16 %v3907
        %v4012 = vunpack.c.h.b16 %v3908
        %v4013 = vunpack.c.l.b16 %v3909
        %v4014 = vunpack.c.l.b16 %v3910
        %v4015 = vunpack.c.h.b16 %v3909
        %v4016 = vunpack.c.h.b16 %v3910
        %v4017 = vunpack.c.l.b16 %v3911
        %v4018 = vunpack.c.l.b16 %v3912
        %v4019 = vunpack.c.h.b16 %v3911
        %v4020 = vunpack.c.h.b16 %v3912
        %v4021 = vunpack.c.l.b16 %v3913
        %v4022 = vunpack.c.l.b16 %v3914
        %v4023 = vunpack.c.h.b16 %v3913
        %v4024 = vunpack.c.h.b16 %v3914
        %v4025 = vunpack.c.l.b16 %v3915
        %v4026 = vunpack.c.l.b16 %v3916
        %v4027 = vunpack.c.h.b16 %v3915
        %v4028 = vunpack.c.h.b16 %v3916
        %v4029 = vunpack.c.l.b16 %v3917
        %v4030 = vunpack.c.l.b16 %v3918
        %v4031 = vunpack.c.h.b16 %v3917
        %v4032 = vunpack.c.h.b16 %v3918
        %v4033 = vunpack.c.l.b16 %v3919
        %v4034 = vunpack.c.l.b16 %v3920
        %v4035 = vunpack.c.h.b16 %v3919
        %v4036 = vunpack.c.h.b16 %v3920
        %v4037 = vunpack.c.l.b16 %v3921
        %v4038 = vunpack.c.l.b16 %v3922
        %v4039 = vunpack.c.h.b16 %v3921
        %v4040 = vunpack.c.h.b16 %v3922
        %v4041 = vunpack.c.l.b16 %v3923
        %v4042 = vunpack.c.l.b16 %v3924
        %v4043 = vunpack.c.h.b16 %v3923
        %v4044 = vunpack.c.h.b16 %v3924
        %v4045 = vunpack.c.l.b16 %v3925
        %v4046 = vunpack.c.l.b16 %v3926
        %v4047 = vunpack.c.h.b16 %v3925
        %v4048 = vunpack.c.h.b16 %v3926
        %v4049 = vunpack.c.l.b16 %v3927
        %v4050 = vunpack.c.l.b16 %v3928
        %v4051 = vunpack.c.h.b16 %v3927
        %v4052 = vunpack.c.h.b16 %v3928
        %v4053 = vunpack.c.l.b16 %v3929
        %v4054 = vunpack.c.l.b16 %v3930
        %v4055 = vunpack.c.h.b16 %v3929
        %v4056 = vunpack.c.h.b16 %v3930
        %v4057 = vunpack.c.l.b16 %v3931
        %v4058 = vunpack.c.l.b16 %v3932
        %v4059 = vunpack.c.h.b16 %v3931
        %v4060 = vunpack.c.h.b16 %v3932
        %v4061 = vunpack.c.l.b16 %v3933
        %v4062 = vunpack.c.l.b16 %v3934
        %v4063 = vunpack.c.h.b16 %v3933
        %v4064 = vunpack.c.h.b16 %v3934
        %v4065 = vunpack.c.l.b16 %v3935
        %v4066 = vunpack.c.l.b16 %v3936
        %v4067 = vunpack.c.h.b16 %v3935
        %v4068 = vunpack.c.h.b16 %v3936
        %v4069 = vunpack.c.l.b16 %v3937
        %v4070 = vunpack.c.l.b16 %v3938
        %v4071 = vunpack.c.h.b16 %v3937
        %v4072 = vunpack.c.h.b16 %v3938
        %v4073 = vunpack.c.l.b16 %v3939
        %v4074 = vunpack.c.l.b16 %v3940
        %v4075 = vunpack.c.h.b16 %v3939
        %v4076 = vunpack.c.h.b16 %v3940
        %v4077 = vunpack.c.l.b16 %v3941
        %v4078 = vunpack.c.l.b16 %v3942
        %v4079 = vunpack.c.h.b16 %v3941
        %v4080 = vunpack.c.h.b16 %v3942
        %v4081 = vunpack.c.l.b16 %v3943
        %v4082 = vunpack.c.l.b16 %v3944
        %v4083 = vunpack.c.h.b16 %v3943
        %v4084 = vunpack.c.h.b16 %v3944
        %v4085 = vunpack.c.l.b16 %v3945
        %v4086 = vunpack.c.l.b16 %v3946
        %v4087 = vunpack.c.h.b16 %v3945
        %v4088 = vunpack.c.h.b16 %v3946
        %v4089 = vunpack.c.l.b16 %v3947
        %v4090 = vunpack.c.l.b16 %v3948
        %v4091 = vunpack.c.h.b16 %v3947
        %v4092 = vunpack.c.h.b16 %v3948
        %v4093 = vunpack.c.l.b16 %v3949
        %v4094 = vunpack.c.l.b16 %v3950
        %v4095 = vunpack.c.h.b16 %v3949
        %v4096 = vunpack.c.h.b16 %v3950
        %v4097 = vunpack.c.l.b16 %v3951
        %v4098 = vunpack.c.l.b16 %v3952
        %v4099 = vunpack.c.h.b16 %v3951
        %v4100 = vunpack.c.h.b16 %v3952
        %v4101 = vunpack.c.l.b16 %v3953
        %v4102 = vunpack.c.l.b16 %v3954
        %v4103 = vunpack.c.h.b16 %v3953
        %v4104 = vunpack.c.h.b16 %v3954
        %v4105 = vpack.c.b16 %v4006, %v4005
        %v4106 = vpack.c.b16 %v4008, %v4007
        %v4107 = vpack.c.b16 %v4010, %v4009
        %v4108 = vpack.c.b16 %v4012, %v4011
        %v4109 = vpack.c.b16 %v4014, %v4013
        %v4110 = vpack.c.b16 %v4016, %v4015
        %v4111 = vpack.c.b16 %v4018, %v4017
        %v4112 = vpack.c.b16 %v4020, %v4019
        %v4113 = vpack.c.b16 %v4022, %v4021
        %v4114 = vpack.c.b16 %v4024, %v4023
        %v4115 = vpack.c.b16 %v4026, %v4025
        %v4116 = vpack.c.b16 %v4028, %v4027
        %v4117 = vpack.c.b16 %v4030, %v4029
        %v4118 = vpack.c.b16 %v4032, %v4031
        %v4119 = vpack.c.b16 %v4034, %v4033
        %v4120 = vpack.c.b16 %v4036, %v4035
        %v4121 = vpack.c.b16 %v4038, %v4037
        %v4122 = vpack.c.b16 %v4040, %v4039
        %v4123 = vpack.c.b16 %v4042, %v4041
        %v4124 = vpack.c.b16 %v4044, %v4043
        %v4125 = vpack.c.b16 %v4046, %v4045
        %v4126 = vpack.c.b16 %v4048, %v4047
        %v4127 = vpack.c.b16 %v4050, %v4049
        %v4128 = vpack.c.b16 %v4052, %v4051
        %v4129 = vpack.c.b16 %v4054, %v4053
        %v4130 = vpack.c.b16 %v4056, %v4055
        %v4131 = vpack.c.b16 %v4058, %v4057
        %v4132 = vpack.c.b16 %v4060, %v4059
        %v4133 = vpack.c.b16 %v4062, %v4061
        %v4134 = vpack.c.b16 %v4064, %v4063
        %v4135 = vpack.c.b16 %v4066, %v4065
        %v4136 = vpack.c.b16 %v4068, %v4067
        %v4137 = vpack.c.b16 %v4070, %v4069
        %v4138 = vpack.c.b16 %v4072, %v4071
        %v4139 = vpack.c.b16 %v4074, %v4073
        %v4140 = vpack.c.b16 %v4076, %v4075
        %v4141 = vpack.c.b16 %v4078, %v4077
        %v4142 = vpack.c.b16 %v4080, %v4079
        %v4143 = vpack.c.b16 %v4082, %v4081
        %v4144 = vpack.c.b16 %v4084, %v4083
        %v4145 = vpack.c.b16 %v4086, %v4085
        %v4146 = vpack.c.b16 %v4088, %v4087
        %v4147 = vpack.c.b16 %v4090, %v4089
        %v4148 = vpack.c.b16 %v4092, %v4091
        %v4149 = vpack.c.b16 %v4094, %v4093
        %v4150 = vpack.c.b16 %v4096, %v4095
        %v4151 = vpack.c.b16 %v4098, %v4097
        %v4152 = vpack.c.b16 %v4100, %v4099
        %v4153 = vpack.c.b16 %v4102, %v4101
        %v4154 = vpack.c.b16 %v4104, %v4103
        %4205 = vst [vmem:[%s600] sm:$0xff] %v4105
        %4206 = vst [vmem:[%s600 + $0x8] sm:$0xff] %v4106
        %4207 = vst [vmem:[%s600 + $0x10] sm:$0xff] %v4107
        %4208 = vst [vmem:[%s600 + $0x18] sm:$0xff] %v4108
        %4209 = vst [vmem:[%s600 + $0x20] sm:$0xff] %v4109
        %4210 = vst [vmem:[%s600 + $0x28] sm:$0xff] %v4110
        %4211 = vst [vmem:[%s600 + $0x30] sm:$0xff] %v4111
        %4212 = vst [vmem:[%s600 + $0x38] sm:$0xff] %v4112
        %4213 = vst [vmem:[%s600 + $0x40] sm:$0xff] %v4113
        %4214 = vst [vmem:[%s600 + $0x48] sm:$0xff] %v4114
        %4215 = vst [vmem:[%s600 + $0x50] sm:$0xff] %v4115
        %4216 = vst [vmem:[%s600 + $0x58] sm:$0xff] %v4116
        %4217 = vst [vmem:[%s600 + $0x60] sm:$0xff] %v4117
        %4218 = vst [vmem:[%s600 + $0x68] sm:$0xff] %v4118
        %4219 = vst [vmem:[%s600 + $0x70] sm:$0xff] %v4119
        %4220 = vst [vmem:[%s600 + $0x78] sm:$0xff] %v4120
        %4221 = vst [vmem:[%s600 + $0x80] sm:$0xff] %v4121
        %4222 = vst [vmem:[%s600 + $0x88] sm:$0xff] %v4122
        %4223 = vst [vmem:[%s600 + $0x90] sm:$0xff] %v4123
        %4224 = vst [vmem:[%s600 + $0x98] sm:$0xff] %v4124
        %4225 = vst [vmem:[%s600 + $0xa0] sm:$0xff] %v4125
        %4226 = vst [vmem:[%s600 + $0xa8] sm:$0xff] %v4126
        %4227 = vst [vmem:[%s600 + $0xb0] sm:$0xff] %v4127
        %4228 = vst [vmem:[%s600 + $0xb8] sm:$0xff] %v4128
        %4229 = vst [vmem:[%s600 + $0xc0] sm:$0xff] %v4129
        %4230 = vst [vmem:[%s600 + $0xc8] sm:$0xff] %v4130
        %4231 = vst [vmem:[%s600 + $0xd0] sm:$0xff] %v4131
        %4232 = vst [vmem:[%s600 + $0xd8] sm:$0xff] %v4132
        %4233 = vst [vmem:[%s600 + $0xe0] sm:$0xff] %v4133
        %4234 = vst [vmem:[%s600 + $0xe8] sm:$0xff] %v4134
        %4235 = vst [vmem:[%s600 + $0xf0] sm:$0xff] %v4135
        %4236 = vst [vmem:[%s600 + $0xf8] sm:$0xff] %v4136
        %4237 = vst [vmem:[%s600 + $0x100] sm:$0xff] %v4137
        %4238 = vst [vmem:[%s600 + $0x108] sm:$0xff] %v4138
        %4239 = vst [vmem:[%s600 + $0x110] sm:$0xff] %v4139
        %4240 = vst [vmem:[%s600 + $0x118] sm:$0xff] %v4140
        %4241 = vst [vmem:[%s600 + $0x120] sm:$0xff] %v4141
        %4242 = vst [vmem:[%s600 + $0x128] sm:$0xff] %v4142
        %4243 = vst [vmem:[%s600 + $0x130] sm:$0xff] %v4143
        %4244 = vst [vmem:[%s600 + $0x138] sm:$0xff] %v4144
        %4245 = vst [vmem:[%s600 + $0x140] sm:$0xff] %v4145
        %4246 = vst [vmem:[%s600 + $0x148] sm:$0xff] %v4146
        %4247 = vst [vmem:[%s600 + $0x150] sm:$0xff] %v4147
        %4248 = vst [vmem:[%s600 + $0x158] sm:$0xff] %v4148
        %4249 = vst [vmem:[%s600 + $0x160] sm:$0xff] %v4149
        %4250 = vst [vmem:[%s600 + $0x168] sm:$0xff] %v4150
        %4251 = vst [vmem:[%s600 + $0x170] sm:$0xff] %v4151
        %4252 = vst [vmem:[%s600 + $0x178] sm:$0xff] %v4152
        %4253 = vst [vmem:[%s600 + $0x180] sm:$0xff] %v4153
        %4254 = vst [vmem:[%s600 + $0x188] sm:$0xff] %v4154
        %v4255 = vld [vmem:[%s638] sm:$0xf]
        %v4256 = vld [vmem:[%s638 + $0x4] sm:$0xf]
        %v4257 = vld [vmem:[%s638 + $0x8] sm:$0xf]
        %v4258 = vld [vmem:[%s638 + $0xc] sm:$0xf]
        %v4259 = vld [vmem:[%s638 + $0x10] sm:$0xf]
        %v4260 = vld [vmem:[%s638 + $0x14] sm:$0xf]
        %v4261 = vld [vmem:[%s638 + $0x18] sm:$0xf]
        %v4262 = vld [vmem:[%s638 + $0x1c] sm:$0xf]
        %v4263 = vld [vmem:[%s638 + $0x20] sm:$0xf]
        %v4264 = vld [vmem:[%s638 + $0x24] sm:$0xf]
        %v4265 = vld [vmem:[%s638 + $0x28] sm:$0xf]
        %v4266 = vld [vmem:[%s638 + $0x2c] sm:$0xf]
        %v4267 = vld [vmem:[%s638 + $0x30] sm:$0xf]
        %v4268 = vld [vmem:[%s638 + $0x34] sm:$0xf]
        %v4269 = vld [vmem:[%s638 + $0x38] sm:$0xf]
        %v4270 = vld [vmem:[%s638 + $0x3c] sm:$0xf]
        %v4271 = vld [vmem:[%s638 + $0x40] sm:$0xf]
        %v4272 = vld [vmem:[%s638 + $0x44] sm:$0xf]
        %v4273 = vld [vmem:[%s638 + $0x48] sm:$0xf]
        %v4274 = vld [vmem:[%s638 + $0x4c] sm:$0xf]
        %v4275 = vld [vmem:[%s638 + $0x50] sm:$0xf]
        %v4276 = vld [vmem:[%s638 + $0x54] sm:$0xf]
        %v4277 = vld [vmem:[%s638 + $0x58] sm:$0xf]
        %v4278 = vld [vmem:[%s638 + $0x5c] sm:$0xf]
        %v4279 = vld [vmem:[%s638 + $0x60] sm:$0xf]
        %v4280 = vld [vmem:[%s638 + $0x64] sm:$0xf]
        %v4281 = vld [vmem:[%s638 + $0x68] sm:$0xf]
        %v4282 = vld [vmem:[%s638 + $0x6c] sm:$0xf]
        %v4283 = vld [vmem:[%s638 + $0x70] sm:$0xf]
        %v4284 = vld [vmem:[%s638 + $0x74] sm:$0xf]
        %v4285 = vld [vmem:[%s638 + $0x78] sm:$0xf]
        %v4286 = vld [vmem:[%s638 + $0x7c] sm:$0xf]
        %v4287 = vld [vmem:[%s638 + $0x80] sm:$0xf]
        %v4288 = vld [vmem:[%s638 + $0x84] sm:$0xf]
        %v4289 = vld [vmem:[%s638 + $0x88] sm:$0xf]
        %v4290 = vld [vmem:[%s638 + $0x8c] sm:$0xf]
        %v4291 = vld [vmem:[%s638 + $0x90] sm:$0xf]
        %v4292 = vld [vmem:[%s638 + $0x94] sm:$0xf]
        %v4293 = vld [vmem:[%s638 + $0x98] sm:$0xf]
        %v4294 = vld [vmem:[%s638 + $0x9c] sm:$0xf]
        %v4295 = vld [vmem:[%s638 + $0xa0] sm:$0xf]
        %v4296 = vld [vmem:[%s638 + $0xa4] sm:$0xf]
        %v4297 = vld [vmem:[%s638 + $0xa8] sm:$0xf]
        %v4298 = vld [vmem:[%s638 + $0xac] sm:$0xf]
        %v4299 = vld [vmem:[%s638 + $0xb0] sm:$0xf]
        %v4300 = vld [vmem:[%s638 + $0xb4] sm:$0xf]
        %v4301 = vld [vmem:[%s638 + $0xb8] sm:$0xf]
        %v4302 = vld [vmem:[%s638 + $0xbc] sm:$0xf]
        %v4303 = vld [vmem:[%s638 + $0xc0] sm:$0xf]
        %v4304 = vld [vmem:[%s638 + $0xc4] sm:$0xf]
        %v4305 = vunpack.c.l.bf16 %v4255
        %v4306 = vunpack.c.l.bf16 %v4256
        %v4307 = vunpack.c.l.bf16 %v4257
        %v4308 = vunpack.c.l.bf16 %v4258
        %v4309 = vunpack.c.l.bf16 %v4259
        %v4310 = vunpack.c.l.bf16 %v4260
        %v4311 = vunpack.c.l.bf16 %v4261
        %v4312 = vunpack.c.l.bf16 %v4262
        %v4313 = vunpack.c.l.bf16 %v4263
        %v4314 = vunpack.c.l.bf16 %v4264
        %v4315 = vunpack.c.l.bf16 %v4265
        %v4316 = vunpack.c.l.bf16 %v4266
        %v4317 = vunpack.c.l.bf16 %v4267
        %v4318 = vunpack.c.l.bf16 %v4268
        %v4319 = vunpack.c.l.bf16 %v4269
        %v4320 = vunpack.c.l.bf16 %v4270
        %v4321 = vunpack.c.l.bf16 %v4271
        %v4322 = vunpack.c.l.bf16 %v4272
        %v4323 = vunpack.c.l.bf16 %v4273
        %v4324 = vunpack.c.l.bf16 %v4274
        %v4325 = vunpack.c.l.bf16 %v4275
        %v4326 = vunpack.c.l.bf16 %v4276
        %v4327 = vunpack.c.l.bf16 %v4277
        %v4328 = vunpack.c.l.bf16 %v4278
        %v4329 = vunpack.c.l.bf16 %v4279
        %v4330 = vunpack.c.l.bf16 %v4280
        %v4331 = vunpack.c.l.bf16 %v4281
        %v4332 = vunpack.c.l.bf16 %v4282
        %v4333 = vunpack.c.l.bf16 %v4283
        %v4334 = vunpack.c.l.bf16 %v4284
        %v4335 = vunpack.c.l.bf16 %v4285
        %v4336 = vunpack.c.l.bf16 %v4286
        %v4337 = vunpack.c.l.bf16 %v4287
        %v4338 = vunpack.c.l.bf16 %v4288
        %v4339 = vunpack.c.l.bf16 %v4289
        %v4340 = vunpack.c.l.bf16 %v4290
        %v4341 = vunpack.c.l.bf16 %v4291
        %v4342 = vunpack.c.l.bf16 %v4292
        %v4343 = vunpack.c.l.bf16 %v4293
        %v4344 = vunpack.c.l.bf16 %v4294
        %v4345 = vunpack.c.l.bf16 %v4295
        %v4346 = vunpack.c.l.bf16 %v4296
        %v4347 = vunpack.c.l.bf16 %v4297
        %v4348 = vunpack.c.l.bf16 %v4298
        %v4349 = vunpack.c.l.bf16 %v4299
        %v4350 = vunpack.c.l.bf16 %v4300
        %v4351 = vunpack.c.l.bf16 %v4301
        %v4352 = vunpack.c.l.bf16 %v4302
        %v4353 = vunpack.c.l.bf16 %v4303
        %v4354 = vunpack.c.l.bf16 %v4304
        %v4355 = vmul.f32 %v4305, 2.0
        %v4356 = vmul.f32 %v4306, 2.0
        %v4357 = vmul.f32 %v4307, 2.0
        %v4358 = vmul.f32 %v4308, 2.0
        %v4359 = vmul.f32 %v4309, 2.0
        %v4360 = vmul.f32 %v4310, 2.0
        %v4361 = vmul.f32 %v4311, 2.0
        %v4362 = vmul.f32 %v4312, 2.0
        %v4363 = vmul.f32 %v4313, 2.0
        %v4364 = vmul.f32 %v4314, 2.0
        %v4365 = vmul.f32 %v4315, 2.0
        %v4366 = vmul.f32 %v4316, 2.0
        %v4367 = vmul.f32 %v4317, 2.0
        %v4368 = vmul.f32 %v4318, 2.0
        %v4369 = vmul.f32 %v4319, 2.0
        %v4370 = vmul.f32 %v4320, 2.0
        %v4371 = vmul.f32 %v4321, 2.0
        %v4372 = vmul.f32 %v4322, 2.0
        %v4373 = vmul.f32 %v4323, 2.0
        %v4374 = vmul.f32 %v4324, 2.0
        %v4375 = vmul.f32 %v4325, 2.0
        %v4376 = vmul.f32 %v4326, 2.0
        %v4377 = vmul.f32 %v4327, 2.0
        %v4378 = vmul.f32 %v4328, 2.0
        %v4379 = vmul.f32 %v4329, 2.0
        %v4380 = vmul.f32 %v4330, 2.0
        %v4381 = vmul.f32 %v4331, 2.0
        %v4382 = vmul.f32 %v4332, 2.0
        %v4383 = vmul.f32 %v4333, 2.0
        %v4384 = vmul.f32 %v4334, 2.0
        %v4385 = vmul.f32 %v4335, 2.0
        %v4386 = vmul.f32 %v4336, 2.0
        %v4387 = vmul.f32 %v4337, 2.0
        %v4388 = vmul.f32 %v4338, 2.0
        %v4389 = vmul.f32 %v4339, 2.0
        %v4390 = vmul.f32 %v4340, 2.0
        %v4391 = vmul.f32 %v4341, 2.0
        %v4392 = vmul.f32 %v4342, 2.0
        %v4393 = vmul.f32 %v4343, 2.0
        %v4394 = vmul.f32 %v4344, 2.0
        %v4395 = vmul.f32 %v4345, 2.0
        %v4396 = vmul.f32 %v4346, 2.0
        %v4397 = vmul.f32 %v4347, 2.0
        %v4398 = vmul.f32 %v4348, 2.0
        %v4399 = vmul.f32 %v4349, 2.0
        %v4400 = vmul.f32 %v4350, 2.0
        %v4401 = vmul.f32 %v4351, 2.0
        %v4402 = vmul.f32 %v4352, 2.0
        %v4403 = vmul.f32 %v4353, 2.0
        %v4404 = vmul.f32 %v4354, 2.0
        %v4405 = vld [vmem:[%s644] sm:$0xf]
        %v4406 = vld [vmem:[%s644 + $0x4] sm:$0xf]
        %v4407 = vld [vmem:[%s644 + $0x8] sm:$0xf]
        %v4408 = vld [vmem:[%s644 + $0xc] sm:$0xf]
        %v4409 = vld [vmem:[%s644 + $0x10] sm:$0xf]
        %v4410 = vld [vmem:[%s644 + $0x14] sm:$0xf]
        %v4411 = vld [vmem:[%s644 + $0x18] sm:$0xf]
        %v4412 = vld [vmem:[%s644 + $0x1c] sm:$0xf]
        %v4413 = vld [vmem:[%s644 + $0x20] sm:$0xf]
        %v4414 = vld [vmem:[%s644 + $0x24] sm:$0xf]
        %v4415 = vld [vmem:[%s644 + $0x28] sm:$0xf]
        %v4416 = vld [vmem:[%s644 + $0x2c] sm:$0xf]
        %v4417 = vld [vmem:[%s644 + $0x30] sm:$0xf]
        %v4418 = vld [vmem:[%s644 + $0x34] sm:$0xf]
        %v4419 = vld [vmem:[%s644 + $0x38] sm:$0xf]
        %v4420 = vld [vmem:[%s644 + $0x3c] sm:$0xf]
        %v4421 = vld [vmem:[%s644 + $0x40] sm:$0xf]
        %v4422 = vld [vmem:[%s644 + $0x44] sm:$0xf]
        %v4423 = vld [vmem:[%s644 + $0x48] sm:$0xf]
        %v4424 = vld [vmem:[%s644 + $0x4c] sm:$0xf]
        %v4425 = vld [vmem:[%s644 + $0x50] sm:$0xf]
        %v4426 = vld [vmem:[%s644 + $0x54] sm:$0xf]
        %v4427 = vld [vmem:[%s644 + $0x58] sm:$0xf]
        %v4428 = vld [vmem:[%s644 + $0x5c] sm:$0xf]
        %v4429 = vld [vmem:[%s644 + $0x60] sm:$0xf]
        %v4430 = vld [vmem:[%s644 + $0x64] sm:$0xf]
        %v4431 = vld [vmem:[%s644 + $0x68] sm:$0xf]
        %v4432 = vld [vmem:[%s644 + $0x6c] sm:$0xf]
        %v4433 = vld [vmem:[%s644 + $0x70] sm:$0xf]
        %v4434 = vld [vmem:[%s644 + $0x74] sm:$0xf]
        %v4435 = vld [vmem:[%s644 + $0x78] sm:$0xf]
        %v4436 = vld [vmem:[%s644 + $0x7c] sm:$0xf]
        %v4437 = vld [vmem:[%s644 + $0x80] sm:$0xf]
        %v4438 = vld [vmem:[%s644 + $0x84] sm:$0xf]
        %v4439 = vld [vmem:[%s644 + $0x88] sm:$0xf]
        %v4440 = vld [vmem:[%s644 + $0x8c] sm:$0xf]
        %v4441 = vld [vmem:[%s644 + $0x90] sm:$0xf]
        %v4442 = vld [vmem:[%s644 + $0x94] sm:$0xf]
        %v4443 = vld [vmem:[%s644 + $0x98] sm:$0xf]
        %v4444 = vld [vmem:[%s644 + $0x9c] sm:$0xf]
        %v4445 = vld [vmem:[%s644 + $0xa0] sm:$0xf]
        %v4446 = vld [vmem:[%s644 + $0xa4] sm:$0xf]
        %v4447 = vld [vmem:[%s644 + $0xa8] sm:$0xf]
        %v4448 = vld [vmem:[%s644 + $0xac] sm:$0xf]
        %v4449 = vld [vmem:[%s644 + $0xb0] sm:$0xf]
        %v4450 = vld [vmem:[%s644 + $0xb4] sm:$0xf]
        %v4451 = vld [vmem:[%s644 + $0xb8] sm:$0xf]
        %v4452 = vld [vmem:[%s644 + $0xbc] sm:$0xf]
        %v4453 = vld [vmem:[%s644 + $0xc0] sm:$0xf]
        %v4454 = vld [vmem:[%s644 + $0xc4] sm:$0xf]
        %v4455 = vunpack.c.l.bf16 %v4405
        %v4456 = vunpack.c.l.bf16 %v4406
        %v4457 = vunpack.c.l.bf16 %v4407
        %v4458 = vunpack.c.l.bf16 %v4408
        %v4459 = vunpack.c.l.bf16 %v4409
        %v4460 = vunpack.c.l.bf16 %v4410
        %v4461 = vunpack.c.l.bf16 %v4411
        %v4462 = vunpack.c.l.bf16 %v4412
        %v4463 = vunpack.c.l.bf16 %v4413
        %v4464 = vunpack.c.l.bf16 %v4414
        %v4465 = vunpack.c.l.bf16 %v4415
        %v4466 = vunpack.c.l.bf16 %v4416
        %v4467 = vunpack.c.l.bf16 %v4417
        %v4468 = vunpack.c.l.bf16 %v4418
        %v4469 = vunpack.c.l.bf16 %v4419
        %v4470 = vunpack.c.l.bf16 %v4420
        %v4471 = vunpack.c.l.bf16 %v4421
        %v4472 = vunpack.c.l.bf16 %v4422
        %v4473 = vunpack.c.l.bf16 %v4423
        %v4474 = vunpack.c.l.bf16 %v4424
        %v4475 = vunpack.c.l.bf16 %v4425
        %v4476 = vunpack.c.l.bf16 %v4426
        %v4477 = vunpack.c.l.bf16 %v4427
        %v4478 = vunpack.c.l.bf16 %v4428
        %v4479 = vunpack.c.l.bf16 %v4429
        %v4480 = vunpack.c.l.bf16 %v4430
        %v4481 = vunpack.c.l.bf16 %v4431
        %v4482 = vunpack.c.l.bf16 %v4432
        %v4483 = vunpack.c.l.bf16 %v4433
        %v4484 = vunpack.c.l.bf16 %v4434
        %v4485 = vunpack.c.l.bf16 %v4435
        %v4486 = vunpack.c.l.bf16 %v4436
        %v4487 = vunpack.c.l.bf16 %v4437
        %v4488 = vunpack.c.l.bf16 %v4438
        %v4489 = vunpack.c.l.bf16 %v4439
        %v4490 = vunpack.c.l.bf16 %v4440
        %v4491 = vunpack.c.l.bf16 %v4441
        %v4492 = vunpack.c.l.bf16 %v4442
        %v4493 = vunpack.c.l.bf16 %v4443
        %v4494 = vunpack.c.l.bf16 %v4444
        %v4495 = vunpack.c.l.bf16 %v4445
        %v4496 = vunpack.c.l.bf16 %v4446
        %v4497 = vunpack.c.l.bf16 %v4447
        %v4498 = vunpack.c.l.bf16 %v4448
        %v4499 = vunpack.c.l.bf16 %v4449
        %v4500 = vunpack.c.l.bf16 %v4450
        %v4501 = vunpack.c.l.bf16 %v4451
        %v4502 = vunpack.c.l.bf16 %v4452
        %v4503 = vunpack.c.l.bf16 %v4453
        %v4504 = vunpack.c.l.bf16 %v4454
        %v4505 = vsub.f32 %v4355, %v4455
        %v4506 = vsub.f32 %v4356, %v4456
        %v4507 = vsub.f32 %v4357, %v4457
        %v4508 = vsub.f32 %v4358, %v4458
        %v4509 = vsub.f32 %v4359, %v4459
        %v4510 = vsub.f32 %v4360, %v4460
        %v4511 = vsub.f32 %v4361, %v4461
        %v4512 = vsub.f32 %v4362, %v4462
        %v4513 = vsub.f32 %v4363, %v4463
        %v4514 = vsub.f32 %v4364, %v4464
        %v4515 = vsub.f32 %v4365, %v4465
        %v4516 = vsub.f32 %v4366, %v4466
        %v4517 = vsub.f32 %v4367, %v4467
        %v4518 = vsub.f32 %v4368, %v4468
        %v4519 = vsub.f32 %v4369, %v4469
        %v4520 = vsub.f32 %v4370, %v4470
        %v4521 = vsub.f32 %v4371, %v4471
        %v4522 = vsub.f32 %v4372, %v4472
        %v4523 = vsub.f32 %v4373, %v4473
        %v4524 = vsub.f32 %v4374, %v4474
        %v4525 = vsub.f32 %v4375, %v4475
        %v4526 = vsub.f32 %v4376, %v4476
        %v4527 = vsub.f32 %v4377, %v4477
        %v4528 = vsub.f32 %v4378, %v4478
        %v4529 = vsub.f32 %v4379, %v4479
        %v4530 = vsub.f32 %v4380, %v4480
        %v4531 = vsub.f32 %v4381, %v4481
        %v4532 = vsub.f32 %v4382, %v4482
        %v4533 = vsub.f32 %v4383, %v4483
        %v4534 = vsub.f32 %v4384, %v4484
        %v4535 = vsub.f32 %v4385, %v4485
        %v4536 = vsub.f32 %v4386, %v4486
        %v4537 = vsub.f32 %v4387, %v4487
        %v4538 = vsub.f32 %v4388, %v4488
        %v4539 = vsub.f32 %v4389, %v4489
        %v4540 = vsub.f32 %v4390, %v4490
        %v4541 = vsub.f32 %v4391, %v4491
        %v4542 = vsub.f32 %v4392, %v4492
        %v4543 = vsub.f32 %v4393, %v4493
        %v4544 = vsub.f32 %v4394, %v4494
        %v4545 = vsub.f32 %v4395, %v4495
        %v4546 = vsub.f32 %v4396, %v4496
        %v4547 = vsub.f32 %v4397, %v4497
        %v4548 = vsub.f32 %v4398, %v4498
        %v4549 = vsub.f32 %v4399, %v4499
        %v4550 = vsub.f32 %v4400, %v4500
        %v4551 = vsub.f32 %v4401, %v4501
        %v4552 = vsub.f32 %v4402, %v4502
        %v4553 = vsub.f32 %v4403, %v4503
        %v4554 = vsub.f32 %v4404, %v4504
        %v4555 = vpack.c.bf16 %v4506, %v4505
        %v4556 = vpack.c.bf16 %v4508, %v4507
        %v4557 = vpack.c.bf16 %v4510, %v4509
        %v4558 = vpack.c.bf16 %v4512, %v4511
        %v4559 = vpack.c.bf16 %v4514, %v4513
        %v4560 = vpack.c.bf16 %v4516, %v4515
        %v4561 = vpack.c.bf16 %v4518, %v4517
        %v4562 = vpack.c.bf16 %v4520, %v4519
        %v4563 = vpack.c.bf16 %v4522, %v4521
        %v4564 = vpack.c.bf16 %v4524, %v4523
        %v4565 = vpack.c.bf16 %v4526, %v4525
        %v4566 = vpack.c.bf16 %v4528, %v4527
        %v4567 = vpack.c.bf16 %v4530, %v4529
        %v4568 = vpack.c.bf16 %v4532, %v4531
        %v4569 = vpack.c.bf16 %v4534, %v4533
        %v4570 = vpack.c.bf16 %v4536, %v4535
        %v4571 = vpack.c.bf16 %v4538, %v4537
        %v4572 = vpack.c.bf16 %v4540, %v4539
        %v4573 = vpack.c.bf16 %v4542, %v4541
        %v4574 = vpack.c.bf16 %v4544, %v4543
        %v4575 = vpack.c.bf16 %v4546, %v4545
        %v4576 = vpack.c.bf16 %v4548, %v4547
        %v4577 = vpack.c.bf16 %v4550, %v4549
        %v4578 = vpack.c.bf16 %v4552, %v4551
        %v4579 = vpack.c.bf16 %v4554, %v4553
        %v4605 = vunpack.c.l.b16 %v4555
        %v4606 = vunpack.c.h.b16 %v4555
        %v4607 = vunpack.c.l.b16 %v4556
        %v4608 = vunpack.c.h.b16 %v4556
        %v4609 = vunpack.c.l.b16 %v4557
        %v4610 = vunpack.c.h.b16 %v4557
        %v4611 = vunpack.c.l.b16 %v4558
        %v4612 = vunpack.c.h.b16 %v4558
        %v4613 = vunpack.c.l.b16 %v4559
        %v4614 = vunpack.c.h.b16 %v4559
        %v4615 = vunpack.c.l.b16 %v4560
        %v4616 = vunpack.c.h.b16 %v4560
        %v4617 = vunpack.c.l.b16 %v4561
        %v4618 = vunpack.c.h.b16 %v4561
        %v4619 = vunpack.c.l.b16 %v4562
        %v4620 = vunpack.c.h.b16 %v4562
        %v4621 = vunpack.c.l.b16 %v4563
        %v4622 = vunpack.c.h.b16 %v4563
        %v4623 = vunpack.c.l.b16 %v4564
        %v4624 = vunpack.c.h.b16 %v4564
        %v4625 = vunpack.c.l.b16 %v4565
        %v4626 = vunpack.c.h.b16 %v4565
        %v4627 = vunpack.c.l.b16 %v4566
        %v4628 = vunpack.c.h.b16 %v4566
        %v4629 = vunpack.c.l.b16 %v4567
        %v4630 = vunpack.c.h.b16 %v4567
        %v4631 = vunpack.c.l.b16 %v4568
        %v4632 = vunpack.c.h.b16 %v4568
        %v4633 = vunpack.c.l.b16 %v4569
        %v4634 = vunpack.c.h.b16 %v4569
        %v4635 = vunpack.c.l.b16 %v4570
        %v4636 = vunpack.c.h.b16 %v4570
        %v4637 = vunpack.c.l.b16 %v4571
        %v4638 = vunpack.c.h.b16 %v4571
        %v4639 = vunpack.c.l.b16 %v4572
        %v4640 = vunpack.c.h.b16 %v4572
        %v4641 = vunpack.c.l.b16 %v4573
        %v4642 = vunpack.c.h.b16 %v4573
        %v4643 = vunpack.c.l.b16 %v4574
        %v4644 = vunpack.c.h.b16 %v4574
        %v4645 = vunpack.c.l.b16 %v4575
        %v4646 = vunpack.c.h.b16 %v4575
        %v4647 = vunpack.c.l.b16 %v4576
        %v4648 = vunpack.c.h.b16 %v4576
        %v4649 = vunpack.c.l.b16 %v4577
        %v4650 = vunpack.c.h.b16 %v4577
        %v4651 = vunpack.c.l.b16 %v4578
        %v4652 = vunpack.c.h.b16 %v4578
        %v4653 = vunpack.c.l.b16 %v4579
        %v4654 = vunpack.c.h.b16 %v4579
        %v4655 = vpack.c.b16 %v4605, %v4605
        %v4656 = vpack.c.b16 %v4606, %v4606
        %v4657 = vpack.c.b16 %v4607, %v4607
        %v4658 = vpack.c.b16 %v4608, %v4608
        %v4659 = vpack.c.b16 %v4609, %v4609
        %v4660 = vpack.c.b16 %v4610, %v4610
        %v4661 = vpack.c.b16 %v4611, %v4611
        %v4662 = vpack.c.b16 %v4612, %v4612
        %v4663 = vpack.c.b16 %v4613, %v4613
        %v4664 = vpack.c.b16 %v4614, %v4614
        %v4665 = vpack.c.b16 %v4615, %v4615
        %v4666 = vpack.c.b16 %v4616, %v4616
        %v4667 = vpack.c.b16 %v4617, %v4617
        %v4668 = vpack.c.b16 %v4618, %v4618
        %v4669 = vpack.c.b16 %v4619, %v4619
        %v4670 = vpack.c.b16 %v4620, %v4620
        %v4671 = vpack.c.b16 %v4621, %v4621
        %v4672 = vpack.c.b16 %v4622, %v4622
        %v4673 = vpack.c.b16 %v4623, %v4623
        %v4674 = vpack.c.b16 %v4624, %v4624
        %v4675 = vpack.c.b16 %v4625, %v4625
        %v4676 = vpack.c.b16 %v4626, %v4626
        %v4677 = vpack.c.b16 %v4627, %v4627
        %v4678 = vpack.c.b16 %v4628, %v4628
        %v4679 = vpack.c.b16 %v4629, %v4629
        %v4680 = vpack.c.b16 %v4630, %v4630
        %v4681 = vpack.c.b16 %v4631, %v4631
        %v4682 = vpack.c.b16 %v4632, %v4632
        %v4683 = vpack.c.b16 %v4633, %v4633
        %v4684 = vpack.c.b16 %v4634, %v4634
        %v4685 = vpack.c.b16 %v4635, %v4635
        %v4686 = vpack.c.b16 %v4636, %v4636
        %v4687 = vpack.c.b16 %v4637, %v4637
        %v4688 = vpack.c.b16 %v4638, %v4638
        %v4689 = vpack.c.b16 %v4639, %v4639
        %v4690 = vpack.c.b16 %v4640, %v4640
        %v4691 = vpack.c.b16 %v4641, %v4641
        %v4692 = vpack.c.b16 %v4642, %v4642
        %v4693 = vpack.c.b16 %v4643, %v4643
        %v4694 = vpack.c.b16 %v4644, %v4644
        %v4695 = vpack.c.b16 %v4645, %v4645
        %v4696 = vpack.c.b16 %v4646, %v4646
        %v4697 = vpack.c.b16 %v4647, %v4647
        %v4698 = vpack.c.b16 %v4648, %v4648
        %v4699 = vpack.c.b16 %v4649, %v4649
        %v4700 = vpack.c.b16 %v4650, %v4650
        %v4701 = vpack.c.b16 %v4651, %v4651
        %v4702 = vpack.c.b16 %v4652, %v4652
        %v4703 = vpack.c.b16 %v4653, %v4653
        %v4704 = vpack.c.b16 %v4654, %v4654
        %vm4755 = vcmask 822272
        %4756 = vst.msk [vmem:[%s653] sm:$0xf] %vm4755, %v4655
        %4757 = vst.msk [vmem:[%s653 + $0x4] sm:$0xf] %vm4755, %v4656
        %4758 = vst.msk [vmem:[%s653 + $0x8] sm:$0xf] %vm4755, %v4657
        %4759 = vst.msk [vmem:[%s653 + $0xc] sm:$0xf] %vm4755, %v4658
        %4760 = vst.msk [vmem:[%s653 + $0x10] sm:$0xf] %vm4755, %v4659
        %4761 = vst.msk [vmem:[%s653 + $0x14] sm:$0xf] %vm4755, %v4660
        %4762 = vst.msk [vmem:[%s653 + $0x18] sm:$0xf] %vm4755, %v4661
        %4763 = vst.msk [vmem:[%s653 + $0x1c] sm:$0xf] %vm4755, %v4662
        %4764 = vst.msk [vmem:[%s653 + $0x20] sm:$0xf] %vm4755, %v4663
        %4765 = vst.msk [vmem:[%s653 + $0x24] sm:$0xf] %vm4755, %v4664
        %4766 = vst.msk [vmem:[%s653 + $0x28] sm:$0xf] %vm4755, %v4665
        %4767 = vst.msk [vmem:[%s653 + $0x2c] sm:$0xf] %vm4755, %v4666
        %4768 = vst.msk [vmem:[%s653 + $0x30] sm:$0xf] %vm4755, %v4667
        %4769 = vst.msk [vmem:[%s653 + $0x34] sm:$0xf] %vm4755, %v4668
        %4770 = vst.msk [vmem:[%s653 + $0x38] sm:$0xf] %vm4755, %v4669
        %4771 = vst.msk [vmem:[%s653 + $0x3c] sm:$0xf] %vm4755, %v4670
        %4772 = vst.msk [vmem:[%s653 + $0x40] sm:$0xf] %vm4755, %v4671
        %4773 = vst.msk [vmem:[%s653 + $0x44] sm:$0xf] %vm4755, %v4672
        %4774 = vst.msk [vmem:[%s653 + $0x48] sm:$0xf] %vm4755, %v4673
        %4775 = vst.msk [vmem:[%s653 + $0x4c] sm:$0xf] %vm4755, %v4674
        %4776 = vst.msk [vmem:[%s653 + $0x50] sm:$0xf] %vm4755, %v4675
        %4777 = vst.msk [vmem:[%s653 + $0x54] sm:$0xf] %vm4755, %v4676
        %4778 = vst.msk [vmem:[%s653 + $0x58] sm:$0xf] %vm4755, %v4677
        %4779 = vst.msk [vmem:[%s653 + $0x5c] sm:$0xf] %vm4755, %v4678
        %4780 = vst.msk [vmem:[%s653 + $0x60] sm:$0xf] %vm4755, %v4679
        %4781 = vst.msk [vmem:[%s653 + $0x64] sm:$0xf] %vm4755, %v4680
        %4782 = vst.msk [vmem:[%s653 + $0x68] sm:$0xf] %vm4755, %v4681
        %4783 = vst.msk [vmem:[%s653 + $0x6c] sm:$0xf] %vm4755, %v4682
        %4784 = vst.msk [vmem:[%s653 + $0x70] sm:$0xf] %vm4755, %v4683
        %4785 = vst.msk [vmem:[%s653 + $0x74] sm:$0xf] %vm4755, %v4684
        %4786 = vst.msk [vmem:[%s653 + $0x78] sm:$0xf] %vm4755, %v4685
        %4787 = vst.msk [vmem:[%s653 + $0x7c] sm:$0xf] %vm4755, %v4686
        %4788 = vst.msk [vmem:[%s653 + $0x80] sm:$0xf] %vm4755, %v4687
        %4789 = vst.msk [vmem:[%s653 + $0x84] sm:$0xf] %vm4755, %v4688
        %4790 = vst.msk [vmem:[%s653 + $0x88] sm:$0xf] %vm4755, %v4689
        %4791 = vst.msk [vmem:[%s653 + $0x8c] sm:$0xf] %vm4755, %v4690
        %4792 = vst.msk [vmem:[%s653 + $0x90] sm:$0xf] %vm4755, %v4691
        %4793 = vst.msk [vmem:[%s653 + $0x94] sm:$0xf] %vm4755, %v4692
        %4794 = vst.msk [vmem:[%s653 + $0x98] sm:$0xf] %vm4755, %v4693
        %4795 = vst.msk [vmem:[%s653 + $0x9c] sm:$0xf] %vm4755, %v4694
        %4796 = vst.msk [vmem:[%s653 + $0xa0] sm:$0xf] %vm4755, %v4695
        %4797 = vst.msk [vmem:[%s653 + $0xa4] sm:$0xf] %vm4755, %v4696
        %4798 = vst.msk [vmem:[%s653 + $0xa8] sm:$0xf] %vm4755, %v4697
        %4799 = vst.msk [vmem:[%s653 + $0xac] sm:$0xf] %vm4755, %v4698
        %4800 = vst.msk [vmem:[%s653 + $0xb0] sm:$0xf] %vm4755, %v4699
        %4801 = vst.msk [vmem:[%s653 + $0xb4] sm:$0xf] %vm4755, %v4700
        %4802 = vst.msk [vmem:[%s653 + $0xb8] sm:$0xf] %vm4755, %v4701
        %4803 = vst.msk [vmem:[%s653 + $0xbc] sm:$0xf] %vm4755, %v4702
        %4804 = vst.msk [vmem:[%s653 + $0xc0] sm:$0xf] %vm4755, %v4703
        %4805 = vst.msk [vmem:[%s653 + $0xc4] sm:$0xf] %vm4755, %v4704
        %s4806 = sand.u32 %s305, 1
        %s4807 = scalar_lea.sflag [#allocation3], %s4806
        %s4808 = sand.u32 %s305, 1
        %s4809 = smul.addr %s4808, 16
        %s4810 = scalar_lea.vmem [#allocation2], %s4809
        %s4811 = sand.u32 %s36, 1
        %s4812 = scalar_lea.sflag [#allocation5], %s4811
        %s4813 = sand.u32 %s331, 1
        %s4814 = smul.addr %s4813, 400
        %s4815 = scalar_lea.vmem [#allocation4], %s4814
        %s4816 = sand.u32 %s36, 1
        %s4817 = scalar_lea.sflag [#allocation5], %s4816
        %s4818 = sand.u32 %s357, 1
        %s4819 = smul.addr %s4818, 400
        %s4820 = scalar_lea.vmem [#allocation6], %s4819
        %s4821 = sand.u32 %s383, 1
        %s4822 = scalar_lea.sflag [#allocation8], %s4821
        %s4823 = sand.u32 %s383, 1
        %s4824 = smul.addr %s4823, 400
        %s4825 = scalar_lea.vmem [#allocation7], %s4824
        %s4826 = smul.u32 50, %s36
        %p4827 = scmp.lt.s32.totalorder %s4826, 99
        %s4828 = scalar_select %p4827, %s4826, 99
        %s4829 = smul.addr %s4828, 4
        %s4830 = scalar_lea.vmem %s15, %s4829
        // Predicated region
        $region65: #{tpu_custom_call.1} parent=63 // pred_check
          %p4831 = pneg %p315
        $region66: #{tpu_custom_call.1} parent=63 // pred_check_branch
          %4833 = sbr.rel (%p4831) target = $region68
        $region67: #{tpu_custom_call.1} parent=63 // pred_region
          %s4835 = ssub.s32 256, 256
          %4836 = vsyncadd %s4807, %s4835
          %s4837 = smul.addr %s36, 2
          %s4838 = smul.addr %s4837, 128
          %s4839 = scalar_lea.hbm %s11, %s4838
          %s4841 = sshll.u32 %s4810, 4
          %s4842 = int_to_ptr.vmem [resolvable:$true] %s4841
          %4844 = dma.vmem_to_hbm [thread:$0]  %s4842, 256, %s4839, %s4807
        $region68: #{tpu_custom_call.1} parent=63 // pred_fallthru
          _
        // Predicated region
        $region69: #{tpu_custom_call.1} parent=63 // pred_check
          %p4845 = pneg %p341
        $region70: #{tpu_custom_call.1} parent=63 // pred_check_branch
          %4847 = sbr.rel (%p4845) target = $region72
        $region71: #{tpu_custom_call.1} parent=63 // pred_region
          %s4848 = smul.u32 50, %s36
          %s4850 = ssub.s32 6400, 6400
          %4851 = vsyncadd %s4812, %s4850
          %s4852 = smul.addr %s4848, 2
          %s4853 = smul.addr %s4852, 64
          %s4854 = scalar_lea.hbm %s12, %s4853
          %s4855 = sshll.u32 %s4815, 4
          %s4856 = int_to_ptr.vmem [resolvable:$true] %s4855
          %4861 = dma.vmem_to_hbm [thread:$0]  %s4856, 6400, %s4854, %s4812, 128, 128, 8
        $region72: #{tpu_custom_call.1} parent=63 // pred_fallthru
          _
        // Predicated region
        $region73: #{tpu_custom_call.1} parent=63 // pred_check
          %p4862 = pneg %p367
        $region74: #{tpu_custom_call.1} parent=63 // pred_check_branch
          %4864 = sbr.rel (%p4862) target = $region76
        $region75: #{tpu_custom_call.1} parent=63 // pred_region
          %s4865 = smul.u32 50, %s36
          %s4867 = ssub.s32 6400, 6400
          %4868 = vsyncadd %s4817, %s4867
          %s4869 = smul.addr %s4865, 2
          %s4870 = smul.addr %s4869, 64
          %s4871 = scalar_lea.hbm %s13, %s4870
          %s4872 = sshll.u32 %s4820, 4
          %s4873 = int_to_ptr.vmem [resolvable:$true] %s4872
          %4878 = dma.vmem_to_hbm [thread:$0]  %s4873, 6400, %s4871, %s4817, 128, 128, 8
        $region76: #{tpu_custom_call.1} parent=63 // pred_fallthru
          _
        // Predicated region
        $region77: #{tpu_custom_call.1} parent=63 // pred_check
          %p4879 = pneg %p393
        $region78: #{tpu_custom_call.1} parent=63 // pred_check_branch
          %4881 = sbr.rel (%p4879) target = $region80
        $region79: #{tpu_custom_call.1} parent=63 // pred_region
          %s4882 = smul.u32 50, %s36
          %s4884 = ssub.s32 6400, 6400
          %4885 = vsyncadd %s4822, %s4884
          %s4886 = smul.addr %s4882, 2
          %s4887 = smul.addr %s4886, 64
          %s4888 = scalar_lea.hbm %s14, %s4887
          %s4889 = sshll.u32 %s4825, 4
          %s4890 = int_to_ptr.vmem [resolvable:$true] %s4889
          %4895 = dma.vmem_to_hbm [thread:$0]  %s4890, 6400, %s4888, %s4822, 128, 128, 8
        $region80: #{tpu_custom_call.1} parent=63 // pred_fallthru
          _
        // Predicated region
        $region81: #{tpu_custom_call.1} parent=63 // pred_check
          %p4896 = pneg %p419
        $region82: #{tpu_custom_call.1} parent=63 // pred_check_branch
          %4898 = sbr.rel (%p4896) target = $region84
        $region83: #{tpu_custom_call.1} parent=63 // pred_region
          %s4899 = smul.u32 50, %s36
        $region84: #{tpu_custom_call.1} parent=63 // pred_fallthru
          _
      $region64: #{tpu_custom_call.1} parent=5 // pred_fallthru
        _
      %p4900 = scmp.le.s32.totalorder 2, %s31
      // Predicated region
      $region85: #{tpu_custom_call.1} parent=5 // pred_check
        %p4901 = pneg %p4900
      $region86: #{tpu_custom_call.1} parent=5 // pred_check_branch
        %4903 = sbr.rel (%p4901) target = $region88
      $region87: #{tpu_custom_call.1} parent=5 // pred_region
        %s4904 = ssub.s32 %s31, 2
        // Predicated region
        $region89: #{tpu_custom_call.1} parent=87 // pred_check
          %p4905 = pneg %p321
        $region90: #{tpu_custom_call.1} parent=87 // pred_check_branch
          %4907 = sbr.rel (%p4905) target = $region92
        $region91: #{tpu_custom_call.1} parent=87 // pred_region
          %s4908 = sand.u32 %s306, 1
          %s4909 = scalar_lea.sflag [#allocation3], %s4908
          %s4910 = sand.u32 %s306, 1
          %s4911 = smul.addr %s4910, 16
          %s4912 = scalar_lea.vmem [#allocation2], %s4911
          %4913 = dma.done %s4909, 256
        $region92: #{tpu_custom_call.1} parent=87 // pred_fallthru
          _
        // Predicated region
        $region93: #{tpu_custom_call.1} parent=87 // pred_check
          %p4914 = pneg %p347
        $region94: #{tpu_custom_call.1} parent=87 // pred_check_branch
          %4916 = sbr.rel (%p4914) target = $region96
        $region95: #{tpu_custom_call.1} parent=87 // pred_region
          %s4917 = sand.u32 %s37, 1
          %s4918 = scalar_lea.sflag [#allocation5], %s4917
          %s4919 = sand.u32 %s332, 1
          %s4920 = smul.addr %s4919, 400
          %s4921 = scalar_lea.vmem [#allocation4], %s4920
          %4922 = dma.done %s4918, 6400
        $region96: #{tpu_custom_call.1} parent=87 // pred_fallthru
          _
        // Predicated region
        $region97: #{tpu_custom_call.1} parent=87 // pred_check
          %p4923 = pneg %p373
        $region98: #{tpu_custom_call.1} parent=87 // pred_check_branch
          %4925 = sbr.rel (%p4923) target = $region100
        $region99: #{tpu_custom_call.1} parent=87 // pred_region
          %s4926 = sand.u32 %s37, 1
          %s4927 = scalar_lea.sflag [#allocation5], %s4926
          %s4928 = sand.u32 %s358, 1
          %s4929 = smul.addr %s4928, 400
          %s4930 = scalar_lea.vmem [#allocation6], %s4929
          %4931 = dma.done %s4927, 6400
        $region100: #{tpu_custom_call.1} parent=87 // pred_fallthru
          _
        // Predicated region
        $region101: #{tpu_custom_call.1} parent=87 // pred_check
          %p4932 = pneg %p399
        $region102: #{tpu_custom_call.1} parent=87 // pred_check_branch
          %4934 = sbr.rel (%p4932) target = $region104
        $region103: #{tpu_custom_call.1} parent=87 // pred_region
          %s4935 = sand.u32 %s384, 1
          %s4936 = scalar_lea.sflag [#allocation8], %s4935
          %s4937 = sand.u32 %s384, 1
          %s4938 = smul.addr %s4937, 400
          %s4939 = scalar_lea.vmem [#allocation7], %s4938
          %4940 = dma.done %s4936, 6400
        $region104: #{tpu_custom_call.1} parent=87 // pred_fallthru
          _
        // Predicated region
        $region105: #{tpu_custom_call.1} parent=87 // pred_check
          %p4941 = pneg %p425
        $region106: #{tpu_custom_call.1} parent=87 // pred_check_branch
          %4943 = sbr.rel (%p4941) target = $region108
        $region107: #{tpu_custom_call.1} parent=87 // pred_region
          %s4944 = smul.u32 50, %s37
          %p4945 = scmp.lt.s32.totalorder %s4944, 99
          %s4946 = scalar_select %p4945, %s4944, 99
          %s4947 = smul.addr %s4946, 4
          %s4948 = scalar_lea.vmem %s15, %s4947
        $region108: #{tpu_custom_call.1} parent=87 // pred_fallthru
          _
      $region88: #{tpu_custom_call.1} parent=5 // pred_fallthru
        _
    $region6: #{tpu_custom_call.1} parent=1 // loop_footer
      %s35 = sadd.s32 1, %s31
    $region7: #{tpu_custom_call.1} parent=1 // loop_footer_branch
      %30 = sbr.rel target = $region3
    $region8: #{tpu_custom_call.1} parent=1 // loop_exit
      _
    %4949 = vsyncpa [#allocation3], 1
    %s4950 = scalar_lea.sflag [#allocation3], 1
    %4951 = vsyncpa %s4950, 1
    %4952 = vsyncpa [#allocation5], 1
    %s4953 = scalar_lea.sflag [#allocation5], 1
    %4954 = vsyncpa %s4953, 1
    %4955 = vsyncpa [#allocation8], 1
    %s4956 = scalar_lea.sflag [#allocation8], 1
    %4957 = vsyncpa %s4956, 1

</llo_original>
